<compile_context>
chip_gen: v6e
topology: v6e:2x2x1
jax: 0.10.0
libtpu: 0.0.40
codegen_flags: <defaults>
</compile_context>

<pallas_src>
import functools

import numpy as np
import jax
import jax.numpy as jnp
from jax import lax
from jax.experimental import pallas as pl
from jax.experimental.pallas import tpu as pltpu


# ----------------------------- in-kernel helpers -----------------------------

def _gelu_exact(x):
    # matches torch.nn.GELU() default (erf-based, non-approximate)
    return 0.5 * x * (1.0 + lax.erf(x * (2.0 ** -0.5)))


def _softmax_last(s):
    m = jnp.max(s, axis=-1, keepdims=True)
    e = jnp.exp(s - m)
    return e / jnp.sum(e, axis=-1, keepdims=True)


def _merge_block_swap(o3, delta_map, ms, hms, halfc, C):
    """einops head-merge reduced to an (ms x ms) block swap.

    o3: (S, H, C) attention output with token rows pre-grouped by (t % ms) and
    heads pre-ordered (c-outer) along channels (both folded into the weights at
    setup).  The remaining data movement is: outer row-group <-> outer
    channel-group, i.e. ms-1 (sublane-roll, lane-roll) pairs + selects.
    """
    out = jnp.where(delta_map == 0.0, o3, 0.0)
    for delta in range(1, ms):
        rolled = pltpu.roll(o3, delta * hms, axis=1)
        rolled = pltpu.roll(rolled, (C - delta * halfc) % C, axis=2)
        out = out + jnp.where(delta_map == float(delta), rolled, 0.0)
    return out


# ------------------------------- fused kernel --------------------------------

def _card_kernel(x_ref, e3_ref, wqkv_ref, bqkv_ref, wup_ref, bup_ref, wdn_ref,
                 vec_ref, tokb_ref, hidb_ref, qhead_ref, sslab_ref, mdel_ref,
                 out_ref, *, n_heads, head_dim, d_model, seq, merge_size,
                 slabs):
    H, C, ms, S = seq, d_model, merge_size, slabs
    hms = H // ms
    halfc = C // ms
    rows = S * H
    f32 = jnp.float32
    bf16 = jnp.bfloat16

    x = x_ref[...]                                          # (rows, C) f32
    xb = x.astype(bf16)
    bqkv = bqkv_ref[...]                                    # (3, C) f32

    # QKV projection; sqrt(H) hidden-score scale is folded into the K weights /
    # bias, the merge's head-channel order is folded into all three weights.
    q = jnp.dot(xb, wqkv_ref[0], preferred_element_type=f32) + bqkv[0:1, :]
    k = jnp.dot(xb, wqkv_ref[1], preferred_element_type=f32) + bqkv[1:2, :]
    v = jnp.dot(xb, wqkv_ref[2], preferred_element_type=f32) + bqkv[2:3, :]
    qb, kb, vb = q.astype(bf16), k.astype(bf16), v.astype(bf16)

    # EMA smoothing / token-group permutation as block-diagonal matmuls:
    #   e3[0] = blockdiag(sqrt(hd) * EMA[perm, :])   (query rows pre-grouped)
    #   e3[1] = blockdiag(EMA / sqrt(H))             (undoes K's sqrt(H) scale)
    #   e3[2] = blockdiag(P_perm)                    (row grouping for V, hidden path)
    eq = jnp.dot(e3_ref[0], qb, preferred_element_type=f32)   # (rows, C)
    ek = jnp.dot(e3_ref[1], kb, preferred_element_type=f32)   # (rows, C)
    vp = jnp.dot(e3_ref[2], vb, preferred_element_type=f32)   # (rows, C)

    # ---- attention along the token axis: batched over heads and slabs.
    qhead = qhead_ref[...]                                  # (n_heads, 1, C) 0/1
    eq_bd = (eq[None, :, :] * qhead).reshape(n_heads * rows, C).astype(bf16)
    s_tok = lax.dot_general(eq_bd, ek.astype(bf16), (((1,), (1,)), ((), ())),
                            preferred_element_type=f32)     # (nh*rows, rows)
    s_tok = s_tok.reshape(n_heads, rows, rows) + tokb_ref[...][None, :, :]
    p_tok = _softmax_last(s_tok)                            # (nh, rows, rows)
    o_stk = jnp.dot(p_tok.reshape(n_heads * rows, rows).astype(bf16), vb,
                    preferred_element_type=f32)             # (nh*rows, C)
    o_tok = jnp.sum(o_stk.reshape(n_heads, rows, C) * qhead, axis=0)  # (rows, C)

    # ---- attention along the hidden axis: scores batched over slabs via a
    # slab-block-diagonal stacked Q^T operand; head-block masked softmax.
    sslab = sslab_ref[...]                                  # (S, 1, rows) 0/1
    qt_bd = (jnp.transpose(q)[None, :, :] * sslab).reshape(S * C, rows)
    g_all = jnp.dot(qt_bd.astype(bf16), kb, preferred_element_type=f32)  # (S*C, C)
    g_all = g_all.reshape(S, C, C) + hidb_ref[...][None, :, :]
    p_hid = _softmax_last(g_all)                            # (S, C, C)
    vp3 = vp.reshape(S, H, C).astype(bf16)
    o_hid3 = lax.dot_general(vp3, p_hid.astype(bf16),
                             (((2,), (2,)), ((0,), (0,))),
                             preferred_element_type=f32)    # (S, H, C)

    # ---- einops head-merge 'bn (hl1 hl2 hl3) d -> bn hl2 (hl3 hl1) d' as an
    # (ms x ms) outer-block swap (rolls + select); everything else was folded
    # into the weights at setup.
    mdel = mdel_ref[...]                                    # (1, H, C)
    merged1 = _merge_block_swap(o_tok.reshape(S, H, C), mdel, ms, hms, halfc, C)
    merged2 = _merge_block_swap(o_hid3, mdel, ms, hms, halfc, C)

    # ---- norm_post1/2 (folded into wup/bup) + the two GELU MLPs + residual +
    # norm_attn (eval-mode BN folded to a per-channel affine).
    bup = bup_ref[...]
    vec = vec_ref[...]
    h1 = jnp.dot(merged1.reshape(rows, C).astype(bf16), wup_ref[0],
                 preferred_element_type=f32) + bup[0:1, :]
    h2 = jnp.dot(merged2.reshape(rows, C).astype(bf16), wup_ref[1],
                 preferred_element_type=f32) + bup[1:2, :]
    ff = (jnp.dot(_gelu_exact(h1).astype(bf16), wdn_ref[0],
                  preferred_element_type=f32)
          + jnp.dot(_gelu_exact(h2).astype(bf16), wdn_ref[1],
                    preferred_element_type=f32)
          + vec[0:1, :])
    out_ref[...] = (x + ff) * vec[1:2, :] + vec[2:3, :]


# -------------------------- parameter folding (setup) -------------------------

def fold_card_params(p, *, n_heads, merge_size, seq, slabs_per_block):
    """Fold BN affines, score scales, the head-merge channel order, the token
    grouping and all masks into setup-time constants for the fused kernel."""
    C = p["wqkv"].shape[0]
    hd = C // n_heads
    H = seq
    ms = merge_size
    hl1 = n_heads // ms
    hms = H // ms
    S = slabs_per_block
    rows = S * H
    halfc = C // ms
    d_ff = p["w1a"].shape[1]

    # head-channel reordering: new channel block b' holds original head
    # (b' % hl1)*ms + b'//hl1, so that after the block swap the merged channel
    # order is exactly the true einops order (no in-kernel interleave).
    head_src = np.array([(b % hl1) * ms + (b // hl1) for b in range(n_heads)])
    col_perm = (head_src[:, None] * hd + np.arange(hd)[None, :]).reshape(-1)

    wqkv = np.asarray(p["wqkv"], np.float32)
    bqkv = np.asarray(p["bqkv"], np.float32)
    sH = float(H) ** 0.5
    wq = wqkv[:, 0 * C:1 * C][:, col_perm]
    wk = wqkv[:, 1 * C:2 * C][:, col_perm] * sH
    wv = wqkv[:, 2 * C:3 * C][:, col_perm]
    bq = bqkv[0, 0 * C:1 * C][col_perm]
    bk = bqkv[0, 1 * C:2 * C][col_perm] * sH
    bv = bqkv[0, 2 * C:3 * C][col_perm]
    wqkv3 = np.stack([wq, wk, wv])                       # (3, C, C)
    bqkv3 = np.stack([bq, bk, bv])                       # (3, C)

    # token grouping (tokens grouped by t % merge_size)
    perm = np.array([(j // hms) + (j % hms) * ms for j in range(H)])
    ema = np.asarray(p["ema"], np.float32)               # (H, H)
    eq1 = ema[perm, :] * (float(hd) ** 0.5)              # sqrt(hd) folded
    ek1 = ema / sH                                       # compensates K scale
    pm1 = np.eye(H, dtype=np.float32)[perm, :]
    eye_s = np.eye(S, dtype=np.float32)
    # kron is cheap at small S; switch to per-slab application if S grows.
    e3 = np.stack([np.kron(eye_s, eq1), np.kron(eye_s, ek1),
                   np.kron(eye_s, pm1)])                 # (3, rows, rows)

    # fold eval-mode BatchNorm (norm_post1/2) into the MLP up-projections.
    w1a = np.asarray(p["scale1"]).reshape(C, 1) * np.asarray(p["w1a"])
    b1a = (np.asarray(p["shift1"]).reshape(1, C) @ np.asarray(p["w1a"])
           + np.asarray(p["b1a"]).reshape(1, d_ff))
    w2a = np.asarray(p["scale2"]).reshape(C, 1) * np.asarray(p["w2a"])
    b2a = (np.asarray(p["shift2"]).reshape(1, C) @ np.asarray(p["w2a"])
           + np.asarray(p["b2a"]).reshape(1, d_ff))
    wup = np.stack([w1a, w2a])                           # (2, C, d_ff)
    bup = np.concatenate([b1a, b2a], axis=0)             # (2, d_ff)
    wdn = np.stack([np.asarray(p["w1b"]), np.asarray(p["w2b"])])  # (2, d_ff, C)
    vec = np.stack([(np.asarray(p["b1b"]) + np.asarray(p["b2b"])).reshape(C),
                    np.asarray(p["scale_a"]).reshape(C),
                    np.asarray(p["shift_a"]).reshape(C)])         # (3, C)

    # precomputed masks / additive biases (no per-step iota+compare in-kernel)
    r = np.arange(rows)
    cc = np.arange(C)
    rr = np.arange(H)
    tok_bias = np.where((r[:, None] // H) == (r[None, :] // H),
                        0.0, -1e30).astype(np.float32)             # (rows, rows)
    hid_bias = np.where((cc[:, None] // hd) == (cc[None, :] // hd),
                        0.0, -1e30).astype(np.float32)             # (C, C)
    qhead = (cc[None, :] // hd == np.arange(n_heads)[:, None]
             ).astype(np.float32).reshape(n_heads, 1, C)
    sslab = (r[None, :] // H == np.arange(S)[:, None]
             ).astype(np.float32).reshape(S, 1, rows)
    mdelta = ((rr[:, None] // hms - cc[None, :] // halfc) % ms
              ).astype(np.float32).reshape(1, H, C)

    return dict(
        e3=jnp.asarray(e3, jnp.bfloat16),
        wqkv=jnp.asarray(wqkv3, jnp.bfloat16),
        bqkv=jnp.asarray(bqkv3, jnp.float32),
        wup=jnp.asarray(wup, jnp.bfloat16),
        bup=jnp.asarray(bup, jnp.float32),
        wdn=jnp.asarray(wdn, jnp.bfloat16),
        vec=jnp.asarray(vec, jnp.float32),
        tok_bias=jnp.asarray(tok_bias, jnp.float32),
        hid_bias=jnp.asarray(hid_bias, jnp.float32),
        qhead=jnp.asarray(qhead, jnp.float32),
        sslab=jnp.asarray(sslab, jnp.float32),
        mdelta=jnp.asarray(mdelta, jnp.float32),
    )


# --------------------------------- wrapper ------------------------------------

def card_attention_forward(src, kp, *, n_heads, merge_size, slabs_per_block):
    B, nvars, H, C = src.shape
    BN = B * nvars
    S = slabs_per_block
    assert n_heads % merge_size == 0 and H % merge_size == 0
    assert BN % S == 0
    rows = S * H
    nblocks = BN // S
    d_ff = kp["wup"].shape[2]
    assert kp["e3"].shape == (3, rows, rows)

    x2d = src.reshape(BN * H, C)

    kern = functools.partial(
        _card_kernel, n_heads=n_heads, head_dim=C // n_heads, d_model=C,
        seq=H, merge_size=merge_size, slabs=S)

    def const(shape):
        nd = len(shape)
        return pl.BlockSpec(shape, lambda i, _nd=nd: (0,) * _nd)

    out2d = pl.pallas_call(
        kern,
        out_shape=jax.ShapeDtypeStruct((BN * H, C), jnp.float32),
        grid=(nblocks,),
        in_specs=[
            pl.BlockSpec((rows, C), lambda i: (i, 0)),   # x slabs
            const((3, rows, rows)),                      # EMA / permutations
            const((3, C, C)),                            # Wq / Wk / Wv
            const((3, C)),                               # bq / bk / bv
            const((2, C, d_ff)),                         # MLP up (BN folded)
            const((2, d_ff)),                            # MLP up bias
            const((2, d_ff, C)),                         # MLP down
            const((3, C)),                               # b_down / scale_a / shift_a
            const((rows, rows)),                         # token slab bias
            const((C, C)),                               # hidden head-block bias
            const((n_heads, 1, C)),                      # head channel mask
            const((S, 1, rows)),                         # slab row mask
            const((1, H, C)),                            # merge delta map
        ],
        out_specs=pl.BlockSpec((rows, C), lambda i: (i, 0)),
        compiler_params=pltpu.CompilerParams(
            dimension_semantics=("parallel",),           # even grid -> v7x megacore
            vmem_limit_bytes=16 * 1024 * 1024),
    )(x2d, kp["e3"], kp["wqkv"], kp["bqkv"], kp["wup"], kp["bup"], kp["wdn"],
      kp["vec"], kp["tok_bias"], kp["hid_bias"], kp["qhead"], kp["sslab"],
      kp["mdelta"])

    return out2d.reshape(B, nvars, H, C)


# ------------------------- pure-JAX reference (f32) ---------------------------

def card_attention_reference(src, p, *, n_heads, merge_size):
    B, nvars, H, C = src.shape
    hd = C // n_heads
    qkv = jnp.einsum('bvtc,cf->bvtf', src, p["wqkv"]) + p["bqkv"][0]
    qkv = qkv.reshape(B, nvars, H, 3, n_heads, hd).transpose(3, 0, 1, 4, 2, 5)
    q, k, v = qkv[0], qkv[1], qkv[2]
    E = p["ema"]
    eq = jnp.einsum('bnhad,ga->bnhgd', q, E)
    ek = jnp.einsum('bnhad,ga->bnhgd', k, E)
    s_tok = jnp.einsum('bnhed,bnhfd->bnhef', eq, ek) / (hd ** -0.5)
    a_tok = jax.nn.softmax(s_tok, axis=-1)
    o_tok = jnp.einsum('bnhef,bnhfd->bnhed', a_tok, v)
    s_hid = jnp.einsum('bnhae,bnhaf->bnhef', q, k) / (H ** -0.5)
    a_hid = jax.nn.softmax(s_hid, axis=-1)
    o_hid = jnp.einsum('bnhef,bnhaf->bnhae', a_hid, v)

    def merge(o):
        BN = B * nvars
        hl1 = n_heads // merge_size
        flat = o.reshape(BN, n_heads * H, hd)
        xr = flat.reshape(BN, hl1, H, merge_size, hd)
        xr = jnp.transpose(xr, (0, 2, 3, 1, 4))
        return xr.reshape(BN, H, n_heads * hd)

    gelu = lambda t: 0.5 * t * (1.0 + lax.erf(t * (2.0 ** -0.5)))
    o1 = merge(o_tok) * p["scale1"] + p["shift1"]
    o2 = merge(o_hid) * p["scale2"] + p["shift2"]
    f1 = gelu(o1 @ p["w1a"] + p["b1a"]) @ p["w1b"] + p["b1b"]
    f2 = gelu(o2 @ p["w2a"] + p["b2a"]) @ p["w2b"] + p["b2b"]
    out = src.reshape(B * nvars, H, C) + f1 + f2
    out = out * p["scale_a"] + p["shift_a"]
    return out.reshape(B, nvars, H, C)


# ----------------------------------- main -------------------------------------

if __name__ == "__main__":
    B, nvars = 2, 4                  # BN = 8 -> 2 grid blocks of 4 slabs each
    d_model, n_heads, d_ff = 32, 4, 64
    total_token_number = 8           # H (token axis)
    enc_in, dp_rank = nvars, 4
    merge_size = 2
    alpha = 0.3
    H, C = total_token_number, d_model
    eps = 1e-5

    # EMA matrix exactly as in __init__
    ema_size = max(enc_in, total_token_number, dp_rank)
    ema_np = np.zeros((ema_size, ema_size), dtype=np.float32)
    ema_np[0, 0] = 1.0
    for i in range(1, total_token_number):
        for j in range(i):
            ema_np[i, j] = ema_np[i - 1, j] * (1.0 - alpha)
        ema_np[i, i] = alpha
    ema = jnp.asarray(ema_np[:H, :H])

    key = jax.random.PRNGKey(0)
    ks = jax.random.split(key, 20)
    rnd = lambda kk, shape, s=0.1: s * jax.random.normal(kk, shape, dtype=jnp.float32)

    # eval-mode BatchNorm1d (running stats mean=0, var=1) folded to per-channel
    # scale/shift.  TODO(synk): training-mode BN (batch statistics) is not
    # folded; a trained checkpoint would simply supply different scale/shift.
    def bn_fold(kg, kb):
        gamma = 1.0 + rnd(kg, (C,), 0.1)
        beta = rnd(kb, (C,), 0.05)
        scale = gamma / jnp.sqrt(1.0 + eps)
        shift = beta
        return scale.reshape(1, C), shift.reshape(1, C)

    s1, h1 = bn_fold(ks[10], ks[11])
    s2, h2 = bn_fold(ks[12], ks[13])
    sa, ha = bn_fold(ks[14], ks[15])

    params = dict(
        wqkv=rnd(ks[0], (C, 3 * C)),                # qkv.weight^T
        bqkv=rnd(ks[1], (1, 3 * C), 0.02),
        w1a=rnd(ks[2], (C, d_ff)), b1a=rnd(ks[3], (1, d_ff), 0.02),
        w1b=rnd(ks[4], (d_ff, C)), b1b=rnd(ks[5], (1, C), 0.02),
        w2a=rnd(ks[6], (C, d_ff)), b2a=rnd(ks[7], (1, d_ff), 0.02),
        w2b=rnd(ks[8], (d_ff, C)), b2b=rnd(ks[9], (1, C), 0.02),
        scale1=s1, shift1=h1, scale2=s2, shift2=h2, scale_a=sa, shift_a=ha,
        ema=ema,
    )
    # TODO(synk): over_hidden=True dynamic_projection branch and the FFT-based
    # ema_trianable path are not exercised by the default forward and are omitted.
    # Dropout layers are identity in inference mode.

    src = jax.random.normal(ks[16], (B, nvars, H, C), dtype=jnp.float32)

    BN = B * nvars
    # keep the grid an even number of blocks so v7x's two TensorCores split it
    slabs_per_block = BN // 2 if BN % 2 == 0 else BN

    kparams = fold_card_params(params, n_heads=n_heads, merge_size=merge_size,
                               seq=H, slabs_per_block=slabs_per_block)

    fwd = jax.jit(functools.partial(card_attention_forward, n_heads=n_heads,
                                    merge_size=merge_size,
                                    slabs_per_block=slabs_per_block))
    out = fwd(src, kparams)
    jax.block_until_ready(out)
    assert out.shape == (B, nvars, H, C)

    # sanity check against a pure-JAX f32 reference.  Tolerance covers the
    # intentional bf16 MXU operands (all matmuls); softmax uses an exact divide.
    ref = card_attention_reference(src, params, n_heads=n_heads,
                                   merge_size=merge_size)
    np.testing.assert_allclose(np.asarray(out), np.asarray(ref),
                               atol=1e-1, rtol=1e-1)

    print("KERNEL_OK")
</pallas_src>

<mosaic_0001>
module attributes {stable_mosaic.version = 11 : i64} {
  func.func @_card_kernel(%arg0: i32, %arg1: memref<32x32xf32, #tpu.memory_space<vmem>>, %arg2: memref<3x32x32xbf16, #tpu.memory_space<vmem>>, %arg3: memref<3x32x32xbf16, #tpu.memory_space<vmem>>, %arg4: memref<3x32xf32, #tpu.memory_space<vmem>>, %arg5: memref<2x32x64xbf16, #tpu.memory_space<vmem>>, %arg6: memref<2x64xf32, #tpu.memory_space<vmem>>, %arg7: memref<2x64x32xbf16, #tpu.memory_space<vmem>>, %arg8: memref<3x32xf32, #tpu.memory_space<vmem>>, %arg9: memref<32x32xf32, #tpu.memory_space<vmem>>, %arg10: memref<32x32xf32, #tpu.memory_space<vmem>>, %arg11: memref<4x1x32xf32, #tpu.memory_space<vmem>>, %arg12: memref<4x1x32xf32, #tpu.memory_space<vmem>>, %arg13: memref<1x8x32xf32, #tpu.memory_space<vmem>>, %arg14: memref<32x32xf32, #tpu.memory_space<vmem>>) attributes {dimension_semantics = [#tpu.dimension_semantics<parallel>], iteration_bounds = array<i64: 2>, scalar_prefetch = 0 : i64, scratch_operands = 0 : i64, tpu.core_type = #tpu.core_type<tc>, window_params = [{transform_indices = @transform_0, window_bounds = array<i64: 32, 32>}, {pipeline_mode = #tpu.pipeline_mode<synchronous>, transform_indices = @transform_1, window_bounds = array<i64: 3, 32, 32>}, {pipeline_mode = #tpu.pipeline_mode<synchronous>, transform_indices = @transform_2, window_bounds = array<i64: 3, 32, 32>}, {pipeline_mode = #tpu.pipeline_mode<synchronous>, transform_indices = @transform_3, window_bounds = array<i64: 3, 32>}, {pipeline_mode = #tpu.pipeline_mode<synchronous>, transform_indices = @transform_4, window_bounds = array<i64: 2, 32, 64>}, {pipeline_mode = #tpu.pipeline_mode<synchronous>, transform_indices = @transform_5, window_bounds = array<i64: 2, 64>}, {pipeline_mode = #tpu.pipeline_mode<synchronous>, transform_indices = @transform_6, window_bounds = array<i64: 2, 64, 32>}, {pipeline_mode = #tpu.pipeline_mode<synchronous>, transform_indices = @transform_7, window_bounds = array<i64: 3, 32>}, {pipeline_mode = #tpu.pipeline_mode<synchronous>, transform_indices = @transform_8, window_bounds = array<i64: 32, 32>}, {pipeline_mode = #tpu.pipeline_mode<synchronous>, transform_indices = @transform_9, window_bounds = array<i64: 32, 32>}, {pipeline_mode = #tpu.pipeline_mode<synchronous>, transform_indices = @transform_10, window_bounds = array<i64: 4, 1, 32>}, {pipeline_mode = #tpu.pipeline_mode<synchronous>, transform_indices = @transform_11, window_bounds = array<i64: 4, 1, 32>}, {pipeline_mode = #tpu.pipeline_mode<synchronous>, transform_indices = @transform_12, window_bounds = array<i64: 1, 8, 32>}, {transform_indices = @transform_13, window_bounds = array<i64: 32, 32>}]} {
    %c0 = arith.constant 0 : index
    %c0_0 = arith.constant 0 : index
    %0 = vector.load %arg1[%c0, %c0_0] : memref<32x32xf32, #tpu.memory_space<vmem>>, vector<32x32xf32>
    %1 = arith.truncf %0 : vector<32x32xf32> to vector<32x32xbf16>
    %c0_1 = arith.constant 0 : index
    %c0_2 = arith.constant 0 : index
    %2 = vector.load %arg4[%c0_1, %c0_2] : memref<3x32xf32, #tpu.memory_space<vmem>>, vector<3x32xf32>
    %c0_3 = arith.constant 0 : index
    %c0_4 = arith.constant 0 : index
    %c0_5 = arith.constant 0 : index
    %3 = vector.load %arg3[%c0_3, %c0_4, %c0_5] : memref<3x32x32xbf16, #tpu.memory_space<vmem>>, vector<1x32x32xbf16>
    %4 = vector.shape_cast %3 : vector<1x32x32xbf16> to vector<32x32xbf16>
    %cst = arith.constant dense<0.000000e+00> : vector<32x32xf32>
    %5 = tpu.matmul %1, %4, %cst {dimension_numbers = #tpu.dot_dimension_numbers<[1], [0], [0], [1], [0, 0, 1, 1], [], []>} : vector<32x32xbf16>, vector<32x32xbf16>, vector<32x32xf32> -> vector<32x32xf32>
    %6 = vector.extract_strided_slice %2 {offsets = [0, 0], sizes = [1, 32], strides = [1, 1]} : vector<3x32xf32> to vector<1x32xf32>
    %7 = vector.broadcast %6 : vector<1x32xf32> to vector<32x32xf32>
    %8 = arith.addf %5, %7 : vector<32x32xf32>
    %c1 = arith.constant 1 : index
    %c0_6 = arith.constant 0 : index
    %c0_7 = arith.constant 0 : index
    %9 = vector.load %arg3[%c1, %c0_6, %c0_7] : memref<3x32x32xbf16, #tpu.memory_space<vmem>>, vector<1x32x32xbf16>
    %10 = vector.shape_cast %9 : vector<1x32x32xbf16> to vector<32x32xbf16>
    %cst_8 = arith.constant dense<0.000000e+00> : vector<32x32xf32>
    %11 = tpu.matmul %1, %10, %cst_8 {dimension_numbers = #tpu.dot_dimension_numbers<[1], [0], [0], [1], [0, 0, 1, 1], [], []>} : vector<32x32xbf16>, vector<32x32xbf16>, vector<32x32xf32> -> vector<32x32xf32>
    %12 = vector.extract_strided_slice %2 {offsets = [1, 0], sizes = [1, 32], strides = [1, 1]} : vector<3x32xf32> to vector<1x32xf32>
    %13 = vector.broadcast %12 : vector<1x32xf32> to vector<32x32xf32>
    %14 = arith.addf %11, %13 : vector<32x32xf32>
    %c2 = arith.constant 2 : index
    %c0_9 = arith.constant 0 : index
    %c0_10 = arith.constant 0 : index
    %15 = vector.load %arg3[%c2, %c0_9, %c0_10] : memref<3x32x32xbf16, #tpu.memory_space<vmem>>, vector<1x32x32xbf16>
    %16 = vector.shape_cast %15 : vector<1x32x32xbf16> to vector<32x32xbf16>
    %cst_11 = arith.constant dense<0.000000e+00> : vector<32x32xf32>
    %17 = tpu.matmul %1, %16, %cst_11 {dimension_numbers = #tpu.dot_dimension_numbers<[1], [0], [0], [1], [0, 0, 1, 1], [], []>} : vector<32x32xbf16>, vector<32x32xbf16>, vector<32x32xf32> -> vector<32x32xf32>
    %18 = vector.extract_strided_slice %2 {offsets = [2, 0], sizes = [1, 32], strides = [1, 1]} : vector<3x32xf32> to vector<1x32xf32>
    %19 = vector.broadcast %18 : vector<1x32xf32> to vector<32x32xf32>
    %20 = arith.addf %17, %19 : vector<32x32xf32>
    %21 = arith.truncf %8 : vector<32x32xf32> to vector<32x32xbf16>
    %22 = arith.truncf %14 : vector<32x32xf32> to vector<32x32xbf16>
    %23 = arith.truncf %20 : vector<32x32xf32> to vector<32x32xbf16>
    %c0_12 = arith.constant 0 : index
    %c0_13 = arith.constant 0 : index
    %c0_14 = arith.constant 0 : index
    %24 = vector.load %arg2[%c0_12, %c0_13, %c0_14] : memref<3x32x32xbf16, #tpu.memory_space<vmem>>, vector<1x32x32xbf16>
    %25 = vector.shape_cast %24 : vector<1x32x32xbf16> to vector<32x32xbf16>
    %cst_15 = arith.constant dense<0.000000e+00> : vector<32x32xf32>
    %26 = tpu.matmul %25, %21, %cst_15 {dimension_numbers = #tpu.dot_dimension_numbers<[1], [0], [0], [1], [0, 0, 1, 1], [], []>} : vector<32x32xbf16>, vector<32x32xbf16>, vector<32x32xf32> -> vector<32x32xf32>
    %c1_16 = arith.constant 1 : index
    %c0_17 = arith.constant 0 : index
    %c0_18 = arith.constant 0 : index
    %27 = vector.load %arg2[%c1_16, %c0_17, %c0_18] : memref<3x32x32xbf16, #tpu.memory_space<vmem>>, vector<1x32x32xbf16>
    %28 = vector.shape_cast %27 : vector<1x32x32xbf16> to vector<32x32xbf16>
    %cst_19 = arith.constant dense<0.000000e+00> : vector<32x32xf32>
    %29 = tpu.matmul %28, %22, %cst_19 {dimension_numbers = #tpu.dot_dimension_numbers<[1], [0], [0], [1], [0, 0, 1, 1], [], []>} : vector<32x32xbf16>, vector<32x32xbf16>, vector<32x32xf32> -> vector<32x32xf32>
    %c2_20 = arith.constant 2 : index
    %c0_21 = arith.constant 0 : index
    %c0_22 = arith.constant 0 : index
    %30 = vector.load %arg2[%c2_20, %c0_21, %c0_22] : memref<3x32x32xbf16, #tpu.memory_space<vmem>>, vector<1x32x32xbf16>
    %31 = vector.shape_cast %30 : vector<1x32x32xbf16> to vector<32x32xbf16>
    %cst_23 = arith.constant dense<0.000000e+00> : vector<32x32xf32>
    %32 = tpu.matmul %31, %23, %cst_23 {dimension_numbers = #tpu.dot_dimension_numbers<[1], [0], [0], [1], [0, 0, 1, 1], [], []>} : vector<32x32xbf16>, vector<32x32xbf16>, vector<32x32xf32> -> vector<32x32xf32>
    %c0_24 = arith.constant 0 : index
    %c0_25 = arith.constant 0 : index
    %c0_26 = arith.constant 0 : index
    %33 = vector.load %arg11[%c0_24, %c0_25, %c0_26] : memref<4x1x32xf32, #tpu.memory_space<vmem>>, vector<4x1x32xf32>
    %34 = vector.shape_cast %26 : vector<32x32xf32> to vector<1x32x32xf32>
    %35 = vector.broadcast %34 : vector<1x32x32xf32> to vector<4x32x32xf32>
    %36 = vector.broadcast %33 : vector<4x1x32xf32> to vector<4x32x32xf32>
    %37 = arith.mulf %35, %36 : vector<4x32x32xf32>
    %38 = vector.shape_cast %37 : vector<4x32x32xf32> to vector<128x32xf32>
    %39 = arith.truncf %38 : vector<128x32xf32> to vector<128x32xbf16>
    %40 = arith.truncf %29 : vector<32x32xf32> to vector<32x32xbf16>
    %cst_27 = arith.constant dense<0.000000e+00> : vector<128x32xf32>
    %41 = tpu.matmul %39, %40, %cst_27 {dimension_numbers = #tpu.dot_dimension_numbers<[1], [1], [0], [0], [0, 0, 1, 0], [], []>} : vector<128x32xbf16>, vector<32x32xbf16>, vector<128x32xf32> -> vector<128x32xf32>
    %42 = vector.shape_cast %41 : vector<128x32xf32> to vector<4x32x32xf32>
    %c0_28 = arith.constant 0 : index
    %c0_29 = arith.constant 0 : index
    %43 = vector.load %arg9[%c0_28, %c0_29] : memref<32x32xf32, #tpu.memory_space<vmem>>, vector<32x32xf32>
    %44 = vector.shape_cast %43 : vector<32x32xf32> to vector<1x32x32xf32>
    %45 = vector.broadcast %44 : vector<1x32x32xf32> to vector<4x32x32xf32>
    %46 = arith.addf %42, %45 : vector<4x32x32xf32>
    %cst_30 = arith.constant dense<0xFF800000> : vector<4x32xf32>
    %47 = vector.multi_reduction <maximumf>, %46, %cst_30 [2] : vector<4x32x32xf32> to vector<4x32xf32>
    %48 = vector.shape_cast %47 : vector<4x32xf32> to vector<4x32x1xf32>
    %49 = vector.broadcast %48 : vector<4x32x1xf32> to vector<4x32x32xf32>
    %50 = arith.subf %46, %49 : vector<4x32x32xf32>
    %51 = math.exp %50 : vector<4x32x32xf32>
    %cst_31 = arith.constant dense<0.000000e+00> : vector<4x32xf32>
    %52 = vector.multi_reduction <add>, %51, %cst_31 [2] : vector<4x32x32xf32> to vector<4x32xf32>
    %53 = vector.shape_cast %52 : vector<4x32xf32> to vector<4x32x1xf32>
    %54 = vector.broadcast %53 : vector<4x32x1xf32> to vector<4x32x32xf32>
    %55 = arith.divf %51, %54 : vector<4x32x32xf32>
    %56 = vector.shape_cast %55 : vector<4x32x32xf32> to vector<128x32xf32>
    %57 = arith.truncf %56 : vector<128x32xf32> to vector<128x32xbf16>
    %cst_32 = arith.constant dense<0.000000e+00> : vector<128x32xf32>
    %58 = tpu.matmul %57, %23, %cst_32 {dimension_numbers = #tpu.dot_dimension_numbers<[1], [0], [0], [1], [0, 0, 1, 1], [], []>} : vector<128x32xbf16>, vector<32x32xbf16>, vector<128x32xf32> -> vector<128x32xf32>
    %59 = vector.shape_cast %58 : vector<128x32xf32> to vector<4x32x32xf32>
    %60 = vector.broadcast %33 : vector<4x1x32xf32> to vector<4x32x32xf32>
    %61 = arith.mulf %59, %60 : vector<4x32x32xf32>
    %cst_33 = arith.constant dense<0.000000e+00> : vector<32x32xf32>
    %62 = vector.multi_reduction <add>, %61, %cst_33 [0] : vector<4x32x32xf32> to vector<32x32xf32>
    %c0_34 = arith.constant 0 : index
    %c0_35 = arith.constant 0 : index
    %c0_36 = arith.constant 0 : index
    %63 = vector.load %arg12[%c0_34, %c0_35, %c0_36] : memref<4x1x32xf32, #tpu.memory_space<vmem>>, vector<4x1x32xf32>
    %64 = tpu.transpose %8, [1, 0] : vector<32x32xf32> -> vector<32x32xf32>
    %65 = vector.shape_cast %64 : vector<32x32xf32> to vector<1x32x32xf32>
    %66 = vector.broadcast %65 : vector<1x32x32xf32> to vector<4x32x32xf32>
    %67 = vector.broadcast %63 : vector<4x1x32xf32> to vector<4x32x32xf32>
    %68 = arith.mulf %66, %67 : vector<4x32x32xf32>
    %69 = vector.shape_cast %68 : vector<4x32x32xf32> to vector<128x32xf32>
    %70 = arith.truncf %69 : vector<128x32xf32> to vector<128x32xbf16>
    %cst_37 = arith.constant dense<0.000000e+00> : vector<128x32xf32>
    %71 = tpu.matmul %70, %22, %cst_37 {dimension_numbers = #tpu.dot_dimension_numbers<[1], [0], [0], [1], [0, 0, 1, 1], [], []>} : vector<128x32xbf16>, vector<32x32xbf16>, vector<128x32xf32> -> vector<128x32xf32>
    %72 = vector.shape_cast %71 : vector<128x32xf32> to vector<4x32x32xf32>
    %c0_38 = arith.constant 0 : index
    %c0_39 = arith.constant 0 : index
    %73 = vector.load %arg10[%c0_38, %c0_39] : memref<32x32xf32, #tpu.memory_space<vmem>>, vector<32x32xf32>
    %74 = vector.shape_cast %73 : vector<32x32xf32> to vector<1x32x32xf32>
    %75 = vector.broadcast %74 : vector<1x32x32xf32> to vector<4x32x32xf32>
    %76 = arith.addf %72, %75 : vector<4x32x32xf32>
    %cst_40 = arith.constant dense<0xFF800000> : vector<4x32xf32>
    %77 = vector.multi_reduction <maximumf>, %76, %cst_40 [2] : vector<4x32x32xf32> to vector<4x32xf32>
    %78 = vector.shape_cast %77 : vector<4x32xf32> to vector<4x32x1xf32>
    %79 = vector.broadcast %78 : vector<4x32x1xf32> to vector<4x32x32xf32>
    %80 = arith.subf %76, %79 : vector<4x32x32xf32>
    %81 = math.exp %80 : vector<4x32x32xf32>
    %cst_41 = arith.constant dense<0.000000e+00> : vector<4x32xf32>
    %82 = vector.multi_reduction <add>, %81, %cst_41 [2] : vector<4x32x32xf32> to vector<4x32xf32>
    %83 = vector.shape_cast %82 : vector<4x32xf32> to vector<4x32x1xf32>
    %84 = vector.broadcast %83 : vector<4x32x1xf32> to vector<4x32x32xf32>
    %85 = arith.divf %81, %84 : vector<4x32x32xf32>
    %86 = vector.shape_cast %32 : vector<32x32xf32> to vector<4x8x32xf32>
    %87 = arith.truncf %86 : vector<4x8x32xf32> to vector<4x8x32xbf16>
    %88 = arith.truncf %85 : vector<4x32x32xf32> to vector<4x32x32xbf16>
    %cst_42 = arith.constant dense<0.000000e+00> : vector<4x8x32xf32>
    %89 = tpu.matmul %87, %88, %cst_42 {dimension_numbers = #tpu.dot_dimension_numbers<[2], [2], [1], [1], [0, 0, 0, 1, 1, 1], [0], [0]>} : vector<4x8x32xbf16>, vector<4x32x32xbf16>, vector<4x8x32xf32> -> vector<4x8x32xf32>
    %c0_43 = arith.constant 0 : index
    %c0_44 = arith.constant 0 : index
    %c0_45 = arith.constant 0 : index
    %90 = vector.load %arg13[%c0_43, %c0_44, %c0_45] : memref<1x8x32xf32, #tpu.memory_space<vmem>>, vector<1x8x32xf32>
    %91 = vector.shape_cast %62 : vector<32x32xf32> to vector<4x8x32xf32>
    %cst_46 = arith.constant 0.000000e+00 : f32
    %92 = vector.broadcast %cst_46 : f32 to vector<1x8x32xf32>
    %93 = arith.cmpf oeq, %90, %92 : vector<1x8x32xf32>
    %cst_47 = arith.constant 0.000000e+00 : f32
    %94 = vector.shape_cast %93 : vector<1x8x32xi1> to vector<1x8x32xi1>
    %95 = vector.broadcast %94 : vector<1x8x32xi1> to vector<4x8x32xi1>
    %96 = vector.broadcast %cst_47 : f32 to vector<4x8x32xf32>
    %97 = arith.select %95, %91, %96 : vector<4x8x32xi1>, vector<4x8x32xf32>
    %c4_i32 = arith.constant 4 : i32
    %98 = tpu.dynamic_rotate %91 by %c4_i32 dim 1 : vector<4x8x32xf32>, i32 -> vector<4x8x32xf32>
    %c16_i32 = arith.constant 16 : i32
    %99 = tpu.dynamic_rotate %98 by %c16_i32 dim 2 : vector<4x8x32xf32>, i32 -> vector<4x8x32xf32>
    %cst_48 = arith.constant 1.000000e+00 : f32
    %100 = vector.broadcast %cst_48 : f32 to vector<1x8x32xf32>
    %101 = arith.cmpf oeq, %90, %100 : vector<1x8x32xf32>
    %cst_49 = arith.constant 0.000000e+00 : f32
    %102 = vector.shape_cast %101 : vector<1x8x32xi1> to vector<1x8x32xi1>
    %103 = vector.broadcast %102 : vector<1x8x32xi1> to vector<4x8x32xi1>
    %104 = vector.broadcast %cst_49 : f32 to vector<4x8x32xf32>
    %105 = arith.select %103, %99, %104 : vector<4x8x32xi1>, vector<4x8x32xf32>
    %106 = arith.addf %97, %105 : vector<4x8x32xf32>
    %cst_50 = arith.constant 0.000000e+00 : f32
    %107 = vector.broadcast %cst_50 : f32 to vector<1x8x32xf32>
    %108 = arith.cmpf oeq, %90, %107 : vector<1x8x32xf32>
    %cst_51 = arith.constant 0.000000e+00 : f32
    %109 = vector.shape_cast %108 : vector<1x8x32xi1> to vector<1x8x32xi1>
    %110 = vector.broadcast %109 : vector<1x8x32xi1> to vector<4x8x32xi1>
    %111 = vector.broadcast %cst_51 : f32 to vector<4x8x32xf32>
    %112 = arith.select %110, %89, %111 : vector<4x8x32xi1>, vector<4x8x32xf32>
    %c4_i32_52 = arith.constant 4 : i32
    %113 = tpu.dynamic_rotate %89 by %c4_i32_52 dim 1 : vector<4x8x32xf32>, i32 -> vector<4x8x32xf32>
    %c16_i32_53 = arith.constant 16 : i32
    %114 = tpu.dynamic_rotate %113 by %c16_i32_53 dim 2 : vector<4x8x32xf32>, i32 -> vector<4x8x32xf32>
    %cst_54 = arith.constant 1.000000e+00 : f32
    %115 = vector.broadcast %cst_54 : f32 to vector<1x8x32xf32>
    %116 = arith.cmpf oeq, %90, %115 : vector<1x8x32xf32>
    %cst_55 = arith.constant 0.000000e+00 : f32
    %117 = vector.shape_cast %116 : vector<1x8x32xi1> to vector<1x8x32xi1>
    %118 = vector.broadcast %117 : vector<1x8x32xi1> to vector<4x8x32xi1>
    %119 = vector.broadcast %cst_55 : f32 to vector<4x8x32xf32>
    %120 = arith.select %118, %114, %119 : vector<4x8x32xi1>, vector<4x8x32xf32>
    %121 = arith.addf %112, %120 : vector<4x8x32xf32>
    %c0_56 = arith.constant 0 : index
    %c0_57 = arith.constant 0 : index
    %122 = vector.load %arg6[%c0_56, %c0_57] : memref<2x64xf32, #tpu.memory_space<vmem>>, vector<2x64xf32>
    %c0_58 = arith.constant 0 : index
    %c0_59 = arith.constant 0 : index
    %123 = vector.load %arg8[%c0_58, %c0_59] : memref<3x32xf32, #tpu.memory_space<vmem>>, vector<3x32xf32>
    %124 = vector.shape_cast %106 : vector<4x8x32xf32> to vector<32x32xf32>
    %125 = arith.truncf %124 : vector<32x32xf32> to vector<32x32xbf16>
    %c0_60 = arith.constant 0 : index
    %c0_61 = arith.constant 0 : index
    %c0_62 = arith.constant 0 : index
    %126 = vector.load %arg5[%c0_60, %c0_61, %c0_62] : memref<2x32x64xbf16, #tpu.memory_space<vmem>>, vector<1x32x64xbf16>
    %127 = vector.shape_cast %126 : vector<1x32x64xbf16> to vector<32x64xbf16>
    %cst_63 = arith.constant dense<0.000000e+00> : vector<32x64xf32>
    %128 = tpu.matmul %125, %127, %cst_63 {dimension_numbers = #tpu.dot_dimension_numbers<[1], [0], [0], [1], [0, 0, 1, 1], [], []>} : vector<32x32xbf16>, vector<32x64xbf16>, vector<32x64xf32> -> vector<32x64xf32>
    %129 = vector.extract_strided_slice %122 {offsets = [0, 0], sizes = [1, 64], strides = [1, 1]} : vector<2x64xf32> to vector<1x64xf32>
    %130 = vector.broadcast %129 : vector<1x64xf32> to vector<32x64xf32>
    %131 = arith.addf %128, %130 : vector<32x64xf32>
    %132 = vector.shape_cast %121 : vector<4x8x32xf32> to vector<32x32xf32>
    %133 = arith.truncf %132 : vector<32x32xf32> to vector<32x32xbf16>
    %c1_64 = arith.constant 1 : index
    %c0_65 = arith.constant 0 : index
    %c0_66 = arith.constant 0 : index
    %134 = vector.load %arg5[%c1_64, %c0_65, %c0_66] : memref<2x32x64xbf16, #tpu.memory_space<vmem>>, vector<1x32x64xbf16>
    %135 = vector.shape_cast %134 : vector<1x32x64xbf16> to vector<32x64xbf16>
    %cst_67 = arith.constant dense<0.000000e+00> : vector<32x64xf32>
    %136 = tpu.matmul %133, %135, %cst_67 {dimension_numbers = #tpu.dot_dimension_numbers<[1], [0], [0], [1], [0, 0, 1, 1], [], []>} : vector<32x32xbf16>, vector<32x64xbf16>, vector<32x64xf32> -> vector<32x64xf32>
    %137 = vector.extract_strided_slice %122 {offsets = [1, 0], sizes = [1, 64], strides = [1, 1]} : vector<2x64xf32> to vector<1x64xf32>
    %138 = vector.broadcast %137 : vector<1x64xf32> to vector<32x64xf32>
    %139 = arith.addf %136, %138 : vector<32x64xf32>
    %cst_68 = arith.constant 5.000000e-01 : f32
    %140 = vector.broadcast %cst_68 : f32 to vector<32x64xf32>
    %141 = arith.mulf %140, %131 : vector<32x64xf32>
    %cst_69 = arith.constant 0.707106769 : f32
    %142 = vector.broadcast %cst_69 : f32 to vector<32x64xf32>
    %143 = arith.mulf %131, %142 : vector<32x64xf32>
    %144 = math.erf %143 : vector<32x64xf32>
    %cst_70 = arith.constant 1.000000e+00 : f32
    %145 = vector.broadcast %cst_70 : f32 to vector<32x64xf32>
    %146 = arith.addf %145, %144 : vector<32x64xf32>
    %147 = arith.mulf %141, %146 : vector<32x64xf32>
    %148 = arith.truncf %147 : vector<32x64xf32> to vector<32x64xbf16>
    %c0_71 = arith.constant 0 : index
    %c0_72 = arith.constant 0 : index
    %c0_73 = arith.constant 0 : index
    %149 = vector.load %arg7[%c0_71, %c0_72, %c0_73] : memref<2x64x32xbf16, #tpu.memory_space<vmem>>, vector<1x64x32xbf16>
    %150 = vector.shape_cast %149 : vector<1x64x32xbf16> to vector<64x32xbf16>
    %cst_74 = arith.constant dense<0.000000e+00> : vector<32x32xf32>
    %151 = tpu.matmul %148, %150, %cst_74 {dimension_numbers = #tpu.dot_dimension_numbers<[1], [0], [0], [1], [0, 0, 1, 1], [], []>} : vector<32x64xbf16>, vector<64x32xbf16>, vector<32x32xf32> -> vector<32x32xf32>
    %cst_75 = arith.constant 5.000000e-01 : f32
    %152 = vector.broadcast %cst_75 : f32 to vector<32x64xf32>
    %153 = arith.mulf %152, %139 : vector<32x64xf32>
    %cst_76 = arith.constant 0.707106769 : f32
    %154 = vector.broadcast %cst_76 : f32 to vector<32x64xf32>
    %155 = arith.mulf %139, %154 : vector<32x64xf32>
    %156 = math.erf %155 : vector<32x64xf32>
    %cst_77 = arith.constant 1.000000e+00 : f32
    %157 = vector.broadcast %cst_77 : f32 to vector<32x64xf32>
    %158 = arith.addf %157, %156 : vector<32x64xf32>
    %159 = arith.mulf %153, %158 : vector<32x64xf32>
    %160 = arith.truncf %159 : vector<32x64xf32> to vector<32x64xbf16>
    %c1_78 = arith.constant 1 : index
    %c0_79 = arith.constant 0 : index
    %c0_80 = arith.constant 0 : index
    %161 = vector.load %arg7[%c1_78, %c0_79, %c0_80] : memref<2x64x32xbf16, #tpu.memory_space<vmem>>, vector<1x64x32xbf16>
    %162 = vector.shape_cast %161 : vector<1x64x32xbf16> to vector<64x32xbf16>
    %cst_81 = arith.constant dense<0.000000e+00> : vector<32x32xf32>
    %163 = tpu.matmul %160, %162, %cst_81 {dimension_numbers = #tpu.dot_dimension_numbers<[1], [0], [0], [1], [0, 0, 1, 1], [], []>} : vector<32x64xbf16>, vector<64x32xbf16>, vector<32x32xf32> -> vector<32x32xf32>
    %164 = arith.addf %151, %163 : vector<32x32xf32>
    %165 = vector.extract_strided_slice %123 {offsets = [0, 0], sizes = [1, 32], strides = [1, 1]} : vector<3x32xf32> to vector<1x32xf32>
    %166 = vector.broadcast %165 : vector<1x32xf32> to vector<32x32xf32>
    %167 = arith.addf %164, %166 : vector<32x32xf32>
    %168 = arith.addf %0, %167 : vector<32x32xf32>
    %169 = vector.extract_strided_slice %123 {offsets = [1, 0], sizes = [1, 32], strides = [1, 1]} : vector<3x32xf32> to vector<1x32xf32>
    %170 = vector.broadcast %169 : vector<1x32xf32> to vector<32x32xf32>
    %171 = arith.mulf %168, %170 : vector<32x32xf32>
    %172 = vector.extract_strided_slice %123 {offsets = [2, 0], sizes = [1, 32], strides = [1, 1]} : vector<3x32xf32> to vector<1x32xf32>
    %173 = vector.broadcast %172 : vector<1x32xf32> to vector<32x32xf32>
    %174 = arith.addf %171, %173 : vector<32x32xf32>
    %c0_82 = arith.constant 0 : index
    %c0_83 = arith.constant 0 : index
    %175 = vector.load %arg14[%c0_82, %c0_83] : memref<32x32xf32, #tpu.memory_space<vmem>>, vector<32x32xf32>
    tpu.vector_store %arg14[%c0_82, %c0_83], %174 {strides = array<i32>} : memref<32x32xf32, #tpu.memory_space<vmem>>, vector<32x32xf32>,
    return
  }
  func.func @transform_0(%arg0: i32) -> (i32, i32) {
    %c0_i32 = arith.constant 0 : i32
    %c0_i32_0 = arith.constant 0 : i32
    return %arg0, %c0_i32 : i32, i32
  }
  func.func @transform_1(%arg0: i32) -> (i32, i32, i32) {
    %c0_i32 = arith.constant 0 : i32
    %c0_i32_0 = arith.constant 0 : i32
    %c0_i32_1 = arith.constant 0 : i32
    %c0_i32_2 = arith.constant 0 : i32
    return %c0_i32, %c0_i32_0, %c0_i32_1 : i32, i32, i32
  }
  func.func @transform_2(%arg0: i32) -> (i32, i32, i32) {
    %c0_i32 = arith.constant 0 : i32
    %c0_i32_0 = arith.constant 0 : i32
    %c0_i32_1 = arith.constant 0 : i32
    %c0_i32_2 = arith.constant 0 : i32
    return %c0_i32, %c0_i32_0, %c0_i32_1 : i32, i32, i32
  }
  func.func @transform_3(%arg0: i32) -> (i32, i32) {
    %c0_i32 = arith.constant 0 : i32
    %c0_i32_0 = arith.constant 0 : i32
    %c0_i32_1 = arith.constant 0 : i32
    return %c0_i32, %c0_i32_0 : i32, i32
  }
  func.func @transform_4(%arg0: i32) -> (i32, i32, i32) {
    %c0_i32 = arith.constant 0 : i32
    %c0_i32_0 = arith.constant 0 : i32
    %c0_i32_1 = arith.constant 0 : i32
    %c0_i32_2 = arith.constant 0 : i32
    return %c0_i32, %c0_i32_0, %c0_i32_1 : i32, i32, i32
  }
  func.func @transform_5(%arg0: i32) -> (i32, i32) {
    %c0_i32 = arith.constant 0 : i32
    %c0_i32_0 = arith.constant 0 : i32
    %c0_i32_1 = arith.constant 0 : i32
    return %c0_i32, %c0_i32_0 : i32, i32
  }
  func.func @transform_6(%arg0: i32) -> (i32, i32, i32) {
    %c0_i32 = arith.constant 0 : i32
    %c0_i32_0 = arith.constant 0 : i32
    %c0_i32_1 = arith.constant 0 : i32
    %c0_i32_2 = arith.constant 0 : i32
    return %c0_i32, %c0_i32_0, %c0_i32_1 : i32, i32, i32
  }
  func.func @transform_7(%arg0: i32) -> (i32, i32) {
    %c0_i32 = arith.constant 0 : i32
    %c0_i32_0 = arith.constant 0 : i32
    %c0_i32_1 = arith.constant 0 : i32
    return %c0_i32, %c0_i32_0 : i32, i32
  }
  func.func @transform_8(%arg0: i32) -> (i32, i32) {
    %c0_i32 = arith.constant 0 : i32
    %c0_i32_0 = arith.constant 0 : i32
    %c0_i32_1 = arith.constant 0 : i32
    return %c0_i32, %c0_i32_0 : i32, i32
  }
  func.func @transform_9(%arg0: i32) -> (i32, i32) {
    %c0_i32 = arith.constant 0 : i32
    %c0_i32_0 = arith.constant 0 : i32
    %c0_i32_1 = arith.constant 0 : i32
    return %c0_i32, %c0_i32_0 : i32, i32
  }
  func.func @transform_10(%arg0: i32) -> (i32, i32, i32) {
    %c0_i32 = arith.constant 0 : i32
    %c0_i32_0 = arith.constant 0 : i32
    %c0_i32_1 = arith.constant 0 : i32
    %c0_i32_2 = arith.constant 0 : i32
    return %c0_i32, %c0_i32_0, %c0_i32_1 : i32, i32, i32
  }
  func.func @transform_11(%arg0: i32) -> (i32, i32, i32) {
    %c0_i32 = arith.constant 0 : i32
    %c0_i32_0 = arith.constant 0 : i32
    %c0_i32_1 = arith.constant 0 : i32
    %c0_i32_2 = arith.constant 0 : i32
    return %c0_i32, %c0_i32_0, %c0_i32_1 : i32, i32, i32
  }
  func.func @transform_12(%arg0: i32) -> (i32, i32, i32) {
    %c0_i32 = arith.constant 0 : i32
    %c0_i32_0 = arith.constant 0 : i32
    %c0_i32_1 = arith.constant 0 : i32
    %c0_i32_2 = arith.constant 0 : i32
    return %c0_i32, %c0_i32_0, %c0_i32_1 : i32, i32, i32
  }
  func.func @transform_13(%arg0: i32) -> (i32, i32) {
    %c0_i32 = arith.constant 0 : i32
    %c0_i32_0 = arith.constant 0 : i32
    return %arg0, %c0_i32 : i32, i32
  }
}

</mosaic_0001>

<llo_original>
// kernel: card_attention_forward.1
$region0: #{card_attention_forward.1}
  #allocation0 [shape = 'u32[]', space=smem, size = 0x4, offset = 0x4, fixed_abs, tag = 'smem constant byte address 0x4 - core index']
  #allocation1 [shape = 'u32[144,128]{1,0:T(1,128)}', space=vmem, size = 0x12000, scoped, tag = 'internal scratch']
  %s0 = inlined_call_operand.vmem [shape: f32[64,32], index: 0, kind: input, shape index: {}]
  %s1 = inlined_call_operand.hbm [shape: bf16[3,32,32], index: 1, kind: input, shape index: {}]
  %s2 = inlined_call_operand.vmem [shape: bf16[3,32,32], index: 2, kind: input, shape index: {}]
  %s3 = inlined_call_operand.hbm [shape: f32[3,32], index: 3, kind: input, shape index: {}]
  %s4 = inlined_call_operand.hbm [shape: bf16[2,32,64], index: 4, kind: input, shape index: {}]
  %s5 = inlined_call_operand.hbm [shape: f32[2,64], index: 5, kind: input, shape index: {}]
  %s6 = inlined_call_operand.vmem [shape: bf16[2,64,32], index: 6, kind: input, shape index: {}]
  %s7 = inlined_call_operand.hbm [shape: f32[3,32], index: 7, kind: input, shape index: {}]
  %s8 = inlined_call_operand.hbm [shape: f32[32,32], index: 8, kind: input, shape index: {}]
  %s9 = inlined_call_operand.hbm [shape: f32[32,32], index: 9, kind: input, shape index: {}]
  %s10 = inlined_call_operand.hbm [shape: f32[4,1,32], index: 10, kind: input, shape index: {}]
  %s11 = inlined_call_operand.hbm [shape: f32[4,1,32], index: 11, kind: input, shape index: {}]
  %s12 = inlined_call_operand.hbm [shape: f32[1,8,32], index: 12, kind: input, shape index: {}]
  %s13 = inlined_call_operand.hbm [shape: f32[64,32], index: 13, kind: output, shape index: {}]
  %s14 = sld [smem:[#allocation0]]
  $region125: #{card_attention_forward.1} parent=0
    _
  %s16 = ssub.s32 1, %s14
  %s17 = scalar_select 0, %s16, %s14
  $region1: #{card_attention_forward.1} parent=0
    #allocation2 [shape = 'u8[24576]{0}', space=vmem, size = 0x6000, scoped, tag = 'input window, operand 1, single buffered']
    #allocation3 [shape = 's32[2]{0}', space=sflag, size = 0x8, scoped, tag = 'scoped memory for card_attention_forward.1']
    #allocation4 [shape = 's32[2]{0}', space=sflag, size = 0x8, scoped, tag = 'scoped memory for card_attention_forward.1']
    #allocation5 [shape = 'u8[2048]{0}', space=vmem, size = 0x800, scoped, tag = 'input window, operand 3, single buffered']
    #allocation6 [shape = 's32[1]{0}', space=sflag, size = 0x4, scoped, tag = 'scoped memory for card_attention_forward.1']
    #allocation7 [shape = 'u8[16384]{0}', space=vmem, size = 0x4000, scoped, tag = 'input window, operand 4, single buffered']
    #allocation8 [shape = 'u8[1024]{0}', space=vmem, size = 0x400, scoped, tag = 'input window, operand 5, single buffered']
    #allocation9 [shape = 's32[1]{0}', space=sflag, size = 0x4, scoped, tag = 'scoped memory for card_attention_forward.1']
    #allocation10 [shape = 'u8[2048]{0}', space=vmem, size = 0x800, scoped, tag = 'input window, operand 7, single buffered']
    #allocation11 [shape = 'u8[16384]{0}', space=vmem, size = 0x4000, scoped, tag = 'input window, operand 8, single buffered']
    #allocation12 [shape = 's32[1]{0}', space=sflag, size = 0x4, scoped, tag = 'scoped memory for card_attention_forward.1']
    #allocation13 [shape = 'u8[16384]{0}', space=vmem, size = 0x4000, scoped, tag = 'input window, operand 9, single buffered']
    #allocation14 [shape = 'u8[2048]{0}', space=vmem, size = 0x800, scoped, tag = 'input window, operand 10, single buffered']
    #allocation15 [shape = 's32[1]{0}', space=sflag, size = 0x4, scoped, tag = 'scoped memory for card_attention_forward.1']
    #allocation16 [shape = 'u8[2048]{0}', space=vmem, size = 0x800, scoped, tag = 'input window, operand 11, single buffered']
    #allocation17 [shape = 'u8[4096]{0}', space=vmem, size = 0x1000, scoped, tag = 'input window, operand 12, single buffered']
    #allocation18 [shape = 's32[1]{0}', space=sflag, size = 0x4, scoped, tag = 'scoped memory for card_attention_forward.1']
    #allocation19 [shape = 'u8[32768]{0}', space=vmem, size = 0x8000, scoped, tag = 'output window, operand 0']
    %18 = vsyncpa [#allocation3], 0
    %19 = vsyncpa [#allocation6], 0
    %20 = vsyncpa [#allocation9], 0
    %21 = vsyncpa [#allocation12], 0
    %22 = vsyncpa [#allocation15], 0
    %23 = vsyncpa [#allocation18], 0
    %24 = vsyncpa [#allocation4], 0
    %s25 = scalar_lea.sflag [#allocation4], 1
    %26 = vsyncpa %s25, 0
    loop: start=0, step=1, limit=4
    $region2: #{card_attention_forward.1} parent=1 // loop_pre_header
      _
    $region3: #{card_attention_forward.1} parent=1 // loop_header
      %s28 = sphi 0, %s32
      %p29 = scmp.ge.s32.totalorder %s28, 4
      %s38 = sphi 0, %s40
      %s41 = sphi 0, %s38
      %s42 = sphi 0, %s41
      %s58 = sphi 0, %s42
      %s62 = sphi 0, %s62
      %s64 = sphi 0, %s62
      %s65 = sphi 0, %s64
      %s79 = sphi 0, %s65
      %s83 = sphi 0, %s83
      %s85 = sphi 0, %s83
      %s86 = sphi 0, %s85
      %s100 = sphi 0, %s86
      %s104 = sphi 0, %s104
      %s106 = sphi 0, %s104
      %s107 = sphi 0, %s106
      %s121 = sphi 0, %s107
      %s125 = sphi 0, %s125
      %s127 = sphi 0, %s125
      %s128 = sphi 0, %s127
      %s142 = sphi 0, %s128
      %s146 = sphi 0, %s146
      %s148 = sphi 0, %s146
      %s149 = sphi 0, %s148
      %s163 = sphi 0, %s149
      %s167 = sphi 0, %s167
      %s169 = sphi 0, %s167
      %s170 = sphi 0, %s169
      %s184 = sphi 0, %s170
      %s188 = sphi 0, %s188
      %s190 = sphi 0, %s188
      %s191 = sphi 0, %s190
      %s205 = sphi 0, %s191
      %s209 = sphi 0, %s209
      %s211 = sphi 0, %s209
      %s212 = sphi 0, %s211
      %s226 = sphi 0, %s212
      %s230 = sphi 0, %s230
      %s232 = sphi 0, %s230
      %s233 = sphi 0, %s232
      %s247 = sphi 0, %s233
      %s251 = sphi 0, %s251
      %s253 = sphi 0, %s251
      %s254 = sphi 0, %s253
      %s268 = sphi 0, %s254
      %s272 = sphi 0, %s272
      %s274 = sphi 0, %s272
      %s275 = sphi 0, %s274
      %s289 = sphi 0, %s275
      %s293 = sphi 0, %s293
      %s295 = sphi 0, %s293
      %s296 = sphi 0, %s295
      %s310 = sphi 0, %s296
      %s316 = sphi 0, %s318
      %s319 = sphi 0, %s316
      %s320 = sphi 0, %s319
      %s336 = sphi 0, %s320
    $region4: #{card_attention_forward.1} parent=1 // loop_header_branch
      %31 = sbr.rel (%p29) target = $region8
    $region5: #{card_attention_forward.1} parent=1 // loop_body
      %s33 = ssub.s32 %s28, 1
      %s34 = ssub.s32 %s28, 2
      %s35 = sadd.s32 %s28, 1
      %s36 = ssub.s32 %s28, %s35
      %p37 = scmp.eq.s32.totalorder %s36, 0
      %s39 = sadd.s32 %s38, 1
      %s40 = scalar_select %p37, %s38, %s39
      %p43 = pneg %p37
      %p44 = scmp.eq.s32.totalorder %s28, 1
      %p45 = por %p43, %p44
      %p46 = scmp.ne.s32.totalorder %s38, %s41
      %p47 = scmp.eq.s32.totalorder %s28, 0
      %p48 = por %p46, %p47
      %p49 = scmp.ne.s32.totalorder %s38, %s41
      %p50 = scmp.eq.s32.totalorder %s33, 1
      %p51 = por %p49, %p50
      %p52 = scmp.ne.s32.totalorder %s41, %s42
      %p53 = scmp.eq.s32.totalorder %s33, 0
      %p54 = por %p52, %p53
      %p55 = scmp.ne.s32.totalorder %s41, %s42
      %p56 = scmp.eq.s32.totalorder %s34, 1
      %p57 = por %p55, %p56
      %p59 = scmp.ne.s32.totalorder %s42, %s58
      %p60 = scmp.eq.s32.totalorder %s34, 0
      %p61 = por %p59, %p60
      %s63 = sadd.s32 %s62, 1
      %p66 = scmp.eq.s32.totalorder %s28, 1
      %p67 = scmp.ne.s32.totalorder %s62, %s64
      %p68 = scmp.eq.s32.totalorder %s28, 0
      %p69 = por %p67, %p68
      %p70 = scmp.ne.s32.totalorder %s62, %s64
      %p71 = scmp.eq.s32.totalorder %s33, 1
      %p72 = por %p70, %p71
      %p73 = scmp.ne.s32.totalorder %s64, %s65
      %p74 = scmp.eq.s32.totalorder %s33, 0
      %p75 = por %p73, %p74
      %p76 = scmp.ne.s32.totalorder %s64, %s65
      %p77 = scmp.eq.s32.totalorder %s34, 1
      %p78 = por %p76, %p77
      %p80 = scmp.ne.s32.totalorder %s65, %s79
      %p81 = scmp.eq.s32.totalorder %s34, 0
      %p82 = por %p80, %p81
      %s84 = sadd.s32 %s83, 1
      %p87 = scmp.eq.s32.totalorder %s28, 1
      %p88 = scmp.ne.s32.totalorder %s83, %s85
      %p89 = scmp.eq.s32.totalorder %s28, 0
      %p90 = por %p88, %p89
      %p91 = scmp.ne.s32.totalorder %s83, %s85
      %p92 = scmp.eq.s32.totalorder %s33, 1
      %p93 = por %p91, %p92
      %p94 = scmp.ne.s32.totalorder %s85, %s86
      %p95 = scmp.eq.s32.totalorder %s33, 0
      %p96 = por %p94, %p95
      %p97 = scmp.ne.s32.totalorder %s85, %s86
      %p98 = scmp.eq.s32.totalorder %s34, 1
      %p99 = por %p97, %p98
      %p101 = scmp.ne.s32.totalorder %s86, %s100
      %p102 = scmp.eq.s32.totalorder %s34, 0
      %p103 = por %p101, %p102
      %s105 = sadd.s32 %s104, 1
      %p108 = scmp.eq.s32.totalorder %s28, 1
      %p109 = scmp.ne.s32.totalorder %s104, %s106
      %p110 = scmp.eq.s32.totalorder %s28, 0
      %p111 = por %p109, %p110
      %p112 = scmp.ne.s32.totalorder %s104, %s106
      %p113 = scmp.eq.s32.totalorder %s33, 1
      %p114 = por %p112, %p113
      %p115 = scmp.ne.s32.totalorder %s106, %s107
      %p116 = scmp.eq.s32.totalorder %s33, 0
      %p117 = por %p115, %p116
      %p118 = scmp.ne.s32.totalorder %s106, %s107
      %p119 = scmp.eq.s32.totalorder %s34, 1
      %p120 = por %p118, %p119
      %p122 = scmp.ne.s32.totalorder %s107, %s121
      %p123 = scmp.eq.s32.totalorder %s34, 0
      %p124 = por %p122, %p123
      %s126 = sadd.s32 %s125, 1
      %p129 = scmp.eq.s32.totalorder %s28, 1
      %p130 = scmp.ne.s32.totalorder %s125, %s127
      %p131 = scmp.eq.s32.totalorder %s28, 0
      %p132 = por %p130, %p131
      %p133 = scmp.ne.s32.totalorder %s125, %s127
      %p134 = scmp.eq.s32.totalorder %s33, 1
      %p135 = por %p133, %p134
      %p136 = scmp.ne.s32.totalorder %s127, %s128
      %p137 = scmp.eq.s32.totalorder %s33, 0
      %p138 = por %p136, %p137
      %p139 = scmp.ne.s32.totalorder %s127, %s128
      %p140 = scmp.eq.s32.totalorder %s34, 1
      %p141 = por %p139, %p140
      %p143 = scmp.ne.s32.totalorder %s128, %s142
      %p144 = scmp.eq.s32.totalorder %s34, 0
      %p145 = por %p143, %p144
      %s147 = sadd.s32 %s146, 1
      %p150 = scmp.eq.s32.totalorder %s28, 1
      %p151 = scmp.ne.s32.totalorder %s146, %s148
      %p152 = scmp.eq.s32.totalorder %s28, 0
      %p153 = por %p151, %p152
      %p154 = scmp.ne.s32.totalorder %s146, %s148
      %p155 = scmp.eq.s32.totalorder %s33, 1
      %p156 = por %p154, %p155
      %p157 = scmp.ne.s32.totalorder %s148, %s149
      %p158 = scmp.eq.s32.totalorder %s33, 0
      %p159 = por %p157, %p158
      %p160 = scmp.ne.s32.totalorder %s148, %s149
      %p161 = scmp.eq.s32.totalorder %s34, 1
      %p162 = por %p160, %p161
      %p164 = scmp.ne.s32.totalorder %s149, %s163
      %p165 = scmp.eq.s32.totalorder %s34, 0
      %p166 = por %p164, %p165
      %s168 = sadd.s32 %s167, 1
      %p171 = scmp.eq.s32.totalorder %s28, 1
      %p172 = scmp.ne.s32.totalorder %s167, %s169
      %p173 = scmp.eq.s32.totalorder %s28, 0
      %p174 = por %p172, %p173
      %p175 = scmp.ne.s32.totalorder %s167, %s169
      %p176 = scmp.eq.s32.totalorder %s33, 1
      %p177 = por %p175, %p176
      %p178 = scmp.ne.s32.totalorder %s169, %s170
      %p179 = scmp.eq.s32.totalorder %s33, 0
      %p180 = por %p178, %p179
      %p181 = scmp.ne.s32.totalorder %s169, %s170
      %p182 = scmp.eq.s32.totalorder %s34, 1
      %p183 = por %p181, %p182
      %p185 = scmp.ne.s32.totalorder %s170, %s184
      %p186 = scmp.eq.s32.totalorder %s34, 0
      %p187 = por %p185, %p186
      %s189 = sadd.s32 %s188, 1
      %p192 = scmp.eq.s32.totalorder %s28, 1
      %p193 = scmp.ne.s32.totalorder %s188, %s190
      %p194 = scmp.eq.s32.totalorder %s28, 0
      %p195 = por %p193, %p194
      %p196 = scmp.ne.s32.totalorder %s188, %s190
      %p197 = scmp.eq.s32.totalorder %s33, 1
      %p198 = por %p196, %p197
      %p199 = scmp.ne.s32.totalorder %s190, %s191
      %p200 = scmp.eq.s32.totalorder %s33, 0
      %p201 = por %p199, %p200
      %p202 = scmp.ne.s32.totalorder %s190, %s191
      %p203 = scmp.eq.s32.totalorder %s34, 1
      %p204 = por %p202, %p203
      %p206 = scmp.ne.s32.totalorder %s191, %s205
      %p207 = scmp.eq.s32.totalorder %s34, 0
      %p208 = por %p206, %p207
      %s210 = sadd.s32 %s209, 1
      %p213 = scmp.eq.s32.totalorder %s28, 1
      %p214 = scmp.ne.s32.totalorder %s209, %s211
      %p215 = scmp.eq.s32.totalorder %s28, 0
      %p216 = por %p214, %p215
      %p217 = scmp.ne.s32.totalorder %s209, %s211
      %p218 = scmp.eq.s32.totalorder %s33, 1
      %p219 = por %p217, %p218
      %p220 = scmp.ne.s32.totalorder %s211, %s212
      %p221 = scmp.eq.s32.totalorder %s33, 0
      %p222 = por %p220, %p221
      %p223 = scmp.ne.s32.totalorder %s211, %s212
      %p224 = scmp.eq.s32.totalorder %s34, 1
      %p225 = por %p223, %p224
      %p227 = scmp.ne.s32.totalorder %s212, %s226
      %p228 = scmp.eq.s32.totalorder %s34, 0
      %p229 = por %p227, %p228
      %s231 = sadd.s32 %s230, 1
      %p234 = scmp.eq.s32.totalorder %s28, 1
      %p235 = scmp.ne.s32.totalorder %s230, %s232
      %p236 = scmp.eq.s32.totalorder %s28, 0
      %p237 = por %p235, %p236
      %p238 = scmp.ne.s32.totalorder %s230, %s232
      %p239 = scmp.eq.s32.totalorder %s33, 1
      %p240 = por %p238, %p239
      %p241 = scmp.ne.s32.totalorder %s232, %s233
      %p242 = scmp.eq.s32.totalorder %s33, 0
      %p243 = por %p241, %p242
      %p244 = scmp.ne.s32.totalorder %s232, %s233
      %p245 = scmp.eq.s32.totalorder %s34, 1
      %p246 = por %p244, %p245
      %p248 = scmp.ne.s32.totalorder %s233, %s247
      %p249 = scmp.eq.s32.totalorder %s34, 0
      %p250 = por %p248, %p249
      %s252 = sadd.s32 %s251, 1
      %p255 = scmp.eq.s32.totalorder %s28, 1
      %p256 = scmp.ne.s32.totalorder %s251, %s253
      %p257 = scmp.eq.s32.totalorder %s28, 0
      %p258 = por %p256, %p257
      %p259 = scmp.ne.s32.totalorder %s251, %s253
      %p260 = scmp.eq.s32.totalorder %s33, 1
      %p261 = por %p259, %p260
      %p262 = scmp.ne.s32.totalorder %s253, %s254
      %p263 = scmp.eq.s32.totalorder %s33, 0
      %p264 = por %p262, %p263
      %p265 = scmp.ne.s32.totalorder %s253, %s254
      %p266 = scmp.eq.s32.totalorder %s34, 1
      %p267 = por %p265, %p266
      %p269 = scmp.ne.s32.totalorder %s254, %s268
      %p270 = scmp.eq.s32.totalorder %s34, 0
      %p271 = por %p269, %p270
      %s273 = sadd.s32 %s272, 1
      %p276 = scmp.eq.s32.totalorder %s28, 1
      %p277 = scmp.ne.s32.totalorder %s272, %s274
      %p278 = scmp.eq.s32.totalorder %s28, 0
      %p279 = por %p277, %p278
      %p280 = scmp.ne.s32.totalorder %s272, %s274
      %p281 = scmp.eq.s32.totalorder %s33, 1
      %p282 = por %p280, %p281
      %p283 = scmp.ne.s32.totalorder %s274, %s275
      %p284 = scmp.eq.s32.totalorder %s33, 0
      %p285 = por %p283, %p284
      %p286 = scmp.ne.s32.totalorder %s274, %s275
      %p287 = scmp.eq.s32.totalorder %s34, 1
      %p288 = por %p286, %p287
      %p290 = scmp.ne.s32.totalorder %s275, %s289
      %p291 = scmp.eq.s32.totalorder %s34, 0
      %p292 = por %p290, %p291
      %s294 = sadd.s32 %s293, 1
      %p297 = scmp.eq.s32.totalorder %s28, 1
      %p298 = scmp.ne.s32.totalorder %s293, %s295
      %p299 = scmp.eq.s32.totalorder %s28, 0
      %p300 = por %p298, %p299
      %p301 = scmp.ne.s32.totalorder %s293, %s295
      %p302 = scmp.eq.s32.totalorder %s33, 1
      %p303 = por %p301, %p302
      %p304 = scmp.ne.s32.totalorder %s295, %s296
      %p305 = scmp.eq.s32.totalorder %s33, 0
      %p306 = por %p304, %p305
      %p307 = scmp.ne.s32.totalorder %s295, %s296
      %p308 = scmp.eq.s32.totalorder %s34, 1
      %p309 = por %p307, %p308
      %p311 = scmp.ne.s32.totalorder %s296, %s310
      %p312 = scmp.eq.s32.totalorder %s34, 0
      %p313 = por %p311, %p312
      %s314 = ssub.s32 %s28, %s35
      %p315 = scmp.eq.s32.totalorder %s314, 0
      %s317 = sadd.s32 %s316, 1
      %s318 = scalar_select %p315, %s316, %s317
      %p321 = pneg %p315
      %p322 = scmp.eq.s32.totalorder %s28, 1
      %p323 = por %p321, %p322
      %p324 = scmp.ne.s32.totalorder %s316, %s319
      %p325 = scmp.eq.s32.totalorder %s28, 0
      %p326 = por %p324, %p325
      %p327 = scmp.ne.s32.totalorder %s316, %s319
      %p328 = scmp.eq.s32.totalorder %s33, 1
      %p329 = por %p327, %p328
      %p330 = scmp.ne.s32.totalorder %s319, %s320
      %p331 = scmp.eq.s32.totalorder %s33, 0
      %p332 = por %p330, %p331
      %p333 = scmp.ne.s32.totalorder %s319, %s320
      %p334 = scmp.eq.s32.totalorder %s34, 1
      %p335 = por %p333, %p334
      %p337 = scmp.ne.s32.totalorder %s320, %s336
      %p338 = scmp.eq.s32.totalorder %s34, 0
      %p339 = por %p337, %p338
      %p340 = scmp.le.s32.totalorder 1, %s28
      %p341 = scmp.lt.s32.totalorder %s28, 3
      %p342 = pnand %p340, %p341
      %p343 = pneg %p342
      // Predicated region
      $region9: #{card_attention_forward.1} parent=5 // pred_check
        _
      $region10: #{card_attention_forward.1} parent=5 // pred_check_branch
        %345 = sbr.rel (%p342) target = $region12
      $region11: #{card_attention_forward.1} parent=5 // pred_region
        %s346 = ssub.s32 %s28, 1
        // Predicated region
        $region13: #{card_attention_forward.1} parent=11 // pred_check
          %p347 = pneg %p75
        $region14: #{card_attention_forward.1} parent=11 // pred_check_branch
          %349 = sbr.rel (%p347) target = $region16
        $region15: #{card_attention_forward.1} parent=11 // pred_region
          %s351 = ssub.s32 768, 768
          %352 = vsyncadd [#allocation3], %s351
          %s353 = sshll.u32 [#allocation2], 4
          %s354 = int_to_ptr.vmem [resolvable:$true] %s353
          %359 = dma.hbm_to_vmem [thread:$0]  %s1, 768, %s354, [#allocation3], 64, 64, 4
        $region16: #{card_attention_forward.1} parent=11 // pred_fallthru
          _
        // Predicated region
        $region17: #{card_attention_forward.1} parent=11 // pred_check
          %p360 = pneg %p96
        $region18: #{card_attention_forward.1} parent=11 // pred_check_branch
          %362 = sbr.rel (%p360) target = $region20
        $region19: #{card_attention_forward.1} parent=11 // pred_region
          _
        $region20: #{card_attention_forward.1} parent=11 // pred_fallthru
          _
        // Predicated region
        $region21: #{card_attention_forward.1} parent=11 // pred_check
          %p363 = pneg %p117
        $region22: #{card_attention_forward.1} parent=11 // pred_check_branch
          %365 = sbr.rel (%p363) target = $region24
        $region23: #{card_attention_forward.1} parent=11 // pred_region
          %s367 = ssub.s32 64, 64
          %368 = vsyncadd [#allocation6], %s367
          %s370 = sshll.u32 [#allocation5], 4
          %s371 = int_to_ptr.vmem [resolvable:$true] %s370
          %373 = dma.hbm_to_vmem [thread:$0]  %s3, 64, %s371, [#allocation6]
        $region24: #{card_attention_forward.1} parent=11 // pred_fallthru
          _
        // Predicated region
        $region25: #{card_attention_forward.1} parent=11 // pred_check
          %p374 = pneg %p138
        $region26: #{card_attention_forward.1} parent=11 // pred_check_branch
          %376 = sbr.rel (%p374) target = $region28
        $region27: #{card_attention_forward.1} parent=11 // pred_region
          %s378 = ssub.s32 512, 512
          %379 = vsyncadd [#allocation6], %s378
          %s380 = sshll.u32 [#allocation7], 4
          %s381 = int_to_ptr.vmem [resolvable:$true] %s380
          %386 = dma.hbm_to_vmem [thread:$0]  %s4, 512, %s381, [#allocation6], 64, 64, 4
        $region28: #{card_attention_forward.1} parent=11 // pred_fallthru
          _
        // Predicated region
        $region29: #{card_attention_forward.1} parent=11 // pred_check
          %p387 = pneg %p159
        $region30: #{card_attention_forward.1} parent=11 // pred_check_branch
          %389 = sbr.rel (%p387) target = $region32
        $region31: #{card_attention_forward.1} parent=11 // pred_region
          %s391 = ssub.s32 32, 32
          %392 = vsyncadd [#allocation9], %s391
          %s394 = sshll.u32 [#allocation8], 4
          %s395 = int_to_ptr.vmem [resolvable:$true] %s394
          %397 = dma.hbm_to_vmem [thread:$0]  %s5, 32, %s395, [#allocation9]
        $region32: #{card_attention_forward.1} parent=11 // pred_fallthru
          _
        // Predicated region
        $region33: #{card_attention_forward.1} parent=11 // pred_check
          %p398 = pneg %p180
        $region34: #{card_attention_forward.1} parent=11 // pred_check_branch
          %400 = sbr.rel (%p398) target = $region36
        $region35: #{card_attention_forward.1} parent=11 // pred_region
          _
        $region36: #{card_attention_forward.1} parent=11 // pred_fallthru
          _
        // Predicated region
        $region37: #{card_attention_forward.1} parent=11 // pred_check
          %p401 = pneg %p201
        $region38: #{card_attention_forward.1} parent=11 // pred_check_branch
          %403 = sbr.rel (%p401) target = $region40
        $region39: #{card_attention_forward.1} parent=11 // pred_region
          %s405 = ssub.s32 64, 64
          %406 = vsyncadd [#allocation9], %s405
          %s408 = sshll.u32 [#allocation10], 4
          %s409 = int_to_ptr.vmem [resolvable:$true] %s408
          %411 = dma.hbm_to_vmem [thread:$0]  %s7, 64, %s409, [#allocation9]
        $region40: #{card_attention_forward.1} parent=11 // pred_fallthru
          _
        // Predicated region
        $region41: #{card_attention_forward.1} parent=11 // pred_check
          %p412 = pneg %p222
        $region42: #{card_attention_forward.1} parent=11 // pred_check_branch
          %414 = sbr.rel (%p412) target = $region44
        $region43: #{card_attention_forward.1} parent=11 // pred_region
          %s416 = ssub.s32 512, 512
          %417 = vsyncadd [#allocation12], %s416
          %s418 = sshll.u32 [#allocation11], 4
          %s419 = int_to_ptr.vmem [resolvable:$true] %s418
          %424 = dma.hbm_to_vmem [thread:$0]  %s8, 512, %s419, [#allocation12], 128, 128, 8
        $region44: #{card_attention_forward.1} parent=11 // pred_fallthru
          _
        // Predicated region
        $region45: #{card_attention_forward.1} parent=11 // pred_check
          %p425 = pneg %p243
        $region46: #{card_attention_forward.1} parent=11 // pred_check_branch
          %427 = sbr.rel (%p425) target = $region48
        $region47: #{card_attention_forward.1} parent=11 // pred_region
          %s429 = ssub.s32 512, 512
          %430 = vsyncadd [#allocation12], %s429
          %s431 = sshll.u32 [#allocation13], 4
          %s432 = int_to_ptr.vmem [resolvable:$true] %s431
          %437 = dma.hbm_to_vmem [thread:$0]  %s9, 512, %s432, [#allocation12], 128, 128, 8
        $region48: #{card_attention_forward.1} parent=11 // pred_fallthru
          _
        // Predicated region
        $region49: #{card_attention_forward.1} parent=11 // pred_check
          %p438 = pneg %p264
        $region50: #{card_attention_forward.1} parent=11 // pred_check_branch
          %440 = sbr.rel (%p438) target = $region52
        $region51: #{card_attention_forward.1} parent=11 // pred_region
          %s442 = ssub.s32 64, 64
          %443 = vsyncadd [#allocation15], %s442
          %s444 = sshll.u32 [#allocation14], 4
          %s445 = int_to_ptr.vmem [resolvable:$true] %s444
          %450 = dma.hbm_to_vmem [thread:$0]  %s10, 64, %s445, [#allocation15], 16, 16, 1
        $region52: #{card_attention_forward.1} parent=11 // pred_fallthru
          _
        // Predicated region
        $region53: #{card_attention_forward.1} parent=11 // pred_check
          %p451 = pneg %p285
        $region54: #{card_attention_forward.1} parent=11 // pred_check_branch
          %453 = sbr.rel (%p451) target = $region56
        $region55: #{card_attention_forward.1} parent=11 // pred_region
          %s455 = ssub.s32 64, 64
          %456 = vsyncadd [#allocation15], %s455
          %s457 = sshll.u32 [#allocation16], 4
          %s458 = int_to_ptr.vmem [resolvable:$true] %s457
          %463 = dma.hbm_to_vmem [thread:$0]  %s11, 64, %s458, [#allocation15], 16, 16, 1
        $region56: #{card_attention_forward.1} parent=11 // pred_fallthru
          _
        // Predicated region
        $region57: #{card_attention_forward.1} parent=11 // pred_check
          %p464 = pneg %p306
        $region58: #{card_attention_forward.1} parent=11 // pred_check_branch
          %466 = sbr.rel (%p464) target = $region60
        $region59: #{card_attention_forward.1} parent=11 // pred_region
          %s468 = ssub.s32 128, 128
          %469 = vsyncadd [#allocation18], %s468
          %s471 = sshll.u32 [#allocation17], 4
          %s472 = int_to_ptr.vmem [resolvable:$true] %s471
          %474 = dma.hbm_to_vmem [thread:$0]  %s12, 128, %s472, [#allocation18]
        $region60: #{card_attention_forward.1} parent=11 // pred_fallthru
          _
      $region12: #{card_attention_forward.1} parent=5 // pred_fallthru
        _
      %p475 = scmp.lt.s32.totalorder %s28, 2
      // Predicated region
      $region61: #{card_attention_forward.1} parent=5 // pred_check
        %p476 = pneg %p475
      $region62: #{card_attention_forward.1} parent=5 // pred_check_branch
        %478 = sbr.rel (%p476) target = $region64
      $region63: #{card_attention_forward.1} parent=5 // pred_region
        // Predicated region
        $region65: #{card_attention_forward.1} parent=63 // pred_check
          %p479 = pneg %p48
        $region66: #{card_attention_forward.1} parent=63 // pred_check_branch
          %481 = sbr.rel (%p479) target = $region68
        $region67: #{card_attention_forward.1} parent=63 // pred_region
          %s482 = smul.u32 4, %s28
          %p483 = scmp.lt.s32.totalorder %s482, 7
          %s484 = scalar_select %p483, %s482, 7
          %s485 = smul.addr %s484, 8
          %s486 = scalar_lea.vmem %s0, %s485
          %s487 = smul.u32 4, %s28
        $region68: #{card_attention_forward.1} parent=63 // pred_fallthru
          _
      $region64: #{card_attention_forward.1} parent=5 // pred_fallthru
        _
      %p488 = scmp.le.s32.totalorder 1, %s28
      %p489 = scmp.lt.s32.totalorder %s28, 3
      %p490 = pnand %p488, %p489
      %p491 = pneg %p490
      // Predicated region
      $region69: #{card_attention_forward.1} parent=5 // pred_check
        _
      $region70: #{card_attention_forward.1} parent=5 // pred_check_branch
        %493 = sbr.rel (%p490) target = $region72
      $region71: #{card_attention_forward.1} parent=5 // pred_region
        %s494 = ssub.s32 %s28, 1
        // Predicated region
        $region73: #{card_attention_forward.1} parent=71 // pred_check
          %p495 = pneg %p75
        $region74: #{card_attention_forward.1} parent=71 // pred_check_branch
          %497 = sbr.rel (%p495) target = $region76
        $region75: #{card_attention_forward.1} parent=71 // pred_region
          %498 = dma.done [#allocation3], 768
        $region76: #{card_attention_forward.1} parent=71 // pred_fallthru
          _
        // Predicated region
        $region77: #{card_attention_forward.1} parent=71 // pred_check
          %p499 = pneg %p117
        $region78: #{card_attention_forward.1} parent=71 // pred_check_branch
          %501 = sbr.rel (%p499) target = $region80
        $region79: #{card_attention_forward.1} parent=71 // pred_region
          %502 = dma.done [#allocation6], 64
        $region80: #{card_attention_forward.1} parent=71 // pred_fallthru
          _
        // Predicated region
        $region81: #{card_attention_forward.1} parent=71 // pred_check
          %p503 = pneg %p138
        $region82: #{card_attention_forward.1} parent=71 // pred_check_branch
          %505 = sbr.rel (%p503) target = $region84
        $region83: #{card_attention_forward.1} parent=71 // pred_region
          %506 = dma.done [#allocation6], 512
        $region84: #{card_attention_forward.1} parent=71 // pred_fallthru
          _
        // Predicated region
        $region85: #{card_attention_forward.1} parent=71 // pred_check
          %p507 = pneg %p159
        $region86: #{card_attention_forward.1} parent=71 // pred_check_branch
          %509 = sbr.rel (%p507) target = $region88
        $region87: #{card_attention_forward.1} parent=71 // pred_region
          %510 = dma.done [#allocation9], 32
        $region88: #{card_attention_forward.1} parent=71 // pred_fallthru
          _
        // Predicated region
        $region89: #{card_attention_forward.1} parent=71 // pred_check
          %p511 = pneg %p201
        $region90: #{card_attention_forward.1} parent=71 // pred_check_branch
          %513 = sbr.rel (%p511) target = $region92
        $region91: #{card_attention_forward.1} parent=71 // pred_region
          %514 = dma.done [#allocation9], 64
        $region92: #{card_attention_forward.1} parent=71 // pred_fallthru
          _
        // Predicated region
        $region93: #{card_attention_forward.1} parent=71 // pred_check
          %p515 = pneg %p222
        $region94: #{card_attention_forward.1} parent=71 // pred_check_branch
          %517 = sbr.rel (%p515) target = $region96
        $region95: #{card_attention_forward.1} parent=71 // pred_region
          %518 = dma.done [#allocation12], 512
        $region96: #{card_attention_forward.1} parent=71 // pred_fallthru
          _
        // Predicated region
        $region97: #{card_attention_forward.1} parent=71 // pred_check
          %p519 = pneg %p243
        $region98: #{card_attention_forward.1} parent=71 // pred_check_branch
          %521 = sbr.rel (%p519) target = $region100
        $region99: #{card_attention_forward.1} parent=71 // pred_region
          %522 = dma.done [#allocation12], 512
        $region100: #{card_attention_forward.1} parent=71 // pred_fallthru
          _
        // Predicated region
        $region101: #{card_attention_forward.1} parent=71 // pred_check
          %p523 = pneg %p264
        $region102: #{card_attention_forward.1} parent=71 // pred_check_branch
          %525 = sbr.rel (%p523) target = $region104
        $region103: #{card_attention_forward.1} parent=71 // pred_region
          %526 = dma.done [#allocation15], 64
        $region104: #{card_attention_forward.1} parent=71 // pred_fallthru
          _
        // Predicated region
        $region105: #{card_attention_forward.1} parent=71 // pred_check
          %p527 = pneg %p285
        $region106: #{card_attention_forward.1} parent=71 // pred_check_branch
          %529 = sbr.rel (%p527) target = $region108
        $region107: #{card_attention_forward.1} parent=71 // pred_region
          %530 = dma.done [#allocation15], 64
        $region108: #{card_attention_forward.1} parent=71 // pred_fallthru
          _
        // Predicated region
        $region109: #{card_attention_forward.1} parent=71 // pred_check
          %p531 = pneg %p306
        $region110: #{card_attention_forward.1} parent=71 // pred_check_branch
          %533 = sbr.rel (%p531) target = $region112
        $region111: #{card_attention_forward.1} parent=71 // pred_region
          %534 = dma.done [#allocation18], 128
        $region112: #{card_attention_forward.1} parent=71 // pred_fallthru
          _
        %s535 = smul.u32 4, %s33
        %p536 = scmp.lt.s32.totalorder %s535, 7
        %s537 = scalar_select %p536, %s535, 7
        %s538 = smul.addr %s537, 8
        %s539 = scalar_lea.vmem %s0, %s538
        %p540 = pneg %p54
        %p541 = pneg %p51
        %p542 = pneg %p75
        %p543 = pneg %p72
        %p544 = pneg %p96
        %p545 = pneg %p93
        %p546 = pneg %p117
        %p547 = pneg %p114
        %p548 = pneg %p138
        %p549 = pneg %p135
        %p550 = pneg %p159
        %p551 = pneg %p156
        %p552 = pneg %p180
        %p553 = pneg %p177
        %p554 = pneg %p201
        %p555 = pneg %p198
        %p556 = pneg %p222
        %p557 = pneg %p219
        %p558 = pneg %p243
        %p559 = pneg %p240
        %p560 = pneg %p264
        %p561 = pneg %p261
        %p562 = pneg %p285
        %p563 = pneg %p282
        %p564 = pneg %p306
        %p565 = pneg %p303
        %p566 = pneg %p332
        %p567 = pneg %p329
        %s568 = sand.u32 %s319, 1
        %s569 = scalar_lea.sflag [#allocation4], %s568
        %s570 = sand.u32 %s319, 1
        %s571 = smul.addr %s570, 32
        %s572 = scalar_lea.vmem [#allocation19], %s571
        %s573 = smul.u32 4, %s33
        %p574 = scmp.lt.s32.totalorder %s573, 7
        %s575 = scalar_select %p574, %s573, 7
        %s576 = smul.addr %s575, 8
        %s577 = scalar_lea.vmem %s0, %s576
        %s578 = smul.u32 4, %s33
        %s579 = smul.u32 4, %s33
        %v581 = vld [vmem:[%s577] sm:$0xff]
        %v582 = vld [vmem:[%s577 + $0x8] sm:$0xff]
        %v583 = vld [vmem:[%s577 + $0x10] sm:$0xff]
        %v584 = vld [vmem:[%s577 + $0x18] sm:$0xff]
        %v585 = vpack.c.bf16 %v582, %v581
        %v586 = vpack.c.bf16 %v584, %v583
        %v587 = vld [vmem:[#allocation5] sm:$0x7]
        %v588 = vld [vmem:[%s2] sm:$0xf]
        %v589 = vld [vmem:[%s2 + $0x4] sm:$0xf]
        %v590 = vld [vmem:[%s2 + $0x8] sm:$0xf]
        %v591 = vld [vmem:[%s2 + $0xc] sm:$0xf]
        %v592 = vlaneseq
        %v593 = vshrl.u32 %v592, 7
        %v594 = vsub.s32 0, %v593
        %v595 = vrot.slane %v587, %v594
        %v600 = vunpack.c.l.b16 %v588
        %v601 = vunpack.c.l.b16 %v589
        %v602 = vunpack.c.l.b16 %v590
        %v603 = vunpack.c.l.b16 %v591
        %v604 = vpack.c.b16 %v601, %v600
        %v605 = vpack.c.b16 %v603, %v602
        %vm608 = vcmask 261120
        %v610 = vsel %vm608, %v585, 0
        %v613 = vsel %vm608, %v586, 0
        %615 = vmatprep.subr.bf16.mxu0 0
        %616 = vmatpush1.bf16.msra.mxu0 0
        %617 = vmatprep.subr.bf16.mxu0 0
        %618 = vmatpush1.bf16.msra.mxu0 0
        %619 = vmatprep.subr.bf16.mxu0 0
        %620 = vmatpush1.bf16.msra.mxu0 0
        %621 = vmatprep.subr.bf16.mxu0 0
        %622 = vmatpush1.bf16.msra.mxu0 0
        %623 = vmatprep.subr.bf16.mxu0 0
        %624 = vmatpush1.bf16.msra.mxu0 0
        %625 = vmatprep.subr.bf16.mxu0 0
        %626 = vmatpush1.bf16.msra.mxu0 0
        %627 = vmatprep.subr.bf16.mxu0 0
        %628 = vmatpush1.bf16.msra.mxu0 %v605
        %629 = vmatprep.subr.bf16.mxu0 0
        %630 = vmatpush1.bf16.msra.mxu0 %v604
        %631 = vmatprep.subr.bf16.mxu0 0
        %632 = vmatpush2.bf16.msra.mxu0 0
        %633 = vmatprep.subr.bf16.mxu0 0
        %634 = vmatpush2.bf16.msra.mxu0 0
        %635 = vmatprep.subr.bf16.mxu0 0
        %636 = vmatpush2.bf16.msra.mxu0 0
        %637 = vmatprep.subr.bf16.mxu0 0
        %638 = vmatpush2.bf16.msra.mxu0 0
        %639 = vmatprep.subr.bf16.mxu0 0
        %640 = vmatpush2.bf16.msra.mxu0 0
        %641 = vmatprep.subr.bf16.mxu0 0
        %642 = vmatpush2.bf16.msra.mxu0 0
        %643 = vmatprep.subr.bf16.mxu0 0
        %644 = vmatpush2.bf16.msra.mxu0 0
        %645 = vmatprep.subr.bf16.mxu0 0
        %646 = vmatpush2.bf16.msra.mxu0 0
        %647 = vmatprep.mubr.bf16.mxu0 0
        %648 = vmatmul.mubr.bf16.gmra.mxu0 %v610
        %v649 = vpop.f32.mrf.mxu0
        %v650 = vadd.f32 %v595, %v649
        %v651 = vpop.f32.mrf.mxu0
        %v652 = vpop.f32.mrf.mxu0
        %v653 = vadd.f32 %v595, %v652
        %v654 = vpop.f32.mrf.mxu0
        %655 = vmatprep.mubr.bf16.mxu0 0
        %656 = vmatmul.mubr.bf16.gmra.mxu0 %v613
        %v657 = vpop.f32.mrf.mxu0
        %v658 = vadd.f32 %v595, %v657
        %v659 = vpop.f32.mrf.mxu0
        %v660 = vpop.f32.mrf.mxu0
        %v661 = vadd.f32 %v595, %v660
        %v662 = vpop.f32.mrf.mxu0
        %663 = vdwg.mxu0
        %s664 = scalar_lea.vmem %s2, 16
        %v665 = vld [vmem:[%s664] sm:$0xf]
        %v666 = vld [vmem:[%s664 + $0x4] sm:$0xf]
        %v667 = vld [vmem:[%s664 + $0x8] sm:$0xf]
        %v668 = vld [vmem:[%s664 + $0xc] sm:$0xf]
        %v669 = vlaneseq
        %v670 = vshrl.u32 %v669, 7
        %v671 = vsub.s32 1, %v670
        %v672 = vrot.slane %v587, %v671
        %v677 = vunpack.c.l.b16 %v665
        %v678 = vunpack.c.l.b16 %v666
        %v679 = vunpack.c.l.b16 %v667
        %v680 = vunpack.c.l.b16 %v668
        %v681 = vpack.c.b16 %v678, %v677
        %v682 = vpack.c.b16 %v680, %v679
        %685 = vmatprep.subr.bf16.mxu0 0
        %686 = vmatpush1.bf16.msra.mxu0 0
        %687 = vmatprep.subr.bf16.mxu0 0
        %688 = vmatpush1.bf16.msra.mxu0 0
        %689 = vmatprep.subr.bf16.mxu0 0
        %690 = vmatpush1.bf16.msra.mxu0 0
        %691 = vmatprep.subr.bf16.mxu0 0
        %692 = vmatpush1.bf16.msra.mxu0 0
        %693 = vmatprep.subr.bf16.mxu0 0
        %694 = vmatpush1.bf16.msra.mxu0 0
        %695 = vmatprep.subr.bf16.mxu0 0
        %696 = vmatpush1.bf16.msra.mxu0 0
        %697 = vmatprep.subr.bf16.mxu0 0
        %698 = vmatpush1.bf16.msra.mxu0 %v682
        %699 = vmatprep.subr.bf16.mxu0 0
        %700 = vmatpush1.bf16.msra.mxu0 %v681
        %701 = vmatprep.subr.bf16.mxu0 0
        %702 = vmatpush2.bf16.msra.mxu0 0
        %703 = vmatprep.subr.bf16.mxu0 0
        %704 = vmatpush2.bf16.msra.mxu0 0
        %705 = vmatprep.subr.bf16.mxu0 0
        %706 = vmatpush2.bf16.msra.mxu0 0
        %707 = vmatprep.subr.bf16.mxu0 0
        %708 = vmatpush2.bf16.msra.mxu0 0
        %709 = vmatprep.subr.bf16.mxu0 0
        %710 = vmatpush2.bf16.msra.mxu0 0
        %711 = vmatprep.subr.bf16.mxu0 0
        %712 = vmatpush2.bf16.msra.mxu0 0
        %713 = vmatprep.subr.bf16.mxu0 0
        %714 = vmatpush2.bf16.msra.mxu0 0
        %715 = vmatprep.subr.bf16.mxu0 0
        %716 = vmatpush2.bf16.msra.mxu0 0
        %717 = vmatprep.mubr.bf16.mxu0 0
        %718 = vmatmul.mubr.bf16.gmra.mxu0 %v610
        %v719 = vpop.f32.mrf.mxu0
        %v720 = vadd.f32 %v672, %v719
        %v721 = vpop.f32.mrf.mxu0
        %v722 = vpop.f32.mrf.mxu0
        %v723 = vadd.f32 %v672, %v722
        %v724 = vpop.f32.mrf.mxu0
        %725 = vmatprep.mubr.bf16.mxu0 0
        %726 = vmatmul.mubr.bf16.gmra.mxu0 %v613
        %v727 = vpop.f32.mrf.mxu0
        %v728 = vadd.f32 %v672, %v727
        %v729 = vpop.f32.mrf.mxu0
        %v730 = vpop.f32.mrf.mxu0
        %v731 = vadd.f32 %v672, %v730
        %v732 = vpop.f32.mrf.mxu0
        %733 = vdwg.mxu0
        %s734 = scalar_lea.vmem %s2, 32
        %v735 = vld [vmem:[%s734] sm:$0xf]
        %v736 = vld [vmem:[%s734 + $0x4] sm:$0xf]
        %v737 = vld [vmem:[%s734 + $0x8] sm:$0xf]
        %v738 = vld [vmem:[%s734 + $0xc] sm:$0xf]
        %v739 = vlaneseq
        %v740 = vshrl.u32 %v739, 7
        %v741 = vsub.s32 2, %v740
        %v742 = vrot.slane %v587, %v741
        %v747 = vunpack.c.l.b16 %v735
        %v748 = vunpack.c.l.b16 %v736
        %v749 = vunpack.c.l.b16 %v737
        %v750 = vunpack.c.l.b16 %v738
        %v751 = vpack.c.b16 %v748, %v747
        %v752 = vpack.c.b16 %v750, %v749
        %755 = vmatprep.subr.bf16.mxu0 0
        %756 = vmatpush1.bf16.msra.mxu0 0
        %757 = vmatprep.subr.bf16.mxu0 0
        %758 = vmatpush1.bf16.msra.mxu0 0
        %759 = vmatprep.subr.bf16.mxu0 0
        %760 = vmatpush1.bf16.msra.mxu0 0
        %761 = vmatprep.subr.bf16.mxu0 0
        %762 = vmatpush1.bf16.msra.mxu0 0
        %763 = vmatprep.subr.bf16.mxu0 0
        %764 = vmatpush1.bf16.msra.mxu0 0
        %765 = vmatprep.subr.bf16.mxu0 0
        %766 = vmatpush1.bf16.msra.mxu0 0
        %767 = vmatprep.subr.bf16.mxu0 0
        %768 = vmatpush1.bf16.msra.mxu0 %v752
        %769 = vmatprep.subr.bf16.mxu0 0
        %770 = vmatpush1.bf16.msra.mxu0 %v751
        %771 = vmatprep.subr.bf16.mxu0 0
        %772 = vmatpush2.bf16.msra.mxu0 0
        %773 = vmatprep.subr.bf16.mxu0 0
        %774 = vmatpush2.bf16.msra.mxu0 0
        %775 = vmatprep.subr.bf16.mxu0 0
        %776 = vmatpush2.bf16.msra.mxu0 0
        %777 = vmatprep.subr.bf16.mxu0 0
        %778 = vmatpush2.bf16.msra.mxu0 0
        %779 = vmatprep.subr.bf16.mxu0 0
        %780 = vmatpush2.bf16.msra.mxu0 0
        %781 = vmatprep.subr.bf16.mxu0 0
        %782 = vmatpush2.bf16.msra.mxu0 0
        %783 = vmatprep.subr.bf16.mxu0 0
        %784 = vmatpush2.bf16.msra.mxu0 0
        %785 = vmatprep.subr.bf16.mxu0 0
        %786 = vmatpush2.bf16.msra.mxu0 0
        %787 = vmatprep.mubr.bf16.mxu0 0
        %788 = vmatmul.mubr.bf16.gmra.mxu0 %v610
        %v789 = vpop.f32.mrf.mxu0
        %v790 = vadd.f32 %v742, %v789
        %v791 = vpop.f32.mrf.mxu0
        %v792 = vpop.f32.mrf.mxu0
        %v793 = vadd.f32 %v742, %v792
        %v794 = vpop.f32.mrf.mxu0
        %795 = vmatprep.mubr.bf16.mxu0 0
        %796 = vmatmul.mubr.bf16.gmra.mxu0 %v613
        %v797 = vpop.f32.mrf.mxu0
        %v798 = vadd.f32 %v742, %v797
        %v799 = vpop.f32.mrf.mxu0
        %v800 = vpop.f32.mrf.mxu0
        %v801 = vadd.f32 %v742, %v800
        %v802 = vpop.f32.mrf.mxu0
        %803 = vdwg.mxu0
        %v804 = vpack.c.bf16 %v653, %v650
        %v805 = vpack.c.bf16 %v661, %v658
        %v806 = vpack.c.bf16 %v723, %v720
        %v807 = vpack.c.bf16 %v731, %v728
        %v808 = vpack.c.bf16 %v793, %v790
        %v809 = vpack.c.bf16 %v801, %v798
        %v810 = vld [vmem:[#allocation2] sm:$0xf]
        %v811 = vld [vmem:[#allocation2 + $0x4] sm:$0xf]
        %v812 = vld [vmem:[#allocation2 + $0x8] sm:$0xf]
        %v813 = vld [vmem:[#allocation2 + $0xc] sm:$0xf]
        %v818 = vunpack.c.l.b16 %v810
        %v819 = vunpack.c.l.b16 %v811
        %v820 = vunpack.c.l.b16 %v812
        %v821 = vunpack.c.l.b16 %v813
        %v822 = vpack.c.b16 %v819, %v818
        %v823 = vpack.c.b16 %v821, %v820
        %v825 = vsel %vm608, %v822, 0
        %v828 = vsel %vm608, %v823, 0
        %830 = vmatprep.subr.bf16.mxu0 0
        %831 = vmatpush1.bf16.msra.mxu0 0
        %832 = vmatprep.subr.bf16.mxu0 0
        %833 = vmatpush1.bf16.msra.mxu0 0
        %834 = vmatprep.subr.bf16.mxu0 0
        %835 = vmatpush1.bf16.msra.mxu0 0
        %836 = vmatprep.subr.bf16.mxu0 0
        %837 = vmatpush1.bf16.msra.mxu0 0
        %838 = vmatprep.subr.bf16.mxu0 0
        %839 = vmatpush1.bf16.msra.mxu0 0
        %840 = vmatprep.subr.bf16.mxu0 0
        %841 = vmatpush1.bf16.msra.mxu0 0
        %842 = vmatprep.subr.bf16.mxu0 0
        %843 = vmatpush1.bf16.msra.mxu0 %v805
        %844 = vmatprep.subr.bf16.mxu0 0
        %845 = vmatpush1.bf16.msra.mxu0 %v804
        %846 = vmatprep.subr.bf16.mxu0 0
        %847 = vmatpush2.bf16.msra.mxu0 0
        %848 = vmatprep.subr.bf16.mxu0 0
        %849 = vmatpush2.bf16.msra.mxu0 0
        %850 = vmatprep.subr.bf16.mxu0 0
        %851 = vmatpush2.bf16.msra.mxu0 0
        %852 = vmatprep.subr.bf16.mxu0 0
        %853 = vmatpush2.bf16.msra.mxu0 0
        %854 = vmatprep.subr.bf16.mxu0 0
        %855 = vmatpush2.bf16.msra.mxu0 0
        %856 = vmatprep.subr.bf16.mxu0 0
        %857 = vmatpush2.bf16.msra.mxu0 0
        %858 = vmatprep.subr.bf16.mxu0 0
        %859 = vmatpush2.bf16.msra.mxu0 0
        %860 = vmatprep.subr.bf16.mxu0 0
        %861 = vmatpush2.bf16.msra.mxu0 0
        %862 = vmatprep.mubr.bf16.mxu0 0
        %863 = vmatmul.mubr.bf16.gmra.mxu0 %v825
        %v864 = vpop.f32.mrf.mxu0
        %v865 = vadd.f32 0.0, %v864
        %v866 = vpop.f32.mrf.mxu0
        %v867 = vpop.f32.mrf.mxu0
        %v868 = vadd.f32 0.0, %v867
        %v869 = vpop.f32.mrf.mxu0
        %870 = vmatprep.mubr.bf16.mxu0 0
        %871 = vmatmul.mubr.bf16.gmra.mxu0 %v828
        %v872 = vpop.f32.mrf.mxu0
        %v873 = vadd.f32 0.0, %v872
        %v874 = vpop.f32.mrf.mxu0
        %v875 = vpop.f32.mrf.mxu0
        %v876 = vadd.f32 0.0, %v875
        %v877 = vpop.f32.mrf.mxu0
        %878 = vdwg.mxu0
        %s879 = scalar_lea.vmem [#allocation2], 16
        %v880 = vld [vmem:[%s879] sm:$0xf]
        %v881 = vld [vmem:[%s879 + $0x4] sm:$0xf]
        %v882 = vld [vmem:[%s879 + $0x8] sm:$0xf]
        %v883 = vld [vmem:[%s879 + $0xc] sm:$0xf]
        %v888 = vunpack.c.l.b16 %v880
        %v889 = vunpack.c.l.b16 %v881
        %v890 = vunpack.c.l.b16 %v882
        %v891 = vunpack.c.l.b16 %v883
        %v892 = vpack.c.b16 %v889, %v888
        %v893 = vpack.c.b16 %v891, %v890
        %v895 = vsel %vm608, %v892, 0
        %v898 = vsel %vm608, %v893, 0
        %900 = vmatprep.subr.bf16.mxu0 0
        %901 = vmatpush1.bf16.msra.mxu0 0
        %902 = vmatprep.subr.bf16.mxu0 0
        %903 = vmatpush1.bf16.msra.mxu0 0
        %904 = vmatprep.subr.bf16.mxu0 0
        %905 = vmatpush1.bf16.msra.mxu0 0
        %906 = vmatprep.subr.bf16.mxu0 0
        %907 = vmatpush1.bf16.msra.mxu0 0
        %908 = vmatprep.subr.bf16.mxu0 0
        %909 = vmatpush1.bf16.msra.mxu0 0
        %910 = vmatprep.subr.bf16.mxu0 0
        %911 = vmatpush1.bf16.msra.mxu0 0
        %912 = vmatprep.subr.bf16.mxu0 0
        %913 = vmatpush1.bf16.msra.mxu0 %v807
        %914 = vmatprep.subr.bf16.mxu0 0
        %915 = vmatpush1.bf16.msra.mxu0 %v806
        %916 = vmatprep.subr.bf16.mxu0 0
        %917 = vmatpush2.bf16.msra.mxu0 0
        %918 = vmatprep.subr.bf16.mxu0 0
        %919 = vmatpush2.bf16.msra.mxu0 0
        %920 = vmatprep.subr.bf16.mxu0 0
        %921 = vmatpush2.bf16.msra.mxu0 0
        %922 = vmatprep.subr.bf16.mxu0 0
        %923 = vmatpush2.bf16.msra.mxu0 0
        %924 = vmatprep.subr.bf16.mxu0 0
        %925 = vmatpush2.bf16.msra.mxu0 0
        %926 = vmatprep.subr.bf16.mxu0 0
        %927 = vmatpush2.bf16.msra.mxu0 0
        %928 = vmatprep.subr.bf16.mxu0 0
        %929 = vmatpush2.bf16.msra.mxu0 0
        %930 = vmatprep.subr.bf16.mxu0 0
        %931 = vmatpush2.bf16.msra.mxu0 0
        %932 = vmatprep.mubr.bf16.mxu0 0
        %933 = vmatmul.mubr.bf16.gmra.mxu0 %v895
        %v934 = vpop.f32.mrf.mxu0
        %v935 = vadd.f32 0.0, %v934
        %v936 = vpop.f32.mrf.mxu0
        %v937 = vpop.f32.mrf.mxu0
        %v938 = vadd.f32 0.0, %v937
        %v939 = vpop.f32.mrf.mxu0
        %940 = vmatprep.mubr.bf16.mxu0 0
        %941 = vmatmul.mubr.bf16.gmra.mxu0 %v898
        %v942 = vpop.f32.mrf.mxu0
        %v943 = vadd.f32 0.0, %v942
        %v944 = vpop.f32.mrf.mxu0
        %v945 = vpop.f32.mrf.mxu0
        %v946 = vadd.f32 0.0, %v945
        %v947 = vpop.f32.mrf.mxu0
        %948 = vdwg.mxu0
        %s949 = scalar_lea.vmem [#allocation2], 32
        %v950 = vld [vmem:[%s949] sm:$0xf]
        %v951 = vld [vmem:[%s949 + $0x4] sm:$0xf]
        %v952 = vld [vmem:[%s949 + $0x8] sm:$0xf]
        %v953 = vld [vmem:[%s949 + $0xc] sm:$0xf]
        %v958 = vunpack.c.l.b16 %v950
        %v959 = vunpack.c.l.b16 %v951
        %v960 = vunpack.c.l.b16 %v952
        %v961 = vunpack.c.l.b16 %v953
        %v962 = vpack.c.b16 %v959, %v958
        %v963 = vpack.c.b16 %v961, %v960
        %v965 = vsel %vm608, %v962, 0
        %v968 = vsel %vm608, %v963, 0
        %970 = vmatprep.subr.bf16.mxu0 0
        %971 = vmatpush1.bf16.msra.mxu0 0
        %972 = vmatprep.subr.bf16.mxu0 0
        %973 = vmatpush1.bf16.msra.mxu0 0
        %974 = vmatprep.subr.bf16.mxu0 0
        %975 = vmatpush1.bf16.msra.mxu0 0
        %976 = vmatprep.subr.bf16.mxu0 0
        %977 = vmatpush1.bf16.msra.mxu0 0
        %978 = vmatprep.subr.bf16.mxu0 0
        %979 = vmatpush1.bf16.msra.mxu0 0
        %980 = vmatprep.subr.bf16.mxu0 0
        %981 = vmatpush1.bf16.msra.mxu0 0
        %982 = vmatprep.subr.bf16.mxu0 0
        %983 = vmatpush1.bf16.msra.mxu0 %v809
        %984 = vmatprep.subr.bf16.mxu0 0
        %985 = vmatpush1.bf16.msra.mxu0 %v808
        %986 = vmatprep.subr.bf16.mxu0 0
        %987 = vmatpush2.bf16.msra.mxu0 0
        %988 = vmatprep.subr.bf16.mxu0 0
        %989 = vmatpush2.bf16.msra.mxu0 0
        %990 = vmatprep.subr.bf16.mxu0 0
        %991 = vmatpush2.bf16.msra.mxu0 0
        %992 = vmatprep.subr.bf16.mxu0 0
        %993 = vmatpush2.bf16.msra.mxu0 0
        %994 = vmatprep.subr.bf16.mxu0 0
        %995 = vmatpush2.bf16.msra.mxu0 0
        %996 = vmatprep.subr.bf16.mxu0 0
        %997 = vmatpush2.bf16.msra.mxu0 0
        %998 = vmatprep.subr.bf16.mxu0 0
        %999 = vmatpush2.bf16.msra.mxu0 0
        %1000 = vmatprep.subr.bf16.mxu0 0
        %1001 = vmatpush2.bf16.msra.mxu0 0
        %1002 = vmatprep.mubr.bf16.mxu0 0
        %1003 = vmatmul.mubr.bf16.gmra.mxu0 %v965
        %v1004 = vpop.f32.mrf.mxu0
        %v1005 = vadd.f32 0.0, %v1004
        %v1006 = vpop.f32.mrf.mxu0
        %v1007 = vpop.f32.mrf.mxu0
        %v1008 = vadd.f32 0.0, %v1007
        %v1009 = vpop.f32.mrf.mxu0
        %1010 = vmatprep.mubr.bf16.mxu0 0
        %1011 = vmatmul.mubr.bf16.gmra.mxu0 %v968
        %v1012 = vpop.f32.mrf.mxu0
        %v1013 = vadd.f32 0.0, %v1012
        %v1014 = vpop.f32.mrf.mxu0
        %v1015 = vpop.f32.mrf.mxu0
        %v1016 = vadd.f32 0.0, %v1015
        %v1017 = vpop.f32.mrf.mxu0
        %1018 = vdwg.mxu0
        %v1019 = vld [vmem:[#allocation14] sm:$0x1]
        %v1020 = vld [vmem:[#allocation14 + $0x1] sm:$0x1]
        %v1021 = vld [vmem:[#allocation14 + $0x2] sm:$0x1]
        %v1022 = vld [vmem:[#allocation14 + $0x3] sm:$0x1]
        %v1027 = vlaneseq
        %v1028 = vshrl.u32 %v1027, 7
        %v1029 = vsub.s32 0, %v1028
        %v1030 = vrot.slane %v1019, %v1029
        %v1031 = vlaneseq
        %v1032 = vshrl.u32 %v1031, 7
        %v1033 = vsub.s32 0, %v1032
        %v1034 = vrot.slane %v1020, %v1033
        %v1035 = vlaneseq
        %v1036 = vshrl.u32 %v1035, 7
        %v1037 = vsub.s32 0, %v1036
        %v1038 = vrot.slane %v1021, %v1037
        %v1039 = vlaneseq
        %v1040 = vshrl.u32 %v1039, 7
        %v1041 = vsub.s32 0, %v1040
        %v1042 = vrot.slane %v1022, %v1041
        %v1047 = vmul.f32 %v865, %v1030
        %v1048 = vmul.f32 %v868, %v1030
        %v1049 = vmul.f32 %v873, %v1030
        %v1050 = vmul.f32 %v876, %v1030
        %v1051 = vmul.f32 %v865, %v1034
        %v1052 = vmul.f32 %v868, %v1034
        %v1053 = vmul.f32 %v873, %v1034
        %v1054 = vmul.f32 %v876, %v1034
        %v1055 = vmul.f32 %v865, %v1038
        %v1056 = vmul.f32 %v868, %v1038
        %v1057 = vmul.f32 %v873, %v1038
        %v1058 = vmul.f32 %v876, %v1038
        %v1059 = vmul.f32 %v865, %v1042
        %v1060 = vmul.f32 %v868, %v1042
        %v1061 = vmul.f32 %v873, %v1042
        %v1062 = vmul.f32 %v876, %v1042
        %v1063 = vpack.c.bf16 %v1048, %v1047
        %v1064 = vpack.c.bf16 %v1050, %v1049
        %v1065 = vpack.c.bf16 %v1052, %v1051
        %v1066 = vpack.c.bf16 %v1054, %v1053
        %v1067 = vpack.c.bf16 %v1056, %v1055
        %v1068 = vpack.c.bf16 %v1058, %v1057
        %v1069 = vpack.c.bf16 %v1060, %v1059
        %v1070 = vpack.c.bf16 %v1062, %v1061
        %v1071 = vpack.c.bf16 %v938, %v935
        %v1072 = vpack.c.bf16 %v946, %v943
        %v1074 = vsel %vm608, %v1063, 0
        %v1077 = vsel %vm608, %v1064, 0
        %v1080 = vsel %vm608, %v1065, 0
        %v1083 = vsel %vm608, %v1066, 0
        %v1086 = vsel %vm608, %v1067, 0
        %v1089 = vsel %vm608, %v1068, 0
        %v1092 = vsel %vm608, %v1069, 0
        %v1095 = vsel %vm608, %v1070, 0
        %v1098 = vsel %vm608, %v1071, 0
        %v1101 = vsel %vm608, %v1072, 0
        %1103 = vmatprep.subr.bf16.mxu0 0
        %1104 = vmatpush1.bf16.xpose.msra.mxu0 0
        %1105 = vmatprep.subr.bf16.mxu0 0
        %1106 = vmatpush1.bf16.xpose.msra.mxu0 0
        %1107 = vmatprep.subr.bf16.mxu0 0
        %1108 = vmatpush1.bf16.xpose.msra.mxu0 0
        %1109 = vmatprep.subr.bf16.mxu0 0
        %1110 = vmatpush1.bf16.xpose.msra.mxu0 0
        %1111 = vmatprep.subr.bf16.mxu0 0
        %1112 = vmatpush1.bf16.xpose.msra.mxu0 0
        %1113 = vmatprep.subr.bf16.mxu0 0
        %1114 = vmatpush1.bf16.xpose.msra.mxu0 0
        %1115 = vmatprep.subr.bf16.mxu0 0
        %1116 = vmatpush1.bf16.xpose.msra.mxu0 %v1101
        %1117 = vmatprep.subr.bf16.mxu0 0
        %1118 = vmatpush1.bf16.xpose.msra.mxu0 %v1098
        %1119 = vmatprep.subr.bf16.mxu0 0
        %1120 = vmatpush2.bf16.xpose.msra.mxu0 0
        %1121 = vmatprep.subr.bf16.mxu0 0
        %1122 = vmatpush2.bf16.xpose.msra.mxu0 0
        %1123 = vmatprep.subr.bf16.mxu0 0
        %1124 = vmatpush2.bf16.xpose.msra.mxu0 0
        %1125 = vmatprep.subr.bf16.mxu0 0
        %1126 = vmatpush2.bf16.xpose.msra.mxu0 0
        %1127 = vmatprep.subr.bf16.mxu0 0
        %1128 = vmatpush2.bf16.xpose.msra.mxu0 0
        %1129 = vmatprep.subr.bf16.mxu0 0
        %1130 = vmatpush2.bf16.xpose.msra.mxu0 0
        %1131 = vmatprep.subr.bf16.mxu0 0
        %1132 = vmatpush2.bf16.xpose.msra.mxu0 0
        %1133 = vmatprep.subr.bf16.mxu0 0
        %1134 = vmatpush2.bf16.xpose.msra.mxu0 0
        %1135 = vmatprep.mubr.bf16.mxu0 0
        %1136 = vmatmul.mubr.bf16.gmra.mxu0 %v1074
        %v1137 = vpop.f32.mrf.mxu0
        %v1138 = vadd.f32 0.0, %v1137
        %v1139 = vpop.f32.mrf.mxu0
        %v1140 = vpop.f32.mrf.mxu0
        %v1141 = vadd.f32 0.0, %v1140
        %v1142 = vpop.f32.mrf.mxu0
        %1143 = vmatprep.mubr.bf16.mxu0 0
        %1144 = vmatmul.mubr.bf16.gmra.mxu0 %v1077
        %v1145 = vpop.f32.mrf.mxu0
        %v1146 = vadd.f32 0.0, %v1145
        %v1147 = vpop.f32.mrf.mxu0
        %v1148 = vpop.f32.mrf.mxu0
        %v1149 = vadd.f32 0.0, %v1148
        %v1150 = vpop.f32.mrf.mxu0
        %1151 = vmatprep.mubr.bf16.mxu0 0
        %1152 = vmatmul.mubr.bf16.gmra.mxu0 %v1080
        %v1153 = vpop.f32.mrf.mxu0
        %v1154 = vadd.f32 0.0, %v1153
        %v1155 = vpop.f32.mrf.mxu0
        %v1156 = vpop.f32.mrf.mxu0
        %v1157 = vadd.f32 0.0, %v1156
        %v1158 = vpop.f32.mrf.mxu0
        %1159 = vmatprep.mubr.bf16.mxu0 0
        %1160 = vmatmul.mubr.bf16.gmra.mxu0 %v1083
        %v1161 = vpop.f32.mrf.mxu0
        %v1162 = vadd.f32 0.0, %v1161
        %v1163 = vpop.f32.mrf.mxu0
        %v1164 = vpop.f32.mrf.mxu0
        %v1165 = vadd.f32 0.0, %v1164
        %v1166 = vpop.f32.mrf.mxu0
        %1167 = vmatprep.mubr.bf16.mxu0 0
        %1168 = vmatmul.mubr.bf16.gmra.mxu0 %v1086
        %v1169 = vpop.f32.mrf.mxu0
        %v1170 = vadd.f32 0.0, %v1169
        %v1171 = vpop.f32.mrf.mxu0
        %v1172 = vpop.f32.mrf.mxu0
        %v1173 = vadd.f32 0.0, %v1172
        %v1174 = vpop.f32.mrf.mxu0
        %1175 = vmatprep.mubr.bf16.mxu0 0
        %1176 = vmatmul.mubr.bf16.gmra.mxu0 %v1089
        %v1177 = vpop.f32.mrf.mxu0
        %v1178 = vadd.f32 0.0, %v1177
        %v1179 = vpop.f32.mrf.mxu0
        %v1180 = vpop.f32.mrf.mxu0
        %v1181 = vadd.f32 0.0, %v1180
        %v1182 = vpop.f32.mrf.mxu0
        %1183 = vmatprep.mubr.bf16.mxu0 0
        %1184 = vmatmul.mubr.bf16.gmra.mxu0 %v1092
        %v1185 = vpop.f32.mrf.mxu0
        %v1186 = vadd.f32 0.0, %v1185
        %v1187 = vpop.f32.mrf.mxu0
        %v1188 = vpop.f32.mrf.mxu0
        %v1189 = vadd.f32 0.0, %v1188
        %v1190 = vpop.f32.mrf.mxu0
        %1191 = vmatprep.mubr.bf16.mxu0 0
        %1192 = vmatmul.mubr.bf16.gmra.mxu0 %v1095
        %v1193 = vpop.f32.mrf.mxu0
        %v1194 = vadd.f32 0.0, %v1193
        %v1195 = vpop.f32.mrf.mxu0
        %v1196 = vpop.f32.mrf.mxu0
        %v1197 = vadd.f32 0.0, %v1196
        %v1198 = vpop.f32.mrf.mxu0
        %1199 = vdwg.mxu0
        %v1200 = vld [vmem:[#allocation11] sm:$0xff]
        %v1201 = vld [vmem:[#allocation11 + $0x8] sm:$0xff]
        %v1202 = vld [vmem:[#allocation11 + $0x10] sm:$0xff]
        %v1203 = vld [vmem:[#allocation11 + $0x18] sm:$0xff]
        %v1204 = vadd.f32 %v1138, %v1200
        %v1205 = vadd.f32 %v1141, %v1201
        %v1206 = vadd.f32 %v1146, %v1202
        %v1207 = vadd.f32 %v1149, %v1203
        %v1208 = vadd.f32 %v1154, %v1200
        %v1209 = vadd.f32 %v1157, %v1201
        %v1210 = vadd.f32 %v1162, %v1202
        %v1211 = vadd.f32 %v1165, %v1203
        %v1212 = vadd.f32 %v1170, %v1200
        %v1213 = vadd.f32 %v1173, %v1201
        %v1214 = vadd.f32 %v1178, %v1202
        %v1215 = vadd.f32 %v1181, %v1203
        %v1216 = vadd.f32 %v1186, %v1200
        %v1217 = vadd.f32 %v1189, %v1201
        %v1218 = vadd.f32 %v1194, %v1202
        %v1219 = vadd.f32 %v1197, %v1203
        %v1220 = vsel %vm608, %v1204, -inf
        %1221 = vmax.xlane.f32.xlu0 %v1220
        %v1222 = vpop.xlane.xlu0 %1221
        %v1223 = vsel %vm608, %v1205, -inf
        %1224 = vmax.xlane.f32.xlu0 %v1223
        %v1225 = vpop.xlane.xlu0 %1224
        %v1226 = vsel %vm608, %v1206, -inf
        %1227 = vmax.xlane.f32.xlu0 %v1226
        %v1228 = vpop.xlane.xlu0 %1227
        %v1229 = vsel %vm608, %v1207, -inf
        %1230 = vmax.xlane.f32.xlu0 %v1229
        %v1231 = vpop.xlane.xlu0 %1230
        %v1232 = vsel %vm608, %v1208, -inf
        %1233 = vmax.xlane.f32.xlu0 %v1232
        %v1234 = vpop.xlane.xlu0 %1233
        %v1235 = vsel %vm608, %v1209, -inf
        %1236 = vmax.xlane.f32.xlu0 %v1235
        %v1237 = vpop.xlane.xlu0 %1236
        %v1238 = vsel %vm608, %v1210, -inf
        %1239 = vmax.xlane.f32.xlu0 %v1238
        %v1240 = vpop.xlane.xlu0 %1239
        %v1241 = vsel %vm608, %v1211, -inf
        %1242 = vmax.xlane.f32.xlu0 %v1241
        %v1243 = vpop.xlane.xlu0 %1242
        %v1244 = vsel %vm608, %v1212, -inf
        %1245 = vmax.xlane.f32.xlu0 %v1244
        %v1246 = vpop.xlane.xlu0 %1245
        %v1247 = vsel %vm608, %v1213, -inf
        %1248 = vmax.xlane.f32.xlu0 %v1247
        %v1249 = vpop.xlane.xlu0 %1248
        %v1250 = vsel %vm608, %v1214, -inf
        %1251 = vmax.xlane.f32.xlu0 %v1250
        %v1252 = vpop.xlane.xlu0 %1251
        %v1253 = vsel %vm608, %v1215, -inf
        %1254 = vmax.xlane.f32.xlu0 %v1253
        %v1255 = vpop.xlane.xlu0 %1254
        %v1256 = vsel %vm608, %v1216, -inf
        %1257 = vmax.xlane.f32.xlu0 %v1256
        %v1258 = vpop.xlane.xlu0 %1257
        %v1259 = vsel %vm608, %v1217, -inf
        %1260 = vmax.xlane.f32.xlu0 %v1259
        %v1261 = vpop.xlane.xlu0 %1260
        %v1262 = vsel %vm608, %v1218, -inf
        %1263 = vmax.xlane.f32.xlu0 %v1262
        %v1264 = vpop.xlane.xlu0 %1263
        %v1265 = vsel %vm608, %v1219, -inf
        %1266 = vmax.xlane.f32.xlu0 %v1265
        %v1267 = vpop.xlane.xlu0 %1266
        %v1268 = vsub.f32 %v1204, %v1222
        %v1269 = vsub.f32 %v1205, %v1225
        %v1270 = vsub.f32 %v1206, %v1228
        %v1271 = vsub.f32 %v1207, %v1231
        %v1272 = vsub.f32 %v1208, %v1234
        %v1273 = vsub.f32 %v1209, %v1237
        %v1274 = vsub.f32 %v1210, %v1240
        %v1275 = vsub.f32 %v1211, %v1243
        %v1276 = vsub.f32 %v1212, %v1246
        %v1277 = vsub.f32 %v1213, %v1249
        %v1278 = vsub.f32 %v1214, %v1252
        %v1279 = vsub.f32 %v1215, %v1255
        %v1280 = vsub.f32 %v1216, %v1258
        %v1281 = vsub.f32 %v1217, %v1261
        %v1282 = vsub.f32 %v1218, %v1264
        %v1283 = vsub.f32 %v1219, %v1267
        %v1284 = vmul.f32 %v1268, 1.442695
        %v1285 = vpow.pop %v1284
        %v1286 = vmul.f32 %v1269, 1.442695
        %v1287 = vpow.pop %v1286
        %v1288 = vmul.f32 %v1270, 1.442695
        %v1289 = vpow.pop %v1288
        %v1290 = vmul.f32 %v1271, 1.442695
        %v1291 = vpow.pop %v1290
        %v1292 = vmul.f32 %v1272, 1.442695
        %v1293 = vpow.pop %v1292
        %v1294 = vmul.f32 %v1273, 1.442695
        %v1295 = vpow.pop %v1294
        %v1296 = vmul.f32 %v1274, 1.442695
        %v1297 = vpow.pop %v1296
        %v1298 = vmul.f32 %v1275, 1.442695
        %v1299 = vpow.pop %v1298
        %v1300 = vmul.f32 %v1276, 1.442695
        %v1301 = vpow.pop %v1300
        %v1302 = vmul.f32 %v1277, 1.442695
        %v1303 = vpow.pop %v1302
        %v1304 = vmul.f32 %v1278, 1.442695
        %v1305 = vpow.pop %v1304
        %v1306 = vmul.f32 %v1279, 1.442695
        %v1307 = vpow.pop %v1306
        %v1308 = vmul.f32 %v1280, 1.442695
        %v1309 = vpow.pop %v1308
        %v1310 = vmul.f32 %v1281, 1.442695
        %v1311 = vpow.pop %v1310
        %v1312 = vmul.f32 %v1282, 1.442695
        %v1313 = vpow.pop %v1312
        %v1314 = vmul.f32 %v1283, 1.442695
        %v1315 = vpow.pop %v1314
        %v1316 = vsel %vm608, %v1285, 0.0
        %1317 = vadd.xlane.f32.xlu0 %v1316
        %v1318 = vpop.xlane.xlu0 %1317
        %v1319 = vsel %vm608, %v1287, 0.0
        %1320 = vadd.xlane.f32.xlu0 %v1319
        %v1321 = vpop.xlane.xlu0 %1320
        %v1322 = vsel %vm608, %v1289, 0.0
        %1323 = vadd.xlane.f32.xlu0 %v1322
        %v1324 = vpop.xlane.xlu0 %1323
        %v1325 = vsel %vm608, %v1291, 0.0
        %1326 = vadd.xlane.f32.xlu0 %v1325
        %v1327 = vpop.xlane.xlu0 %1326
        %v1328 = vsel %vm608, %v1293, 0.0
        %1329 = vadd.xlane.f32.xlu0 %v1328
        %v1330 = vpop.xlane.xlu0 %1329
        %v1331 = vsel %vm608, %v1295, 0.0
        %1332 = vadd.xlane.f32.xlu0 %v1331
        %v1333 = vpop.xlane.xlu0 %1332
        %v1334 = vsel %vm608, %v1297, 0.0
        %1335 = vadd.xlane.f32.xlu0 %v1334
        %v1336 = vpop.xlane.xlu0 %1335
        %v1337 = vsel %vm608, %v1299, 0.0
        %1338 = vadd.xlane.f32.xlu0 %v1337
        %v1339 = vpop.xlane.xlu0 %1338
        %v1340 = vsel %vm608, %v1301, 0.0
        %1341 = vadd.xlane.f32.xlu0 %v1340
        %v1342 = vpop.xlane.xlu0 %1341
        %v1343 = vsel %vm608, %v1303, 0.0
        %1344 = vadd.xlane.f32.xlu0 %v1343
        %v1345 = vpop.xlane.xlu0 %1344
        %v1346 = vsel %vm608, %v1305, 0.0
        %1347 = vadd.xlane.f32.xlu0 %v1346
        %v1348 = vpop.xlane.xlu0 %1347
        %v1349 = vsel %vm608, %v1307, 0.0
        %1350 = vadd.xlane.f32.xlu0 %v1349
        %v1351 = vpop.xlane.xlu0 %1350
        %v1352 = vsel %vm608, %v1309, 0.0
        %1353 = vadd.xlane.f32.xlu0 %v1352
        %v1354 = vpop.xlane.xlu0 %1353
        %v1355 = vsel %vm608, %v1311, 0.0
        %1356 = vadd.xlane.f32.xlu0 %v1355
        %v1357 = vpop.xlane.xlu0 %1356
        %v1358 = vsel %vm608, %v1313, 0.0
        %1359 = vadd.xlane.f32.xlu0 %v1358
        %v1360 = vpop.xlane.xlu0 %1359
        %v1361 = vsel %vm608, %v1315, 0.0
        %1362 = vadd.xlane.f32.xlu0 %v1361
        %v1363 = vpop.xlane.xlu0 %1362
        %v1364 = vrcp.pop %v1318
        %v1365 = vmul.f32 %v1285, %v1364
        %v1366 = vrcp.pop %v1321
        %v1367 = vmul.f32 %v1287, %v1366
        %v1368 = vrcp.pop %v1324
        %v1369 = vmul.f32 %v1289, %v1368
        %v1370 = vrcp.pop %v1327
        %v1371 = vmul.f32 %v1291, %v1370
        %v1372 = vrcp.pop %v1330
        %v1373 = vmul.f32 %v1293, %v1372
        %v1374 = vrcp.pop %v1333
        %v1375 = vmul.f32 %v1295, %v1374
        %v1376 = vrcp.pop %v1336
        %v1377 = vmul.f32 %v1297, %v1376
        %v1378 = vrcp.pop %v1339
        %v1379 = vmul.f32 %v1299, %v1378
        %v1380 = vrcp.pop %v1342
        %v1381 = vmul.f32 %v1301, %v1380
        %v1382 = vrcp.pop %v1345
        %v1383 = vmul.f32 %v1303, %v1382
        %v1384 = vrcp.pop %v1348
        %v1385 = vmul.f32 %v1305, %v1384
        %v1386 = vrcp.pop %v1351
        %v1387 = vmul.f32 %v1307, %v1386
        %v1388 = vrcp.pop %v1354
        %v1389 = vmul.f32 %v1309, %v1388
        %v1390 = vrcp.pop %v1357
        %v1391 = vmul.f32 %v1311, %v1390
        %v1392 = vrcp.pop %v1360
        %v1393 = vmul.f32 %v1313, %v1392
        %v1394 = vrcp.pop %v1363
        %v1395 = vmul.f32 %v1315, %v1394
        %v1396 = vpack.c.bf16 %v1367, %v1365
        %v1397 = vpack.c.bf16 %v1371, %v1369
        %v1398 = vpack.c.bf16 %v1375, %v1373
        %v1399 = vpack.c.bf16 %v1379, %v1377
        %v1400 = vpack.c.bf16 %v1383, %v1381
        %v1401 = vpack.c.bf16 %v1387, %v1385
        %v1402 = vpack.c.bf16 %v1391, %v1389
        %v1403 = vpack.c.bf16 %v1395, %v1393
        %v1405 = vsel %vm608, %v1396, 0
        %v1408 = vsel %vm608, %v1397, 0
        %v1411 = vsel %vm608, %v1398, 0
        %v1414 = vsel %vm608, %v1399, 0
        %v1417 = vsel %vm608, %v1400, 0
        %v1420 = vsel %vm608, %v1401, 0
        %v1423 = vsel %vm608, %v1402, 0
        %v1426 = vsel %vm608, %v1403, 0
        %1428 = vmatprep.subr.bf16.mxu0 0
        %1429 = vmatpush1.bf16.msra.mxu0 0
        %1430 = vmatprep.subr.bf16.mxu0 0
        %1431 = vmatpush1.bf16.msra.mxu0 0
        %1432 = vmatprep.subr.bf16.mxu0 0
        %1433 = vmatpush1.bf16.msra.mxu0 0
        %1434 = vmatprep.subr.bf16.mxu0 0
        %1435 = vmatpush1.bf16.msra.mxu0 0
        %1436 = vmatprep.subr.bf16.mxu0 0
        %1437 = vmatpush1.bf16.msra.mxu0 0
        %1438 = vmatprep.subr.bf16.mxu0 0
        %1439 = vmatpush1.bf16.msra.mxu0 0
        %1440 = vmatprep.subr.bf16.mxu0 0
        %1441 = vmatpush1.bf16.msra.mxu0 %v809
        %1442 = vmatprep.subr.bf16.mxu0 0
        %1443 = vmatpush1.bf16.msra.mxu0 %v808
        %1444 = vmatprep.subr.bf16.mxu0 0
        %1445 = vmatpush2.bf16.msra.mxu0 0
        %1446 = vmatprep.subr.bf16.mxu0 0
        %1447 = vmatpush2.bf16.msra.mxu0 0
        %1448 = vmatprep.subr.bf16.mxu0 0
        %1449 = vmatpush2.bf16.msra.mxu0 0
        %1450 = vmatprep.subr.bf16.mxu0 0
        %1451 = vmatpush2.bf16.msra.mxu0 0
        %1452 = vmatprep.subr.bf16.mxu0 0
        %1453 = vmatpush2.bf16.msra.mxu0 0
        %1454 = vmatprep.subr.bf16.mxu0 0
        %1455 = vmatpush2.bf16.msra.mxu0 0
        %1456 = vmatprep.subr.bf16.mxu0 0
        %1457 = vmatpush2.bf16.msra.mxu0 0
        %1458 = vmatprep.subr.bf16.mxu0 0
        %1459 = vmatpush2.bf16.msra.mxu0 0
        %1460 = vmatprep.mubr.bf16.mxu0 0
        %1461 = vmatmul.mubr.bf16.gmra.mxu0 %v1405
        %v1462 = vpop.f32.mrf.mxu0
        %v1463 = vadd.f32 0.0, %v1462
        %v1464 = vpop.f32.mrf.mxu0
        %v1465 = vpop.f32.mrf.mxu0
        %v1466 = vadd.f32 0.0, %v1465
        %v1467 = vpop.f32.mrf.mxu0
        %1468 = vmatprep.mubr.bf16.mxu0 0
        %1469 = vmatmul.mubr.bf16.gmra.mxu0 %v1408
        %v1470 = vpop.f32.mrf.mxu0
        %v1471 = vadd.f32 0.0, %v1470
        %v1472 = vpop.f32.mrf.mxu0
        %v1473 = vpop.f32.mrf.mxu0
        %v1474 = vadd.f32 0.0, %v1473
        %v1475 = vpop.f32.mrf.mxu0
        %1476 = vmatprep.mubr.bf16.mxu0 0
        %1477 = vmatmul.mubr.bf16.gmra.mxu0 %v1411
        %v1478 = vpop.f32.mrf.mxu0
        %v1479 = vadd.f32 0.0, %v1478
        %v1480 = vpop.f32.mrf.mxu0
        %v1481 = vpop.f32.mrf.mxu0
        %v1482 = vadd.f32 0.0, %v1481
        %v1483 = vpop.f32.mrf.mxu0
        %1484 = vmatprep.mubr.bf16.mxu0 0
        %1485 = vmatmul.mubr.bf16.gmra.mxu0 %v1414
        %v1486 = vpop.f32.mrf.mxu0
        %v1487 = vadd.f32 0.0, %v1486
        %v1488 = vpop.f32.mrf.mxu0
        %v1489 = vpop.f32.mrf.mxu0
        %v1490 = vadd.f32 0.0, %v1489
        %v1491 = vpop.f32.mrf.mxu0
        %1492 = vmatprep.mubr.bf16.mxu0 0
        %1493 = vmatmul.mubr.bf16.gmra.mxu0 %v1417
        %v1494 = vpop.f32.mrf.mxu0
        %v1495 = vadd.f32 0.0, %v1494
        %v1496 = vpop.f32.mrf.mxu0
        %v1497 = vpop.f32.mrf.mxu0
        %v1498 = vadd.f32 0.0, %v1497
        %v1499 = vpop.f32.mrf.mxu0
        %1500 = vmatprep.mubr.bf16.mxu0 0
        %1501 = vmatmul.mubr.bf16.gmra.mxu0 %v1420
        %v1502 = vpop.f32.mrf.mxu0
        %v1503 = vadd.f32 0.0, %v1502
        %v1504 = vpop.f32.mrf.mxu0
        %v1505 = vpop.f32.mrf.mxu0
        %v1506 = vadd.f32 0.0, %v1505
        %v1507 = vpop.f32.mrf.mxu0
        %1508 = vmatprep.mubr.bf16.mxu0 0
        %1509 = vmatmul.mubr.bf16.gmra.mxu0 %v1423
        %v1510 = vpop.f32.mrf.mxu0
        %v1511 = vadd.f32 0.0, %v1510
        %v1512 = vpop.f32.mrf.mxu0
        %v1513 = vpop.f32.mrf.mxu0
        %v1514 = vadd.f32 0.0, %v1513
        %v1515 = vpop.f32.mrf.mxu0
        %1516 = vmatprep.mubr.bf16.mxu0 0
        %1517 = vmatmul.mubr.bf16.gmra.mxu0 %v1426
        %v1518 = vpop.f32.mrf.mxu0
        %v1519 = vadd.f32 0.0, %v1518
        %v1520 = vpop.f32.mrf.mxu0
        %v1521 = vpop.f32.mrf.mxu0
        %v1522 = vadd.f32 0.0, %v1521
        %v1523 = vpop.f32.mrf.mxu0
        %1524 = vdwg.mxu0
        %v1525 = vmul.f32 %v1463, %v1030
        %v1526 = vmul.f32 %v1466, %v1030
        %v1527 = vmul.f32 %v1471, %v1030
        %v1528 = vmul.f32 %v1474, %v1030
        %v1529 = vmul.f32 %v1479, %v1034
        %v1530 = vmul.f32 %v1482, %v1034
        %v1531 = vmul.f32 %v1487, %v1034
        %v1532 = vmul.f32 %v1490, %v1034
        %v1533 = vmul.f32 %v1495, %v1038
        %v1534 = vmul.f32 %v1498, %v1038
        %v1535 = vmul.f32 %v1503, %v1038
        %v1536 = vmul.f32 %v1506, %v1038
        %v1537 = vmul.f32 %v1511, %v1042
        %v1538 = vmul.f32 %v1514, %v1042
        %v1539 = vmul.f32 %v1519, %v1042
        %v1540 = vmul.f32 %v1522, %v1042
        %v1541 = vsel %vm608, %v1525, 0.0
        %v1542 = vsel %vm608, %v1529, 0.0
        %v1543 = vadd.f32 %v1541, %v1542
        %v1544 = vsel %vm608, %v1533, 0.0
        %v1545 = vadd.f32 %v1543, %v1544
        %v1546 = vsel %vm608, %v1537, 0.0
        %v1547 = vadd.f32 %v1545, %v1546
        %v1548 = vsel %vm608, %v1526, 0.0
        %v1549 = vsel %vm608, %v1530, 0.0
        %v1550 = vadd.f32 %v1548, %v1549
        %v1551 = vsel %vm608, %v1534, 0.0
        %v1552 = vadd.f32 %v1550, %v1551
        %v1553 = vsel %vm608, %v1538, 0.0
        %v1554 = vadd.f32 %v1552, %v1553
        %v1555 = vsel %vm608, %v1527, 0.0
        %v1556 = vsel %vm608, %v1531, 0.0
        %v1557 = vadd.f32 %v1555, %v1556
        %v1558 = vsel %vm608, %v1535, 0.0
        %v1559 = vadd.f32 %v1557, %v1558
        %v1560 = vsel %vm608, %v1539, 0.0
        %v1561 = vadd.f32 %v1559, %v1560
        %v1562 = vsel %vm608, %v1528, 0.0
        %v1563 = vsel %vm608, %v1532, 0.0
        %v1564 = vadd.f32 %v1562, %v1563
        %v1565 = vsel %vm608, %v1536, 0.0
        %v1566 = vadd.f32 %v1564, %v1565
        %v1567 = vsel %vm608, %v1540, 0.0
        %v1568 = vadd.f32 %v1566, %v1567
        %v1569 = vld [vmem:[#allocation16] sm:$0x1]
        %v1570 = vld [vmem:[#allocation16 + $0x1] sm:$0x1]
        %v1571 = vld [vmem:[#allocation16 + $0x2] sm:$0x1]
        %v1572 = vld [vmem:[#allocation16 + $0x3] sm:$0x1]
        %1573 = vxpose.xlu0.b32.start [1/16] %v650, 128
        %1574 = vxpose.xlu0.b32.cont [2/16] %v653, 128
        %1575 = vxpose.xlu0.b32.cont [3/16] %v658, 128
        %1576 = vxpose.xlu0.b32.cont [4/16] %v661, 128
        %1577 = vxpose.xlu0.b32.cont [5/16] 0.0, 128
        %1578 = vxpose.xlu0.b32.cont [6/16] 0.0, 128
        %1579 = vxpose.xlu0.b32.cont [7/16] 0.0, 128
        %1580 = vxpose.xlu0.b32.cont [8/16] 0.0, 128
        %1581 = vxpose.xlu0.b32.cont [9/16] 0.0, 128
        %1582 = vxpose.xlu0.b32.cont [10/16] 0.0, 128
        %1583 = vxpose.xlu0.b32.cont [11/16] 0.0, 128
        %1584 = vxpose.xlu0.b32.cont [12/16] 0.0, 128
        %1585 = vxpose.xlu0.b32.cont [13/16] 0.0, 128
        %1586 = vxpose.xlu0.b32.cont [14/16] 0.0, 128
        %1587 = vxpose.xlu0.b32.cont [15/16] 0.0, 128
        %1588 = vxpose.xlu0.b32.end [16/16] 0.0, 128
        %v1589 = vpop.trf.xlu0
        %v1590 = vpop.trf.xlu0
        %v1591 = vpop.trf.xlu0
        %v1592 = vpop.trf.xlu0
        %v1593 = vpop.trf.xlu0
        %v1594 = vpop.trf.xlu0
        %v1595 = vpop.trf.xlu0
        %v1596 = vpop.trf.xlu0
        %v1597 = vpop.trf.xlu0
        %v1598 = vpop.trf.xlu0
        %v1599 = vpop.trf.xlu0
        %v1600 = vpop.trf.xlu0
        %v1601 = vpop.trf.xlu0
        %v1602 = vpop.trf.xlu0
        %v1603 = vpop.trf.xlu0
        %v1604 = vpop.trf.xlu0
        %v1609 = vlaneseq
        %v1610 = vshrl.u32 %v1609, 7
        %v1611 = vsub.s32 0, %v1610
        %v1612 = vrot.slane %v1569, %v1611
        %v1613 = vlaneseq
        %v1614 = vshrl.u32 %v1613, 7
        %v1615 = vsub.s32 0, %v1614
        %v1616 = vrot.slane %v1570, %v1615
        %v1617 = vlaneseq
        %v1618 = vshrl.u32 %v1617, 7
        %v1619 = vsub.s32 0, %v1618
        %v1620 = vrot.slane %v1571, %v1619
        %v1621 = vlaneseq
        %v1622 = vshrl.u32 %v1621, 7
        %v1623 = vsub.s32 0, %v1622
        %v1624 = vrot.slane %v1572, %v1623
        %v1629 = vmul.f32 %v1589, %v1612
        %v1630 = vmul.f32 %v1590, %v1612
        %v1631 = vmul.f32 %v1591, %v1612
        %v1632 = vmul.f32 %v1592, %v1612
        %v1633 = vmul.f32 %v1589, %v1616
        %v1634 = vmul.f32 %v1590, %v1616
        %v1635 = vmul.f32 %v1591, %v1616
        %v1636 = vmul.f32 %v1592, %v1616
        %v1637 = vmul.f32 %v1589, %v1620
        %v1638 = vmul.f32 %v1590, %v1620
        %v1639 = vmul.f32 %v1591, %v1620
        %v1640 = vmul.f32 %v1592, %v1620
        %v1641 = vmul.f32 %v1589, %v1624
        %v1642 = vmul.f32 %v1590, %v1624
        %v1643 = vmul.f32 %v1591, %v1624
        %v1644 = vmul.f32 %v1592, %v1624
        %v1645 = vpack.c.bf16 %v1630, %v1629
        %v1646 = vpack.c.bf16 %v1632, %v1631
        %v1647 = vpack.c.bf16 %v1634, %v1633
        %v1648 = vpack.c.bf16 %v1636, %v1635
        %v1649 = vpack.c.bf16 %v1638, %v1637
        %v1650 = vpack.c.bf16 %v1640, %v1639
        %v1651 = vpack.c.bf16 %v1642, %v1641
        %v1652 = vpack.c.bf16 %v1644, %v1643
        %v1654 = vsel %vm608, %v1645, 0
        %v1657 = vsel %vm608, %v1646, 0
        %v1660 = vsel %vm608, %v1647, 0
        %v1663 = vsel %vm608, %v1648, 0
        %v1666 = vsel %vm608, %v1649, 0
        %v1669 = vsel %vm608, %v1650, 0
        %v1672 = vsel %vm608, %v1651, 0
        %v1675 = vsel %vm608, %v1652, 0
        %1677 = vmatprep.subr.bf16.mxu0 0
        %1678 = vmatpush1.bf16.msra.mxu0 0
        %1679 = vmatprep.subr.bf16.mxu0 0
        %1680 = vmatpush1.bf16.msra.mxu0 0
        %1681 = vmatprep.subr.bf16.mxu0 0
        %1682 = vmatpush1.bf16.msra.mxu0 0
        %1683 = vmatprep.subr.bf16.mxu0 0
        %1684 = vmatpush1.bf16.msra.mxu0 0
        %1685 = vmatprep.subr.bf16.mxu0 0
        %1686 = vmatpush1.bf16.msra.mxu0 0
        %1687 = vmatprep.subr.bf16.mxu0 0
        %1688 = vmatpush1.bf16.msra.mxu0 0
        %1689 = vmatprep.subr.bf16.mxu0 0
        %1690 = vmatpush1.bf16.msra.mxu0 %v807
        %1691 = vmatprep.subr.bf16.mxu0 0
        %1692 = vmatpush1.bf16.msra.mxu0 %v806
        %1693 = vmatprep.subr.bf16.mxu0 0
        %1694 = vmatpush2.bf16.msra.mxu0 0
        %1695 = vmatprep.subr.bf16.mxu0 0
        %1696 = vmatpush2.bf16.msra.mxu0 0
        %1697 = vmatprep.subr.bf16.mxu0 0
        %1698 = vmatpush2.bf16.msra.mxu0 0
        %1699 = vmatprep.subr.bf16.mxu0 0
        %1700 = vmatpush2.bf16.msra.mxu0 0
        %1701 = vmatprep.subr.bf16.mxu0 0
        %1702 = vmatpush2.bf16.msra.mxu0 0
        %1703 = vmatprep.subr.bf16.mxu0 0
        %1704 = vmatpush2.bf16.msra.mxu0 0
        %1705 = vmatprep.subr.bf16.mxu0 0
        %1706 = vmatpush2.bf16.msra.mxu0 0
        %1707 = vmatprep.subr.bf16.mxu0 0
        %1708 = vmatpush2.bf16.msra.mxu0 0
        %1709 = vmatprep.mubr.bf16.mxu0 0
        %1710 = vmatmul.mubr.bf16.gmra.mxu0 %v1654
        %v1711 = vpop.f32.mrf.mxu0
        %v1712 = vadd.f32 0.0, %v1711
        %v1713 = vpop.f32.mrf.mxu0
        %v1714 = vpop.f32.mrf.mxu0
        %v1715 = vadd.f32 0.0, %v1714
        %v1716 = vpop.f32.mrf.mxu0
        %1717 = vmatprep.mubr.bf16.mxu0 0
        %1718 = vmatmul.mubr.bf16.gmra.mxu0 %v1657
        %v1719 = vpop.f32.mrf.mxu0
        %v1720 = vadd.f32 0.0, %v1719
        %v1721 = vpop.f32.mrf.mxu0
        %v1722 = vpop.f32.mrf.mxu0
        %v1723 = vadd.f32 0.0, %v1722
        %v1724 = vpop.f32.mrf.mxu0
        %1725 = vmatprep.mubr.bf16.mxu0 0
        %1726 = vmatmul.mubr.bf16.gmra.mxu0 %v1660
        %v1727 = vpop.f32.mrf.mxu0
        %v1728 = vadd.f32 0.0, %v1727
        %v1729 = vpop.f32.mrf.mxu0
        %v1730 = vpop.f32.mrf.mxu0
        %v1731 = vadd.f32 0.0, %v1730
        %v1732 = vpop.f32.mrf.mxu0
        %1733 = vmatprep.mubr.bf16.mxu0 0
        %1734 = vmatmul.mubr.bf16.gmra.mxu0 %v1663
        %v1735 = vpop.f32.mrf.mxu0
        %v1736 = vadd.f32 0.0, %v1735
        %v1737 = vpop.f32.mrf.mxu0
        %v1738 = vpop.f32.mrf.mxu0
        %v1739 = vadd.f32 0.0, %v1738
        %v1740 = vpop.f32.mrf.mxu0
        %1741 = vmatprep.mubr.bf16.mxu0 0
        %1742 = vmatmul.mubr.bf16.gmra.mxu0 %v1666
        %v1743 = vpop.f32.mrf.mxu0
        %v1744 = vadd.f32 0.0, %v1743
        %v1745 = vpop.f32.mrf.mxu0
        %v1746 = vpop.f32.mrf.mxu0
        %v1747 = vadd.f32 0.0, %v1746
        %v1748 = vpop.f32.mrf.mxu0
        %1749 = vmatprep.mubr.bf16.mxu0 0
        %1750 = vmatmul.mubr.bf16.gmra.mxu0 %v1669
        %v1751 = vpop.f32.mrf.mxu0
        %v1752 = vadd.f32 0.0, %v1751
        %v1753 = vpop.f32.mrf.mxu0
        %v1754 = vpop.f32.mrf.mxu0
        %v1755 = vadd.f32 0.0, %v1754
        %v1756 = vpop.f32.mrf.mxu0
        %1757 = vmatprep.mubr.bf16.mxu0 0
        %1758 = vmatmul.mubr.bf16.gmra.mxu0 %v1672
        %v1759 = vpop.f32.mrf.mxu0
        %v1760 = vadd.f32 0.0, %v1759
        %v1761 = vpop.f32.mrf.mxu0
        %v1762 = vpop.f32.mrf.mxu0
        %v1763 = vadd.f32 0.0, %v1762
        %v1764 = vpop.f32.mrf.mxu0
        %1765 = vmatprep.mubr.bf16.mxu0 0
        %1766 = vmatmul.mubr.bf16.gmra.mxu0 %v1675
        %v1767 = vpop.f32.mrf.mxu0
        %v1768 = vadd.f32 0.0, %v1767
        %v1769 = vpop.f32.mrf.mxu0
        %v1770 = vpop.f32.mrf.mxu0
        %v1771 = vadd.f32 0.0, %v1770
        %v1772 = vpop.f32.mrf.mxu0
        %1773 = vdwg.mxu0
        %v1774 = vld [vmem:[#allocation13] sm:$0xff]
        %v1775 = vld [vmem:[#allocation13 + $0x8] sm:$0xff]
        %v1776 = vld [vmem:[#allocation13 + $0x10] sm:$0xff]
        %v1777 = vld [vmem:[#allocation13 + $0x18] sm:$0xff]
        %v1778 = vadd.f32 %v1712, %v1774
        %v1779 = vadd.f32 %v1715, %v1775
        %v1780 = vadd.f32 %v1720, %v1776
        %v1781 = vadd.f32 %v1723, %v1777
        %v1782 = vadd.f32 %v1728, %v1774
        %v1783 = vadd.f32 %v1731, %v1775
        %v1784 = vadd.f32 %v1736, %v1776
        %v1785 = vadd.f32 %v1739, %v1777
        %v1786 = vadd.f32 %v1744, %v1774
        %v1787 = vadd.f32 %v1747, %v1775
        %v1788 = vadd.f32 %v1752, %v1776
        %v1789 = vadd.f32 %v1755, %v1777
        %v1790 = vadd.f32 %v1760, %v1774
        %v1791 = vadd.f32 %v1763, %v1775
        %v1792 = vadd.f32 %v1768, %v1776
        %v1793 = vadd.f32 %v1771, %v1777
        %v1794 = vsel %vm608, %v1778, -inf
        %1795 = vmax.xlane.f32.xlu0 %v1794
        %v1796 = vpop.xlane.xlu0 %1795
        %v1797 = vsel %vm608, %v1779, -inf
        %1798 = vmax.xlane.f32.xlu0 %v1797
        %v1799 = vpop.xlane.xlu0 %1798
        %v1800 = vsel %vm608, %v1780, -inf
        %1801 = vmax.xlane.f32.xlu0 %v1800
        %v1802 = vpop.xlane.xlu0 %1801
        %v1803 = vsel %vm608, %v1781, -inf
        %1804 = vmax.xlane.f32.xlu0 %v1803
        %v1805 = vpop.xlane.xlu0 %1804
        %v1806 = vsel %vm608, %v1782, -inf
        %1807 = vmax.xlane.f32.xlu0 %v1806
        %v1808 = vpop.xlane.xlu0 %1807
        %v1809 = vsel %vm608, %v1783, -inf
        %1810 = vmax.xlane.f32.xlu0 %v1809
        %v1811 = vpop.xlane.xlu0 %1810
        %v1812 = vsel %vm608, %v1784, -inf
        %1813 = vmax.xlane.f32.xlu0 %v1812
        %v1814 = vpop.xlane.xlu0 %1813
        %v1815 = vsel %vm608, %v1785, -inf
        %1816 = vmax.xlane.f32.xlu0 %v1815
        %v1817 = vpop.xlane.xlu0 %1816
        %v1818 = vsel %vm608, %v1786, -inf
        %1819 = vmax.xlane.f32.xlu0 %v1818
        %v1820 = vpop.xlane.xlu0 %1819
        %v1821 = vsel %vm608, %v1787, -inf
        %1822 = vmax.xlane.f32.xlu0 %v1821
        %v1823 = vpop.xlane.xlu0 %1822
        %v1824 = vsel %vm608, %v1788, -inf
        %1825 = vmax.xlane.f32.xlu0 %v1824
        %v1826 = vpop.xlane.xlu0 %1825
        %v1827 = vsel %vm608, %v1789, -inf
        %1828 = vmax.xlane.f32.xlu0 %v1827
        %v1829 = vpop.xlane.xlu0 %1828
        %v1830 = vsel %vm608, %v1790, -inf
        %1831 = vmax.xlane.f32.xlu0 %v1830
        %v1832 = vpop.xlane.xlu0 %1831
        %v1833 = vsel %vm608, %v1791, -inf
        %1834 = vmax.xlane.f32.xlu0 %v1833
        %v1835 = vpop.xlane.xlu0 %1834
        %v1836 = vsel %vm608, %v1792, -inf
        %1837 = vmax.xlane.f32.xlu0 %v1836
        %v1838 = vpop.xlane.xlu0 %1837
        %v1839 = vsel %vm608, %v1793, -inf
        %1840 = vmax.xlane.f32.xlu0 %v1839
        %v1841 = vpop.xlane.xlu0 %1840
        %v1842 = vsub.f32 %v1778, %v1796
        %v1843 = vsub.f32 %v1779, %v1799
        %v1844 = vsub.f32 %v1780, %v1802
        %v1845 = vsub.f32 %v1781, %v1805
        %v1846 = vsub.f32 %v1782, %v1808
        %v1847 = vsub.f32 %v1783, %v1811
        %v1848 = vsub.f32 %v1784, %v1814
        %v1849 = vsub.f32 %v1785, %v1817
        %v1850 = vsub.f32 %v1786, %v1820
        %v1851 = vsub.f32 %v1787, %v1823
        %v1852 = vsub.f32 %v1788, %v1826
        %v1853 = vsub.f32 %v1789, %v1829
        %v1854 = vsub.f32 %v1790, %v1832
        %v1855 = vsub.f32 %v1791, %v1835
        %v1856 = vsub.f32 %v1792, %v1838
        %v1857 = vsub.f32 %v1793, %v1841
        %v1858 = vmul.f32 %v1842, 1.442695
        %v1859 = vpow.pop %v1858
        %v1860 = vmul.f32 %v1843, 1.442695
        %v1861 = vpow.pop %v1860
        %v1862 = vmul.f32 %v1844, 1.442695
        %v1863 = vpow.pop %v1862
        %v1864 = vmul.f32 %v1845, 1.442695
        %v1865 = vpow.pop %v1864
        %v1866 = vmul.f32 %v1846, 1.442695
        %v1867 = vpow.pop %v1866
        %v1868 = vmul.f32 %v1847, 1.442695
        %v1869 = vpow.pop %v1868
        %v1870 = vmul.f32 %v1848, 1.442695
        %v1871 = vpow.pop %v1870
        %v1872 = vmul.f32 %v1849, 1.442695
        %v1873 = vpow.pop %v1872
        %v1874 = vmul.f32 %v1850, 1.442695
        %v1875 = vpow.pop %v1874
        %v1876 = vmul.f32 %v1851, 1.442695
        %v1877 = vpow.pop %v1876
        %v1878 = vmul.f32 %v1852, 1.442695
        %v1879 = vpow.pop %v1878
        %v1880 = vmul.f32 %v1853, 1.442695
        %v1881 = vpow.pop %v1880
        %v1882 = vmul.f32 %v1854, 1.442695
        %v1883 = vpow.pop %v1882
        %v1884 = vmul.f32 %v1855, 1.442695
        %v1885 = vpow.pop %v1884
        %v1886 = vmul.f32 %v1856, 1.442695
        %v1887 = vpow.pop %v1886
        %v1888 = vmul.f32 %v1857, 1.442695
        %v1889 = vpow.pop %v1888
        %v1890 = vsel %vm608, %v1859, 0.0
        %1891 = vadd.xlane.f32.xlu0 %v1890
        %v1892 = vpop.xlane.xlu0 %1891
        %v1893 = vsel %vm608, %v1861, 0.0
        %1894 = vadd.xlane.f32.xlu0 %v1893
        %v1895 = vpop.xlane.xlu0 %1894
        %v1896 = vsel %vm608, %v1863, 0.0
        %1897 = vadd.xlane.f32.xlu0 %v1896
        %v1898 = vpop.xlane.xlu0 %1897
        %v1899 = vsel %vm608, %v1865, 0.0
        %1900 = vadd.xlane.f32.xlu0 %v1899
        %v1901 = vpop.xlane.xlu0 %1900
        %v1902 = vsel %vm608, %v1867, 0.0
        %1903 = vadd.xlane.f32.xlu0 %v1902
        %v1904 = vpop.xlane.xlu0 %1903
        %v1905 = vsel %vm608, %v1869, 0.0
        %1906 = vadd.xlane.f32.xlu0 %v1905
        %v1907 = vpop.xlane.xlu0 %1906
        %v1908 = vsel %vm608, %v1871, 0.0
        %1909 = vadd.xlane.f32.xlu0 %v1908
        %v1910 = vpop.xlane.xlu0 %1909
        %v1911 = vsel %vm608, %v1873, 0.0
        %1912 = vadd.xlane.f32.xlu0 %v1911
        %v1913 = vpop.xlane.xlu0 %1912
        %v1914 = vsel %vm608, %v1875, 0.0
        %1915 = vadd.xlane.f32.xlu0 %v1914
        %v1916 = vpop.xlane.xlu0 %1915
        %v1917 = vsel %vm608, %v1877, 0.0
        %1918 = vadd.xlane.f32.xlu0 %v1917
        %v1919 = vpop.xlane.xlu0 %1918
        %v1920 = vsel %vm608, %v1879, 0.0
        %1921 = vadd.xlane.f32.xlu0 %v1920
        %v1922 = vpop.xlane.xlu0 %1921
        %v1923 = vsel %vm608, %v1881, 0.0
        %1924 = vadd.xlane.f32.xlu0 %v1923
        %v1925 = vpop.xlane.xlu0 %1924
        %v1926 = vsel %vm608, %v1883, 0.0
        %1927 = vadd.xlane.f32.xlu0 %v1926
        %v1928 = vpop.xlane.xlu0 %1927
        %v1929 = vsel %vm608, %v1885, 0.0
        %1930 = vadd.xlane.f32.xlu0 %v1929
        %v1931 = vpop.xlane.xlu0 %1930
        %v1932 = vsel %vm608, %v1887, 0.0
        %1933 = vadd.xlane.f32.xlu0 %v1932
        %v1934 = vpop.xlane.xlu0 %1933
        %v1935 = vsel %vm608, %v1889, 0.0
        %1936 = vadd.xlane.f32.xlu0 %v1935
        %v1937 = vpop.xlane.xlu0 %1936
        %v1938 = vrcp.pop %v1892
        %v1939 = vmul.f32 %v1859, %v1938
        %v1940 = vrcp.pop %v1895
        %v1941 = vmul.f32 %v1861, %v1940
        %v1942 = vrcp.pop %v1898
        %v1943 = vmul.f32 %v1863, %v1942
        %v1944 = vrcp.pop %v1901
        %v1945 = vmul.f32 %v1865, %v1944
        %v1946 = vrcp.pop %v1904
        %v1947 = vmul.f32 %v1867, %v1946
        %v1948 = vrcp.pop %v1907
        %v1949 = vmul.f32 %v1869, %v1948
        %v1950 = vrcp.pop %v1910
        %v1951 = vmul.f32 %v1871, %v1950
        %v1952 = vrcp.pop %v1913
        %v1953 = vmul.f32 %v1873, %v1952
        %v1954 = vrcp.pop %v1916
        %v1955 = vmul.f32 %v1875, %v1954
        %v1956 = vrcp.pop %v1919
        %v1957 = vmul.f32 %v1877, %v1956
        %v1958 = vrcp.pop %v1922
        %v1959 = vmul.f32 %v1879, %v1958
        %v1960 = vrcp.pop %v1925
        %v1961 = vmul.f32 %v1881, %v1960
        %v1962 = vrcp.pop %v1928
        %v1963 = vmul.f32 %v1883, %v1962
        %v1964 = vrcp.pop %v1931
        %v1965 = vmul.f32 %v1885, %v1964
        %v1966 = vrcp.pop %v1934
        %v1967 = vmul.f32 %v1887, %v1966
        %v1968 = vrcp.pop %v1937
        %v1969 = vmul.f32 %v1889, %v1968
        %v1970 = vpack.c.bf16 %v1005, %v1005
        %v1971 = vpack.c.bf16 %v1008, %v1008
        %v1972 = vpack.c.bf16 %v1013, %v1013
        %v1973 = vpack.c.bf16 %v1016, %v1016
        %v1974 = vpack.c.bf16 %v1941, %v1939
        %v1975 = vpack.c.bf16 %v1945, %v1943
        %v1976 = vpack.c.bf16 %v1949, %v1947
        %v1977 = vpack.c.bf16 %v1953, %v1951
        %v1978 = vpack.c.bf16 %v1957, %v1955
        %v1979 = vpack.c.bf16 %v1961, %v1959
        %v1980 = vpack.c.bf16 %v1965, %v1963
        %v1981 = vpack.c.bf16 %v1969, %v1967
        %v1983 = vsel %vm608, %v1970, 0
        %v1986 = vsel %vm608, %v1974, 0
        %v1989 = vsel %vm608, %v1975, 0
        %1991 = vmatprep.subr.bf16.mxu0 0
        %1992 = vmatpush1.bf16.xpose.msra.mxu0 0
        %1993 = vmatprep.subr.bf16.mxu0 0
        %1994 = vmatpush1.bf16.xpose.msra.mxu0 0
        %1995 = vmatprep.subr.bf16.mxu0 0
        %1996 = vmatpush1.bf16.xpose.msra.mxu0 0
        %1997 = vmatprep.subr.bf16.mxu0 0
        %1998 = vmatpush1.bf16.xpose.msra.mxu0 0
        %1999 = vmatprep.subr.bf16.mxu0 0
        %2000 = vmatpush1.bf16.xpose.msra.mxu0 0
        %2001 = vmatprep.subr.bf16.mxu0 0
        %2002 = vmatpush1.bf16.xpose.msra.mxu0 0
        %2003 = vmatprep.subr.bf16.mxu0 0
        %2004 = vmatpush1.bf16.xpose.msra.mxu0 %v1989
        %2005 = vmatprep.subr.bf16.mxu0 0
        %2006 = vmatpush1.bf16.xpose.msra.mxu0 %v1986
        %2007 = vmatprep.subr.bf16.mxu0 0
        %2008 = vmatpush2.bf16.xpose.msra.mxu0 0
        %2009 = vmatprep.subr.bf16.mxu0 0
        %2010 = vmatpush2.bf16.xpose.msra.mxu0 0
        %2011 = vmatprep.subr.bf16.mxu0 0
        %2012 = vmatpush2.bf16.xpose.msra.mxu0 0
        %2013 = vmatprep.subr.bf16.mxu0 0
        %2014 = vmatpush2.bf16.xpose.msra.mxu0 0
        %2015 = vmatprep.subr.bf16.mxu0 0
        %2016 = vmatpush2.bf16.xpose.msra.mxu0 0
        %2017 = vmatprep.subr.bf16.mxu0 0
        %2018 = vmatpush2.bf16.xpose.msra.mxu0 0
        %2019 = vmatprep.subr.bf16.mxu0 0
        %2020 = vmatpush2.bf16.xpose.msra.mxu0 0
        %2021 = vmatprep.subr.bf16.mxu0 0
        %2022 = vmatpush2.bf16.xpose.msra.mxu0 0
        %2023 = vmatprep.mubr.bf16.mxu0 0
        %2024 = vmatmul.mubr.bf16.gmra.mxu0 %v1983
        %v2025 = vpop.f32.mrf.mxu0
        %v2026 = vadd.f32 0.0, %v2025
        %v2027 = vpop.f32.mrf.mxu0
        %v2028 = vpop.f32.mrf.mxu0
        %v2029 = vpop.f32.mrf.mxu0
        %2030 = vdwg.mxu0
        %v2032 = vsel %vm608, %v1971, 0
        %v2035 = vsel %vm608, %v1976, 0
        %v2038 = vsel %vm608, %v1977, 0
        %2040 = vmatprep.subr.bf16.mxu0 0
        %2041 = vmatpush1.bf16.xpose.msra.mxu0 0
        %2042 = vmatprep.subr.bf16.mxu0 0
        %2043 = vmatpush1.bf16.xpose.msra.mxu0 0
        %2044 = vmatprep.subr.bf16.mxu0 0
        %2045 = vmatpush1.bf16.xpose.msra.mxu0 0
        %2046 = vmatprep.subr.bf16.mxu0 0
        %2047 = vmatpush1.bf16.xpose.msra.mxu0 0
        %2048 = vmatprep.subr.bf16.mxu0 0
        %2049 = vmatpush1.bf16.xpose.msra.mxu0 0
        %2050 = vmatprep.subr.bf16.mxu0 0
        %2051 = vmatpush1.bf16.xpose.msra.mxu0 0
        %2052 = vmatprep.subr.bf16.mxu0 0
        %2053 = vmatpush1.bf16.xpose.msra.mxu0 %v2038
        %2054 = vmatprep.subr.bf16.mxu0 0
        %2055 = vmatpush1.bf16.xpose.msra.mxu0 %v2035
        %2056 = vmatprep.subr.bf16.mxu0 0
        %2057 = vmatpush2.bf16.xpose.msra.mxu0 0
        %2058 = vmatprep.subr.bf16.mxu0 0
        %2059 = vmatpush2.bf16.xpose.msra.mxu0 0
        %2060 = vmatprep.subr.bf16.mxu0 0
        %2061 = vmatpush2.bf16.xpose.msra.mxu0 0
        %2062 = vmatprep.subr.bf16.mxu0 0
        %2063 = vmatpush2.bf16.xpose.msra.mxu0 0
        %2064 = vmatprep.subr.bf16.mxu0 0
        %2065 = vmatpush2.bf16.xpose.msra.mxu0 0
        %2066 = vmatprep.subr.bf16.mxu0 0
        %2067 = vmatpush2.bf16.xpose.msra.mxu0 0
        %2068 = vmatprep.subr.bf16.mxu0 0
        %2069 = vmatpush2.bf16.xpose.msra.mxu0 0
        %2070 = vmatprep.subr.bf16.mxu0 0
        %2071 = vmatpush2.bf16.xpose.msra.mxu0 0
        %2072 = vmatprep.mubr.bf16.mxu0 0
        %2073 = vmatmul.mubr.bf16.gmra.mxu0 %v2032
        %v2074 = vpop.f32.mrf.mxu0
        %v2075 = vadd.f32 0.0, %v2074
        %v2076 = vpop.f32.mrf.mxu0
        %v2077 = vpop.f32.mrf.mxu0
        %v2078 = vpop.f32.mrf.mxu0
        %2079 = vdwg.mxu0
        %v2081 = vsel %vm608, %v1972, 0
        %v2084 = vsel %vm608, %v1978, 0
        %v2087 = vsel %vm608, %v1979, 0
        %2089 = vmatprep.subr.bf16.mxu0 0
        %2090 = vmatpush1.bf16.xpose.msra.mxu0 0
        %2091 = vmatprep.subr.bf16.mxu0 0
        %2092 = vmatpush1.bf16.xpose.msra.mxu0 0
        %2093 = vmatprep.subr.bf16.mxu0 0
        %2094 = vmatpush1.bf16.xpose.msra.mxu0 0
        %2095 = vmatprep.subr.bf16.mxu0 0
        %2096 = vmatpush1.bf16.xpose.msra.mxu0 0
        %2097 = vmatprep.subr.bf16.mxu0 0
        %2098 = vmatpush1.bf16.xpose.msra.mxu0 0
        %2099 = vmatprep.subr.bf16.mxu0 0
        %2100 = vmatpush1.bf16.xpose.msra.mxu0 0
        %2101 = vmatprep.subr.bf16.mxu0 0
        %2102 = vmatpush1.bf16.xpose.msra.mxu0 %v2087
        %2103 = vmatprep.subr.bf16.mxu0 0
        %2104 = vmatpush1.bf16.xpose.msra.mxu0 %v2084
        %2105 = vmatprep.subr.bf16.mxu0 0
        %2106 = vmatpush2.bf16.xpose.msra.mxu0 0
        %2107 = vmatprep.subr.bf16.mxu0 0
        %2108 = vmatpush2.bf16.xpose.msra.mxu0 0
        %2109 = vmatprep.subr.bf16.mxu0 0
        %2110 = vmatpush2.bf16.xpose.msra.mxu0 0
        %2111 = vmatprep.subr.bf16.mxu0 0
        %2112 = vmatpush2.bf16.xpose.msra.mxu0 0
        %2113 = vmatprep.subr.bf16.mxu0 0
        %2114 = vmatpush2.bf16.xpose.msra.mxu0 0
        %2115 = vmatprep.subr.bf16.mxu0 0
        %2116 = vmatpush2.bf16.xpose.msra.mxu0 0
        %2117 = vmatprep.subr.bf16.mxu0 0
        %2118 = vmatpush2.bf16.xpose.msra.mxu0 0
        %2119 = vmatprep.subr.bf16.mxu0 0
        %2120 = vmatpush2.bf16.xpose.msra.mxu0 0
        %2121 = vmatprep.mubr.bf16.mxu0 0
        %2122 = vmatmul.mubr.bf16.gmra.mxu0 %v2081
        %v2123 = vpop.f32.mrf.mxu0
        %v2124 = vadd.f32 0.0, %v2123
        %v2125 = vpop.f32.mrf.mxu0
        %v2126 = vpop.f32.mrf.mxu0
        %v2127 = vpop.f32.mrf.mxu0
        %2128 = vdwg.mxu0
        %v2130 = vsel %vm608, %v1973, 0
        %v2133 = vsel %vm608, %v1980, 0
        %v2136 = vsel %vm608, %v1981, 0
        %2138 = vmatprep.subr.bf16.mxu0 0
        %2139 = vmatpush1.bf16.xpose.msra.mxu0 0
        %2140 = vmatprep.subr.bf16.mxu0 0
        %2141 = vmatpush1.bf16.xpose.msra.mxu0 0
        %2142 = vmatprep.subr.bf16.mxu0 0
        %2143 = vmatpush1.bf16.xpose.msra.mxu0 0
        %2144 = vmatprep.subr.bf16.mxu0 0
        %2145 = vmatpush1.bf16.xpose.msra.mxu0 0
        %2146 = vmatprep.subr.bf16.mxu0 0
        %2147 = vmatpush1.bf16.xpose.msra.mxu0 0
        %2148 = vmatprep.subr.bf16.mxu0 0
        %2149 = vmatpush1.bf16.xpose.msra.mxu0 0
        %2150 = vmatprep.subr.bf16.mxu0 0
        %2151 = vmatpush1.bf16.xpose.msra.mxu0 %v2136
        %2152 = vmatprep.subr.bf16.mxu0 0
        %2153 = vmatpush1.bf16.xpose.msra.mxu0 %v2133
        %2154 = vmatprep.subr.bf16.mxu0 0
        %2155 = vmatpush2.bf16.xpose.msra.mxu0 0
        %2156 = vmatprep.subr.bf16.mxu0 0
        %2157 = vmatpush2.bf16.xpose.msra.mxu0 0
        %2158 = vmatprep.subr.bf16.mxu0 0
        %2159 = vmatpush2.bf16.xpose.msra.mxu0 0
        %2160 = vmatprep.subr.bf16.mxu0 0
        %2161 = vmatpush2.bf16.xpose.msra.mxu0 0
        %2162 = vmatprep.subr.bf16.mxu0 0
        %2163 = vmatpush2.bf16.xpose.msra.mxu0 0
        %2164 = vmatprep.subr.bf16.mxu0 0
        %2165 = vmatpush2.bf16.xpose.msra.mxu0 0
        %2166 = vmatprep.subr.bf16.mxu0 0
        %2167 = vmatpush2.bf16.xpose.msra.mxu0 0
        %2168 = vmatprep.subr.bf16.mxu0 0
        %2169 = vmatpush2.bf16.xpose.msra.mxu0 0
        %2170 = vmatprep.mubr.bf16.mxu0 0
        %2171 = vmatmul.mubr.bf16.gmra.mxu0 %v2130
        %v2172 = vpop.f32.mrf.mxu0
        %v2173 = vadd.f32 0.0, %v2172
        %v2174 = vpop.f32.mrf.mxu0
        %v2175 = vpop.f32.mrf.mxu0
        %v2176 = vpop.f32.mrf.mxu0
        %2177 = vdwg.mxu0
        %v2178 = vld [vmem:[#allocation17] sm:$0xff]
        %vm2179 = vcmp.eq.f32.partialorder %v2178, 0.0
        %v2180 = vsel %vm2179, 1, 0
        %vm2181 = vcmp.eq.s32.totalorder %v2180, 1
        %v2182 = vsel %vm2181, %v1547, 0.0
        %v2183 = vsel %vm2181, %v1554, 0.0
        %v2184 = vsel %vm2181, %v1561, 0.0
        %v2185 = vsel %vm2181, %v1568, 0.0
        %v2186 = vrot.slane %v1547, 4
        %v2187 = vrot.slane %v1554, 4
        %v2188 = vrot.slane %v1561, 4
        %v2189 = vrot.slane %v1568, 4
        %vm2190 = vcmask 1047808
        %2191 = vrot.lane.b32.xlu0 %v2186, 32
        %v2192 = vpop.permute.xlu0 %2191
        %v2193 = vsel %vm2190, %v2192, %v2186
        %2194 = vrot.lane.b32.xlu0 %v2187, 32
        %v2195 = vpop.permute.xlu0 %2194
        %v2196 = vsel %vm2190, %v2195, %v2187
        %2197 = vrot.lane.b32.xlu0 %v2188, 32
        %v2198 = vpop.permute.xlu0 %2197
        %v2199 = vsel %vm2190, %v2198, %v2188
        %2200 = vrot.lane.b32.xlu0 %v2189, 32
        %v2201 = vpop.permute.xlu0 %2200
        %v2202 = vsel %vm2190, %v2201, %v2189
        %2203 = vrot.lane.b32.xlu0 %v2193, 32
        %v2204 = vpop.permute.xlu0 %2203
        %2205 = vrot.lane.b32.xlu0 %v2196, 32
        %v2206 = vpop.permute.xlu0 %2205
        %2207 = vrot.lane.b32.xlu0 %v2199, 32
        %v2208 = vpop.permute.xlu0 %2207
        %2209 = vrot.lane.b32.xlu0 %v2202, 32
        %v2210 = vpop.permute.xlu0 %2209
        %v2211 = vsel %vm2190, %v2204, %v2186
        %v2212 = vsel %vm2190, %v2206, %v2187
        %v2213 = vsel %vm2190, %v2208, %v2188
        %v2214 = vsel %vm2190, %v2210, %v2189
        %vm2215 = vcmp.eq.f32.partialorder %v2178, 1.0
        %v2216 = vsel %vm2215, 1, 0
        %vm2217 = vcmp.eq.s32.totalorder %v2216, 1
        %2222 = vrot.lane.b32.xlu0 %v2211, 112
        %v2223 = vpop.permute.xlu0 %2222
        %2224 = vrot.lane.b32.xlu0 %v2212, 112
        %v2225 = vpop.permute.xlu0 %2224
        %2226 = vrot.lane.b32.xlu0 %v2213, 112
        %v2227 = vpop.permute.xlu0 %2226
        %2228 = vrot.lane.b32.xlu0 %v2214, 112
        %v2229 = vpop.permute.xlu0 %2228
        %v2234 = vsel %vm2217, %v2223, 0.0
        %v2235 = vsel %vm2217, %v2225, 0.0
        %v2236 = vsel %vm2217, %v2227, 0.0
        %v2237 = vsel %vm2217, %v2229, 0.0
        %v2238 = vadd.f32 %v2182, %v2234
        %v2239 = vadd.f32 %v2183, %v2235
        %v2240 = vadd.f32 %v2184, %v2236
        %v2241 = vadd.f32 %v2185, %v2237
        %v2242 = vsel %vm2181, %v2026, 0.0
        %v2243 = vsel %vm2181, %v2075, 0.0
        %v2244 = vsel %vm2181, %v2124, 0.0
        %v2245 = vsel %vm2181, %v2173, 0.0
        %v2246 = vrot.slane %v2026, 4
        %v2247 = vrot.slane %v2075, 4
        %v2248 = vrot.slane %v2124, 4
        %v2249 = vrot.slane %v2173, 4
        %2250 = vrot.lane.b32.xlu0 %v2246, 32
        %v2251 = vpop.permute.xlu0 %2250
        %v2252 = vsel %vm2190, %v2251, %v2246
        %2253 = vrot.lane.b32.xlu0 %v2247, 32
        %v2254 = vpop.permute.xlu0 %2253
        %v2255 = vsel %vm2190, %v2254, %v2247
        %2256 = vrot.lane.b32.xlu0 %v2248, 32
        %v2257 = vpop.permute.xlu0 %2256
        %v2258 = vsel %vm2190, %v2257, %v2248
        %2259 = vrot.lane.b32.xlu0 %v2249, 32
        %v2260 = vpop.permute.xlu0 %2259
        %v2261 = vsel %vm2190, %v2260, %v2249
        %2262 = vrot.lane.b32.xlu0 %v2252, 32
        %v2263 = vpop.permute.xlu0 %2262
        %2264 = vrot.lane.b32.xlu0 %v2255, 32
        %v2265 = vpop.permute.xlu0 %2264
        %2266 = vrot.lane.b32.xlu0 %v2258, 32
        %v2267 = vpop.permute.xlu0 %2266
        %2268 = vrot.lane.b32.xlu0 %v2261, 32
        %v2269 = vpop.permute.xlu0 %2268
        %v2270 = vsel %vm2190, %v2263, %v2246
        %v2271 = vsel %vm2190, %v2265, %v2247
        %v2272 = vsel %vm2190, %v2267, %v2248
        %v2273 = vsel %vm2190, %v2269, %v2249
        %2278 = vrot.lane.b32.xlu0 %v2270, 112
        %v2279 = vpop.permute.xlu0 %2278
        %2280 = vrot.lane.b32.xlu0 %v2271, 112
        %v2281 = vpop.permute.xlu0 %2280
        %2282 = vrot.lane.b32.xlu0 %v2272, 112
        %v2283 = vpop.permute.xlu0 %2282
        %2284 = vrot.lane.b32.xlu0 %v2273, 112
        %v2285 = vpop.permute.xlu0 %2284
        %v2290 = vsel %vm2217, %v2279, 0.0
        %v2291 = vsel %vm2217, %v2281, 0.0
        %v2292 = vsel %vm2217, %v2283, 0.0
        %v2293 = vsel %vm2217, %v2285, 0.0
        %v2294 = vadd.f32 %v2242, %v2290
        %v2295 = vadd.f32 %v2243, %v2291
        %v2296 = vadd.f32 %v2244, %v2292
        %v2297 = vadd.f32 %v2245, %v2293
        %v2298 = vld [vmem:[#allocation8] sm:$0x3]
        %v2299 = vld [vmem:[#allocation10] sm:$0x7]
        %v2300 = vpack.c.bf16 %v2239, %v2238
        %v2301 = vpack.c.bf16 %v2241, %v2240
        %v2302 = vld [vmem:[#allocation7] sm:$0xf]
        %v2303 = vld [vmem:[#allocation7 + $0x4] sm:$0xf]
        %v2304 = vld [vmem:[#allocation7 + $0x8] sm:$0xf]
        %v2305 = vld [vmem:[#allocation7 + $0xc] sm:$0xf]
        %v2306 = vlaneseq
        %v2307 = vshrl.u32 %v2306, 7
        %v2308 = vsub.s32 0, %v2307
        %v2309 = vrot.slane %v2298, %v2308
        %v2314 = vunpack.c.l.b16 %v2302
        %v2315 = vunpack.c.l.b16 %v2303
        %v2316 = vunpack.c.l.b16 %v2304
        %v2317 = vunpack.c.l.b16 %v2305
        %v2318 = vpack.c.b16 %v2315, %v2314
        %v2319 = vpack.c.b16 %v2317, %v2316
        %v2323 = vsel %vm608, %v2300, 0
        %v2326 = vsel %vm608, %v2301, 0
        %2328 = vmatprep.subr.bf16.mxu0 0
        %2329 = vmatpush1.bf16.msra.mxu0 0
        %2330 = vmatprep.subr.bf16.mxu0 0
        %2331 = vmatpush1.bf16.msra.mxu0 0
        %2332 = vmatprep.subr.bf16.mxu0 0
        %2333 = vmatpush1.bf16.msra.mxu0 0
        %2334 = vmatprep.subr.bf16.mxu0 0
        %2335 = vmatpush1.bf16.msra.mxu0 0
        %2336 = vmatprep.subr.bf16.mxu0 0
        %2337 = vmatpush1.bf16.msra.mxu0 0
        %2338 = vmatprep.subr.bf16.mxu0 0
        %2339 = vmatpush1.bf16.msra.mxu0 0
        %2340 = vmatprep.subr.bf16.mxu0 0
        %2341 = vmatpush1.bf16.msra.mxu0 %v2319
        %2342 = vmatprep.subr.bf16.mxu0 0
        %2343 = vmatpush1.bf16.msra.mxu0 %v2318
        %2344 = vmatprep.subr.bf16.mxu0 0
        %2345 = vmatpush2.bf16.msra.mxu0 0
        %2346 = vmatprep.subr.bf16.mxu0 0
        %2347 = vmatpush2.bf16.msra.mxu0 0
        %2348 = vmatprep.subr.bf16.mxu0 0
        %2349 = vmatpush2.bf16.msra.mxu0 0
        %2350 = vmatprep.subr.bf16.mxu0 0
        %2351 = vmatpush2.bf16.msra.mxu0 0
        %2352 = vmatprep.subr.bf16.mxu0 0
        %2353 = vmatpush2.bf16.msra.mxu0 0
        %2354 = vmatprep.subr.bf16.mxu0 0
        %2355 = vmatpush2.bf16.msra.mxu0 0
        %2356 = vmatprep.subr.bf16.mxu0 0
        %2357 = vmatpush2.bf16.msra.mxu0 0
        %2358 = vmatprep.subr.bf16.mxu0 0
        %2359 = vmatpush2.bf16.msra.mxu0 0
        %2360 = vmatprep.mubr.bf16.mxu0 0
        %2361 = vmatmul.mubr.bf16.gmra.mxu0 %v2323
        %v2362 = vpop.f32.mrf.mxu0
        %v2363 = vadd.f32 %v2309, %v2362
        %v2364 = vpop.f32.mrf.mxu0
        %v2365 = vpop.f32.mrf.mxu0
        %v2366 = vadd.f32 %v2309, %v2365
        %v2367 = vpop.f32.mrf.mxu0
        %2368 = vmatprep.mubr.bf16.mxu0 0
        %2369 = vmatmul.mubr.bf16.gmra.mxu0 %v2326
        %v2370 = vpop.f32.mrf.mxu0
        %v2371 = vadd.f32 %v2309, %v2370
        %v2372 = vpop.f32.mrf.mxu0
        %v2373 = vpop.f32.mrf.mxu0
        %v2374 = vadd.f32 %v2309, %v2373
        %v2375 = vpop.f32.mrf.mxu0
        %2376 = vdwg.mxu0
        %v2377 = vpack.c.bf16 %v2295, %v2294
        %v2378 = vpack.c.bf16 %v2297, %v2296
        %s2379 = scalar_lea.vmem [#allocation7], 16
        %v2380 = vld [vmem:[%s2379] sm:$0xf]
        %v2381 = vld [vmem:[%s2379 + $0x4] sm:$0xf]
        %v2382 = vld [vmem:[%s2379 + $0x8] sm:$0xf]
        %v2383 = vld [vmem:[%s2379 + $0xc] sm:$0xf]
        %v2384 = vlaneseq
        %v2385 = vshrl.u32 %v2384, 7
        %v2386 = vsub.s32 1, %v2385
        %v2387 = vrot.slane %v2298, %v2386
        %v2392 = vunpack.c.l.b16 %v2380
        %v2393 = vunpack.c.l.b16 %v2381
        %v2394 = vunpack.c.l.b16 %v2382
        %v2395 = vunpack.c.l.b16 %v2383
        %v2396 = vpack.c.b16 %v2393, %v2392
        %v2397 = vpack.c.b16 %v2395, %v2394
        %v2401 = vsel %vm608, %v2377, 0
        %v2404 = vsel %vm608, %v2378, 0
        %2406 = vmatprep.subr.bf16.mxu0 0
        %2407 = vmatpush1.bf16.msra.mxu0 0
        %2408 = vmatprep.subr.bf16.mxu0 0
        %2409 = vmatpush1.bf16.msra.mxu0 0
        %2410 = vmatprep.subr.bf16.mxu0 0
        %2411 = vmatpush1.bf16.msra.mxu0 0
        %2412 = vmatprep.subr.bf16.mxu0 0
        %2413 = vmatpush1.bf16.msra.mxu0 0
        %2414 = vmatprep.subr.bf16.mxu0 0
        %2415 = vmatpush1.bf16.msra.mxu0 0
        %2416 = vmatprep.subr.bf16.mxu0 0
        %2417 = vmatpush1.bf16.msra.mxu0 0
        %2418 = vmatprep.subr.bf16.mxu0 0
        %2419 = vmatpush1.bf16.msra.mxu0 %v2397
        %2420 = vmatprep.subr.bf16.mxu0 0
        %2421 = vmatpush1.bf16.msra.mxu0 %v2396
        %2422 = vmatprep.subr.bf16.mxu0 0
        %2423 = vmatpush2.bf16.msra.mxu0 0
        %2424 = vmatprep.subr.bf16.mxu0 0
        %2425 = vmatpush2.bf16.msra.mxu0 0
        %2426 = vmatprep.subr.bf16.mxu0 0
        %2427 = vmatpush2.bf16.msra.mxu0 0
        %2428 = vmatprep.subr.bf16.mxu0 0
        %2429 = vmatpush2.bf16.msra.mxu0 0
        %2430 = vmatprep.subr.bf16.mxu0 0
        %2431 = vmatpush2.bf16.msra.mxu0 0
        %2432 = vmatprep.subr.bf16.mxu0 0
        %2433 = vmatpush2.bf16.msra.mxu0 0
        %2434 = vmatprep.subr.bf16.mxu0 0
        %2435 = vmatpush2.bf16.msra.mxu0 0
        %2436 = vmatprep.subr.bf16.mxu0 0
        %2437 = vmatpush2.bf16.msra.mxu0 0
        %2438 = vmatprep.mubr.bf16.mxu0 0
        %2439 = vmatmul.mubr.bf16.gmra.mxu0 %v2401
        %v2440 = vpop.f32.mrf.mxu0
        %v2441 = vadd.f32 %v2387, %v2440
        %v2442 = vpop.f32.mrf.mxu0
        %v2443 = vpop.f32.mrf.mxu0
        %v2444 = vadd.f32 %v2387, %v2443
        %v2445 = vpop.f32.mrf.mxu0
        %2446 = vmatprep.mubr.bf16.mxu0 0
        %2447 = vmatmul.mubr.bf16.gmra.mxu0 %v2404
        %v2448 = vpop.f32.mrf.mxu0
        %v2449 = vadd.f32 %v2387, %v2448
        %v2450 = vpop.f32.mrf.mxu0
        %v2451 = vpop.f32.mrf.mxu0
        %v2452 = vadd.f32 %v2387, %v2451
        %v2453 = vpop.f32.mrf.mxu0
        %2454 = vdwg.mxu0
        %v2455 = vmul.f32 %v2363, 0.5
        %v2456 = vmul.f32 %v2366, 0.5
        %v2457 = vmul.f32 %v2371, 0.5
        %v2458 = vmul.f32 %v2374, 0.5
        %v2459 = vmul.f32 %v2363, 0.70710677
        %v2460 = vmul.f32 %v2366, 0.70710677
        %v2461 = vmul.f32 %v2371, 0.70710677
        %v2462 = vmul.f32 %v2374, 0.70710677
        %v2463 = verf.f32.pop %v2459
        %v2464 = verf.f32.pop %v2460
        %v2465 = verf.f32.pop %v2461
        %v2466 = verf.f32.pop %v2462
        %v2467 = vadd.f32 %v2463, 1.0
        %v2468 = vadd.f32 %v2464, 1.0
        %v2469 = vadd.f32 %v2465, 1.0
        %v2470 = vadd.f32 %v2466, 1.0
        %v2471 = vmul.f32 %v2455, %v2467
        %v2472 = vmul.f32 %v2456, %v2468
        %v2473 = vmul.f32 %v2457, %v2469
        %v2474 = vmul.f32 %v2458, %v2470
        %v2475 = vpack.c.bf16 %v2472, %v2471
        %v2476 = vpack.c.bf16 %v2474, %v2473
        %v2477 = vld [vmem:[%s6] sm:$0xf]
        %v2478 = vld [vmem:[%s6 + $0x4] sm:$0xf]
        %v2479 = vld [vmem:[%s6 + $0x8] sm:$0xf]
        %v2480 = vld [vmem:[%s6 + $0xc] sm:$0xf]
        %v2481 = vld [vmem:[%s6 + $0x10] sm:$0xf]
        %v2482 = vld [vmem:[%s6 + $0x14] sm:$0xf]
        %v2483 = vld [vmem:[%s6 + $0x18] sm:$0xf]
        %v2484 = vld [vmem:[%s6 + $0x1c] sm:$0xf]
        %v2485 = vmul.f32 %v2441, 0.5
        %v2486 = vmul.f32 %v2444, 0.5
        %v2487 = vmul.f32 %v2449, 0.5
        %v2488 = vmul.f32 %v2452, 0.5
        %v2489 = vmul.f32 %v2441, 0.70710677
        %v2490 = vmul.f32 %v2444, 0.70710677
        %v2491 = vmul.f32 %v2449, 0.70710677
        %v2492 = vmul.f32 %v2452, 0.70710677
        %v2493 = verf.f32.pop %v2489
        %v2494 = verf.f32.pop %v2490
        %v2495 = verf.f32.pop %v2491
        %v2496 = verf.f32.pop %v2492
        %v2497 = vadd.f32 %v2493, 1.0
        %v2498 = vadd.f32 %v2494, 1.0
        %v2499 = vadd.f32 %v2495, 1.0
        %v2500 = vadd.f32 %v2496, 1.0
        %v2501 = vmul.f32 %v2485, %v2497
        %v2502 = vmul.f32 %v2486, %v2498
        %v2503 = vmul.f32 %v2487, %v2499
        %v2504 = vmul.f32 %v2488, %v2500
        %v2505 = vpack.c.bf16 %v2502, %v2501
        %v2506 = vpack.c.bf16 %v2504, %v2503
        %s2507 = scalar_lea.vmem %s6, 32
        %v2508 = vld [vmem:[%s2507] sm:$0xf]
        %v2509 = vld [vmem:[%s2507 + $0x4] sm:$0xf]
        %v2510 = vld [vmem:[%s2507 + $0x8] sm:$0xf]
        %v2511 = vld [vmem:[%s2507 + $0xc] sm:$0xf]
        %v2512 = vld [vmem:[%s2507 + $0x10] sm:$0xf]
        %v2513 = vld [vmem:[%s2507 + $0x14] sm:$0xf]
        %v2514 = vld [vmem:[%s2507 + $0x18] sm:$0xf]
        %v2515 = vld [vmem:[%s2507 + $0x1c] sm:$0xf]
        %v2524 = vunpack.c.l.b16 %v2508
        %v2525 = vunpack.c.l.b16 %v2509
        %v2526 = vunpack.c.l.b16 %v2510
        %v2527 = vunpack.c.l.b16 %v2511
        %v2528 = vunpack.c.l.b16 %v2512
        %v2529 = vunpack.c.l.b16 %v2513
        %v2530 = vunpack.c.l.b16 %v2514
        %v2531 = vunpack.c.l.b16 %v2515
        %v2532 = vpack.c.b16 %v2525, %v2524
        %v2533 = vpack.c.b16 %v2527, %v2526
        %v2534 = vpack.c.b16 %v2529, %v2528
        %v2535 = vpack.c.b16 %v2531, %v2530
        %vm2540 = vcmask 523264
        %v2542 = vsel %vm2540, %v2505, 0
        %v2545 = vsel %vm2540, %v2506, 0
        %2547 = vmatprep.subr.bf16.mxu0 0
        %2548 = vmatpush1.bf16.msra.mxu0 0
        %2549 = vmatprep.subr.bf16.mxu0 0
        %2550 = vmatpush1.bf16.msra.mxu0 0
        %2551 = vmatprep.subr.bf16.mxu0 0
        %2552 = vmatpush1.bf16.msra.mxu0 0
        %2553 = vmatprep.subr.bf16.mxu0 0
        %2554 = vmatpush1.bf16.msra.mxu0 0
        %2555 = vmatprep.subr.bf16.mxu0 0
        %2556 = vmatpush1.bf16.msra.mxu0 %v2535
        %2557 = vmatprep.subr.bf16.mxu0 0
        %2558 = vmatpush1.bf16.msra.mxu0 %v2534
        %2559 = vmatprep.subr.bf16.mxu0 0
        %2560 = vmatpush1.bf16.msra.mxu0 %v2533
        %2561 = vmatprep.subr.bf16.mxu0 0
        %2562 = vmatpush1.bf16.msra.mxu0 %v2532
        %2563 = vmatprep.subr.bf16.mxu0 0
        %2564 = vmatpush2.bf16.msra.mxu0 0
        %2565 = vmatprep.subr.bf16.mxu0 0
        %2566 = vmatpush2.bf16.msra.mxu0 0
        %2567 = vmatprep.subr.bf16.mxu0 0
        %2568 = vmatpush2.bf16.msra.mxu0 0
        %2569 = vmatprep.subr.bf16.mxu0 0
        %2570 = vmatpush2.bf16.msra.mxu0 0
        %2571 = vmatprep.subr.bf16.mxu0 0
        %2572 = vmatpush2.bf16.msra.mxu0 0
        %2573 = vmatprep.subr.bf16.mxu0 0
        %2574 = vmatpush2.bf16.msra.mxu0 0
        %2575 = vmatprep.subr.bf16.mxu0 0
        %2576 = vmatpush2.bf16.msra.mxu0 0
        %2577 = vmatprep.subr.bf16.mxu0 0
        %2578 = vmatpush2.bf16.msra.mxu0 0
        %2579 = vmatprep.mubr.bf16.mxu0 0
        %2580 = vmatmul.mubr.bf16.gmra.mxu0 %v2542
        %v2581 = vpop.f32.mrf.mxu0
        %v2582 = vadd.f32 0.0, %v2581
        %v2583 = vpop.f32.mrf.mxu0
        %v2584 = vpop.f32.mrf.mxu0
        %v2585 = vadd.f32 0.0, %v2584
        %v2586 = vpop.f32.mrf.mxu0
        %2587 = vmatprep.mubr.bf16.mxu0 0
        %2588 = vmatmul.mubr.bf16.gmra.mxu0 %v2545
        %v2589 = vpop.f32.mrf.mxu0
        %v2590 = vadd.f32 0.0, %v2589
        %v2591 = vpop.f32.mrf.mxu0
        %v2592 = vpop.f32.mrf.mxu0
        %v2593 = vadd.f32 0.0, %v2592
        %v2594 = vpop.f32.mrf.mxu0
        %2595 = vdwg.mxu0
        %v2604 = vunpack.c.l.b16 %v2477
        %v2605 = vunpack.c.l.b16 %v2478
        %v2606 = vunpack.c.l.b16 %v2479
        %v2607 = vunpack.c.l.b16 %v2480
        %v2608 = vunpack.c.l.b16 %v2481
        %v2609 = vunpack.c.l.b16 %v2482
        %v2610 = vunpack.c.l.b16 %v2483
        %v2611 = vunpack.c.l.b16 %v2484
        %v2612 = vpack.c.b16 %v2605, %v2604
        %v2613 = vpack.c.b16 %v2607, %v2606
        %v2614 = vpack.c.b16 %v2609, %v2608
        %v2615 = vpack.c.b16 %v2611, %v2610
        %v2621 = vsel %vm2540, %v2475, 0
        %v2624 = vsel %vm2540, %v2476, 0
        %2626 = vmatprep.subr.bf16.mxu0 0
        %2627 = vmatpush1.bf16.msra.mxu0 0
        %2628 = vmatprep.subr.bf16.mxu0 0
        %2629 = vmatpush1.bf16.msra.mxu0 0
        %2630 = vmatprep.subr.bf16.mxu0 0
        %2631 = vmatpush1.bf16.msra.mxu0 0
        %2632 = vmatprep.subr.bf16.mxu0 0
        %2633 = vmatpush1.bf16.msra.mxu0 0
        %2634 = vmatprep.subr.bf16.mxu0 0
        %2635 = vmatpush1.bf16.msra.mxu0 %v2615
        %2636 = vmatprep.subr.bf16.mxu0 0
        %2637 = vmatpush1.bf16.msra.mxu0 %v2614
        %2638 = vmatprep.subr.bf16.mxu0 0
        %2639 = vmatpush1.bf16.msra.mxu0 %v2613
        %2640 = vmatprep.subr.bf16.mxu0 0
        %2641 = vmatpush1.bf16.msra.mxu0 %v2612
        %2642 = vmatprep.subr.bf16.mxu0 0
        %2643 = vmatpush2.bf16.msra.mxu0 0
        %2644 = vmatprep.subr.bf16.mxu0 0
        %2645 = vmatpush2.bf16.msra.mxu0 0
        %2646 = vmatprep.subr.bf16.mxu0 0
        %2647 = vmatpush2.bf16.msra.mxu0 0
        %2648 = vmatprep.subr.bf16.mxu0 0
        %2649 = vmatpush2.bf16.msra.mxu0 0
        %2650 = vmatprep.subr.bf16.mxu0 0
        %2651 = vmatpush2.bf16.msra.mxu0 0
        %2652 = vmatprep.subr.bf16.mxu0 0
        %2653 = vmatpush2.bf16.msra.mxu0 0
        %2654 = vmatprep.subr.bf16.mxu0 0
        %2655 = vmatpush2.bf16.msra.mxu0 0
        %2656 = vmatprep.subr.bf16.mxu0 0
        %2657 = vmatpush2.bf16.msra.mxu0 0
        %2658 = vmatprep.mubr.bf16.mxu0 0
        %2659 = vmatmul.mubr.bf16.gmra.mxu0 %v2621
        %v2660 = vpop.f32.mrf.mxu0
        %v2661 = vadd.f32 %v2582, %v2660
        %v2662 = vpop.f32.mrf.mxu0
        %v2663 = vpop.f32.mrf.mxu0
        %v2664 = vadd.f32 %v2585, %v2663
        %v2665 = vpop.f32.mrf.mxu0
        %2666 = vmatprep.mubr.bf16.mxu0 0
        %2667 = vmatmul.mubr.bf16.gmra.mxu0 %v2624
        %v2668 = vpop.f32.mrf.mxu0
        %v2669 = vadd.f32 %v2590, %v2668
        %v2670 = vpop.f32.mrf.mxu0
        %v2671 = vpop.f32.mrf.mxu0
        %v2672 = vadd.f32 %v2593, %v2671
        %v2673 = vpop.f32.mrf.mxu0
        %2674 = vdwg.mxu0
        %v2675 = vlaneseq
        %v2676 = vshrl.u32 %v2675, 7
        %v2677 = vsub.s32 0, %v2676
        %v2678 = vrot.slane %v2299, %v2677
        %v2679 = vadd.f32 %v2661, %v2678
        %v2680 = vadd.f32 %v2664, %v2678
        %v2681 = vadd.f32 %v2669, %v2678
        %v2682 = vadd.f32 %v2672, %v2678
        %v2683 = vadd.f32 %v581, %v2679
        %v2684 = vadd.f32 %v582, %v2680
        %v2685 = vadd.f32 %v583, %v2681
        %v2686 = vadd.f32 %v584, %v2682
        %v2687 = vlaneseq
        %v2688 = vshrl.u32 %v2687, 7
        %v2689 = vsub.s32 1, %v2688
        %v2690 = vrot.slane %v2299, %v2689
        %v2691 = vmul.f32 %v2683, %v2690
        %v2692 = vmul.f32 %v2684, %v2690
        %v2693 = vmul.f32 %v2685, %v2690
        %v2694 = vmul.f32 %v2686, %v2690
        %v2695 = vlaneseq
        %v2696 = vshrl.u32 %v2695, 7
        %v2697 = vsub.s32 2, %v2696
        %v2698 = vrot.slane %v2299, %v2697
        %v2699 = vadd.f32 %v2691, %v2698
        %v2700 = vadd.f32 %v2692, %v2698
        %v2701 = vadd.f32 %v2693, %v2698
        %v2702 = vadd.f32 %v2694, %v2698
        %2703 = vst.msk [vmem:[%s572] sm:$0xff] %vm608, %v2699
        %2704 = vst.msk [vmem:[%s572 + $0x8] sm:$0xff] %vm608, %v2700
        %2705 = vst.msk [vmem:[%s572 + $0x10] sm:$0xff] %vm608, %v2701
        %2706 = vst.msk [vmem:[%s572 + $0x18] sm:$0xff] %vm608, %v2702
        %s2707 = sand.u32 %s319, 1
        %s2708 = scalar_lea.sflag [#allocation4], %s2707
        %s2709 = sand.u32 %s319, 1
        %s2710 = smul.addr %s2709, 32
        %s2711 = scalar_lea.vmem [#allocation19], %s2710
        // Predicated region
        $region113: #{card_attention_forward.1} parent=71 // pred_check
          %p2712 = pneg %p329
        $region114: #{card_attention_forward.1} parent=71 // pred_check_branch
          %2714 = sbr.rel (%p2712) target = $region116
        $region115: #{card_attention_forward.1} parent=71 // pred_region
          %s2715 = smul.u32 4, %s33
          %s2717 = ssub.s32 512, 512
          %2718 = vsyncadd %s2708, %s2717
          %s2719 = smul.addr %s2715, 128
          %s2720 = scalar_lea.hbm %s13, %s2719
          %s2721 = sshll.u32 %s2711, 4
          %s2722 = int_to_ptr.vmem [resolvable:$true] %s2721
          %2727 = dma.vmem_to_hbm [thread:$0]  %s2722, 512, %s2720, %s2708, 128, 128, 8
        $region116: #{card_attention_forward.1} parent=71 // pred_fallthru
          _
      $region72: #{card_attention_forward.1} parent=5 // pred_fallthru
        _
      %p2728 = scmp.le.s32.totalorder 2, %s28
      // Predicated region
      $region117: #{card_attention_forward.1} parent=5 // pred_check
        %p2729 = pneg %p2728
      $region118: #{card_attention_forward.1} parent=5 // pred_check_branch
        %2731 = sbr.rel (%p2729) target = $region120
      $region119: #{card_attention_forward.1} parent=5 // pred_region
        %s2732 = ssub.s32 %s28, 2
        // Predicated region
        $region121: #{card_attention_forward.1} parent=119 // pred_check
          %p2733 = pneg %p335
        $region122: #{card_attention_forward.1} parent=119 // pred_check_branch
          %2735 = sbr.rel (%p2733) target = $region124
        $region123: #{card_attention_forward.1} parent=119 // pred_region
          %s2736 = sand.u32 %s320, 1
          %s2737 = scalar_lea.sflag [#allocation4], %s2736
          %s2738 = sand.u32 %s320, 1
          %s2739 = smul.addr %s2738, 32
          %s2740 = scalar_lea.vmem [#allocation19], %s2739
          %2741 = dma.done %s2737, 512
        $region124: #{card_attention_forward.1} parent=119 // pred_fallthru
          _
      $region120: #{card_attention_forward.1} parent=5 // pred_fallthru
        _
    $region6: #{card_attention_forward.1} parent=1 // loop_footer
      %s32 = sadd.s32 1, %s28
    $region7: #{card_attention_forward.1} parent=1 // loop_footer_branch
      %27 = sbr.rel target = $region3
    $region8: #{card_attention_forward.1} parent=1 // loop_exit
      _
    %2742 = vsyncpa [#allocation3], 1
    %s2743 = scalar_lea.sflag [#allocation3], 1
    %2744 = vsyncpa %s2743, 1
    %2745 = vsyncpa [#allocation6], 1
    %2746 = vsyncpa [#allocation9], 1
    %2747 = vsyncpa [#allocation12], 1
    %2748 = vsyncpa [#allocation15], 1
    %2749 = vsyncpa [#allocation18], 1
    %2750 = vsyncpa [#allocation4], 1
    %s2751 = scalar_lea.sflag [#allocation4], 1
    %2752 = vsyncpa %s2751, 1

</llo_original>
